<compile_context>
chip_gen: v5e
topology: v5e:2x2
jax: 0.10.0
libtpu: 0.0.40
codegen_flags: <defaults>
</compile_context>

<pallas_src>
import functools

import jax
import jax.numpy as jnp
from jax import lax
from jax.experimental import pallas as pl
from jax.experimental.pallas import tpu as pltpu

# ----------------------------- configuration ---------------------------------
BEV_X_BOUND = (-8.0, 8.0, 1.0)      # -> X = 16
BEV_Y_BOUND = (-8.0, 8.0, 1.0)      # -> Y = 16
BEV_Z_BOUND = (-10.0, 10.0, 20.0)   # -> Z = 1
D_BOUND = (2.0, 10.0, 1.0)          # -> D = 8 depth bins
FINAL_DIM = (32, 32)                # input image H, W
DOWN_SAMPLE = 8                     # cfg.bev_down_sample
C_BEV = 64                          # cfg.bev_encoder_in_channel
HIDDEN = 64                         # synthetic encoder hidden width
PATCH = DOWN_SAMPLE
PATCH_DIM = 3 * PATCH * PATCH       # 192

D_DEPTH = int(round((D_BOUND[1] - D_BOUND[0]) / D_BOUND[2]))            # 8
DEPTH_HEAD = 64                     # depth logits padded to 64 lanes
HEAD_W = C_BEV + DEPTH_HEAD         # fused feature+depth head width = 128
HP = FINAL_DIM[0] // DOWN_SAMPLE                                        # 4
WP = FINAL_DIM[1] // DOWN_SAMPLE                                        # 4

# calculate_birds_eye_view_parameters (python-constant version)
_BOUNDS = (BEV_X_BOUND, BEV_Y_BOUND, BEV_Z_BOUND)
BEV_RES = jnp.array([bnd[2] for bnd in _BOUNDS], jnp.float32)
BEV_START = jnp.array([bnd[0] + bnd[2] / 2.0 for bnd in _BOUNDS], jnp.float32)
BEV_DIM = tuple(int(round((bnd[1] - bnd[0]) / bnd[2])) for bnd in _BOUNDS)
X_DIM, Y_DIM, Z_DIM = BEV_DIM                                           # (16,16,1)
XY = X_DIM * Y_DIM                                                      # 256


# ----------------------------- frustum / geometry (glue) ----------------------
def create_frustum():
    depth_grid = jnp.arange(D_BOUND[0], D_BOUND[1], D_BOUND[2], dtype=jnp.float32)
    depth_grid = jnp.broadcast_to(depth_grid[:, None, None], (D_DEPTH, HP, WP))
    x_grid = jnp.linspace(0.0, FINAL_DIM[1] - 1.0, WP, dtype=jnp.float32)
    x_grid = jnp.broadcast_to(x_grid[None, None, :], (D_DEPTH, HP, WP))
    y_grid = jnp.linspace(0.0, FINAL_DIM[0] - 1.0, HP, dtype=jnp.float32)
    y_grid = jnp.broadcast_to(y_grid[None, :, None], (D_DEPTH, HP, WP))
    return jnp.stack((x_grid, y_grid, depth_grid), axis=-1)             # (D,H',W',3)


def get_geometry(frustum, intrinsics, extrinsics):
    ext_inv = jnp.linalg.inv(extrinsics)                  # (b,n,4,4)
    rotation = ext_inv[..., :3, :3]                       # (b,n,3,3)
    translation = ext_inv[..., :3, 3]                     # (b,n,3)
    pts = jnp.concatenate(
        [frustum[..., :2] * frustum[..., 2:3], frustum[..., 2:3]], axis=-1)  # (D,H',W',3)
    combine = rotation @ jnp.linalg.inv(intrinsics)       # (b,n,3,3)
    geom = jnp.einsum("bnij,dhwj->bndhwi", combine, pts)
    geom = geom + translation[:, :, None, None, None, :]
    return geom                                           # (b,n,D,H',W',3)


# ----------------------------- fused encoder + BEV-pool kernel ----------------
def lss_fused_kernel(patch_ref, w_stem_ref, b_stem_ref, w_head_ref, b_head_ref,
                     idx_ref, bev_ref, depth_ref):
    bf16 = jnp.bfloat16
    rows = patch_ref.shape[0]          # bb * pb pixels handled this step
    bb = bev_ref.shape[0]              # batches handled this step
    pb = rows // bb                    # pixels per batch (n * H' * W')

    # ---- cam encoder: patch-embed stem + fused feature/depth head (MXU) ----
    hidden = jnp.dot(patch_ref[...], w_stem_ref[...],
                     preferred_element_type=jnp.float32) + b_stem_ref[...]
    hidden_bf = jnp.maximum(hidden, 0.0).astype(bf16)                    # (rows, HIDDEN)

    head = jnp.dot(hidden_bf, w_head_ref[...],
                   preferred_element_type=jnp.float32) + b_head_ref[...]  # (rows, 128)
    feat_bf = head[:, :C_BEV].astype(bf16)                               # (rows, C)
    logits = head[:, C_BEV:]                                             # (rows, 64)

    # Softmax over the depth lanes.  Pad lanes carry bias -1e9 -> exp == 0, so
    # this equals the D-way softmax in lanes [:D_DEPTH].
    m = jnp.max(logits, axis=-1, keepdims=True)
    e = jnp.exp(logits - m)
    prob = e * pl.reciprocal(jnp.sum(e, axis=-1, keepdims=True), approx=True)
    depth_ref[...] = prob                                                # (rows, 64)

    # ---- BEV voxel pooling ----
    #   W[p, xy]  = sum_d prob[p, d] * [idx[p, d] == xy]   (depth-weighted cells)
    #   bev[c,xy] = sum_p feat[p, c] * W[p, xy]            (feat^T @ W, K = pb)
    cells = lax.broadcasted_iota(jnp.int32, (pb, XY), 1)                 # hoisted, reused
    idx = idx_ref[...]                                                   # (rows, D) int32
    for bi in range(bb):                                                 # static (<= 2)
        r0 = bi * pb
        w_acc = jnp.zeros((pb, XY), jnp.float32)
        for d in range(D_DEPTH):                                         # static (8)
            hit = cells == idx[r0:r0 + pb, d:d + 1]                      # -1 never hits
            w_acc = w_acc + jnp.where(hit, prob[r0:r0 + pb, d:d + 1], 0.0)
        bev_ref[bi] = lax.dot_general(
            feat_bf[r0:r0 + pb, :], w_acc.astype(bf16),
            (((0,), (0,)), ((), ())), preferred_element_type=jnp.float32)


def _tensorcores_per_chip():
    # v7x-class chips expose 2 TensorCores per chip; v5e/v6e have 1.
    try:
        kind = jax.devices()[0].device_kind.lower()
    except Exception:
        return 1
    return 2 if "v7" in kind else 1


def lss_fused_call(patches_bf16, flat_idx, params, batch):
    rows, _ = patches_bf16.shape
    pb = rows // batch
    n_tc = _tensorcores_per_chip()
    # Single program on 1-TC parts (fold batch into the MXU row dim); shard
    # batches across TensorCores on multi-TC parts.
    bb = 1 if (n_tc > 1 and batch > 1 and batch % n_tc == 0) else batch
    grid = (batch // bb,)

    w_stem = params["w_stem"].astype(jnp.bfloat16)   # pre-cast once, outside kernel
    w_head = params["w_head"].astype(jnp.bfloat16)

    bev, depth_slab = pl.pallas_call(
        lss_fused_kernel,
        out_shape=(jax.ShapeDtypeStruct((batch, C_BEV, XY), jnp.float32),
                   jax.ShapeDtypeStruct((rows, DEPTH_HEAD), jnp.float32)),
        grid_spec=pltpu.PrefetchScalarGridSpec(
            num_scalar_prefetch=0, grid=grid,
            in_specs=[
                pl.BlockSpec((bb * pb, PATCH_DIM), lambda i: (i, 0)),
                pl.BlockSpec((PATCH_DIM, HIDDEN), lambda i: (0, 0)),
                pl.BlockSpec((1, HIDDEN), lambda i: (0, 0)),
                pl.BlockSpec((HIDDEN, HEAD_W), lambda i: (0, 0)),
                pl.BlockSpec((1, HEAD_W), lambda i: (0, 0)),
                pl.BlockSpec((bb * pb, D_DEPTH), lambda i: (i, 0)),
            ],
            out_specs=[
                pl.BlockSpec((bb, C_BEV, XY), lambda i: (i, 0, 0)),
                pl.BlockSpec((bb * pb, DEPTH_HEAD), lambda i: (i, 0)),
            ]),
        compiler_params=pltpu.CompilerParams(dimension_semantics=("parallel",)),
    )(patches_bf16, w_stem, params["b_stem"], w_head, params["b_head"], flat_idx)
    return bev, depth_slab


# ----------------------------- model glue -------------------------------------
def patchify(images):
    # (b, n, 3, H, W) -> (b*n*H'*W', 3*ps*ps), rows in (b, n, h', w') order
    b, n, c, h, w = images.shape
    x = images.reshape(b, n, c, HP, PATCH, WP, PATCH)
    x = x.transpose(0, 1, 3, 5, 2, 4, 6)                 # (b, n, H', W', c, ps, ps)
    return x.reshape(b * n * HP * WP, c * PATCH * PATCH)


def lss_bev_forward(images, intrinsics, extrinsics, params):
    b, n = images.shape[:2]
    frustum = create_frustum()                            # (D, H', W', 3)
    geom = get_geometry(frustum, intrinsics, extrinsics)  # (b,n,D,H',W',3)

    # Voxelization: astype(int32) truncates toward zero like torch .long(),
    # matching the reference semantics (not floor-based voxelization).
    geom_vox = (geom - (BEV_START - BEV_RES / 2.0)) / BEV_RES
    geom_idx = geom_vox.astype(jnp.int32)
    gx, gy, gz = geom_idx[..., 0], geom_idx[..., 1], geom_idx[..., 2]
    mask = ((gx >= 0) & (gx < X_DIM) & (gy >= 0) & (gy < Y_DIM)
            & (gz >= 0) & (gz < Z_DIM))
    flat = jnp.where(mask, gx * Y_DIM + gy, -1).astype(jnp.int32)   # (b,n,D,H',W')
    # rows are (b, n, h', w') pixels (matches patchify) with the D depth bins
    # packed along the last (lane) dim.
    flat_idx = flat.transpose(0, 1, 3, 4, 2).reshape(b * n * HP * WP, D_DEPTH)

    patches = patchify(images).astype(jnp.bfloat16)       # (b*pb, PATCH_DIM) bf16
    bev, depth_slab = lss_fused_call(patches, flat_idx, params, b)

    bev_feature = bev.reshape(b, C_BEV, X_DIM, Y_DIM)     # (b, C, X, Y)
    prob = depth_slab[:, :D_DEPTH].reshape(b, n, HP, WP, D_DEPTH)
    pred_depth = prob.transpose(0, 1, 4, 2, 3).reshape(b * n, D_DEPTH, HP, WP)

    # forward(): bev_feature.squeeze(1) (no-op unless C == 1)
    if bev_feature.shape[1] == 1:
        bev_feature = bev_feature[:, 0]
    return bev_feature, pred_depth


def init_params(key):
    ks = jax.random.split(key, 6)
    s = 0.05
    w_feat = s * jax.random.normal(ks[2], (HIDDEN, C_BEV), jnp.float32)
    b_feat = s * jax.random.normal(ks[3], (1, C_BEV), jnp.float32)
    # depth head padded to 64 lanes: pad weights 0, pad biases -1e9 so the
    # lane-dense 64-wide softmax equals the D-way softmax in lanes [:D_DEPTH].
    w_depth = jnp.zeros((HIDDEN, DEPTH_HEAD), jnp.float32)
    w_depth = w_depth.at[:, :D_DEPTH].set(
        s * jax.random.normal(ks[4], (HIDDEN, D_DEPTH), jnp.float32))
    b_depth = jnp.full((1, DEPTH_HEAD), -1e9, jnp.float32)
    b_depth = b_depth.at[0, :D_DEPTH].set(
        s * jax.random.normal(ks[5], (D_DEPTH,), jnp.float32))
    return dict(
        w_stem=s * jax.random.normal(ks[0], (PATCH_DIM, HIDDEN), jnp.float32),
        b_stem=s * jax.random.normal(ks[1], (1, HIDDEN), jnp.float32),
        w_head=jnp.concatenate([w_feat, w_depth], axis=1),    # (HIDDEN, 128)
        b_head=jnp.concatenate([b_feat, b_depth], axis=1),    # (1, 128)
    )


if __name__ == "__main__":
    key = jax.random.PRNGKey(0)
    k_img, k_par = jax.random.split(key)

    b, n = 2, 2
    images = jax.random.normal(k_img, (b, n, 3, FINAL_DIM[0], FINAL_DIM[1]), jnp.float32)

    fx = fy = 20.0
    cx = cy = 16.0
    K = jnp.array([[fx, 0.0, cx], [0.0, fy, cy], [0.0, 0.0, 1.0]], jnp.float32)
    intrinsics = jnp.broadcast_to(K, (b, n, 3, 3))

    E = jnp.eye(4, dtype=jnp.float32)
    E = E.at[0, 3].set(0.5).at[1, 3].set(-0.3).at[2, 3].set(0.5)
    extrinsics = jnp.broadcast_to(E, (b, n, 4, 4))

    params = init_params(k_par)
    fwd = jax.jit(functools.partial(lss_bev_forward, params=params))
    bev_feature, pred_depth = fwd(images, intrinsics, extrinsics)
    jax.block_until_ready((bev_feature, pred_depth))

    assert bev_feature.shape == (b, C_BEV, X_DIM, Y_DIM)
    assert pred_depth.shape == (b * n, D_DEPTH, HP, WP)
    assert bool(jnp.all(jnp.isfinite(bev_feature))) and bool(jnp.all(jnp.isfinite(pred_depth)))
    print("KERNEL_OK")
</pallas_src>

<mosaic_0001>
module attributes {stable_mosaic.version = 11 : i64} {
  func.func @lss_fused_kernel(%arg0: i32, %arg1: memref<64x192xbf16, #tpu.memory_space<vmem>>, %arg2: memref<192x64xbf16, #tpu.memory_space<vmem>>, %arg3: memref<1x64xf32, #tpu.memory_space<vmem>>, %arg4: memref<64x128xbf16, #tpu.memory_space<vmem>>, %arg5: memref<1x128xf32, #tpu.memory_space<vmem>>, %arg6: memref<64x8xi32, #tpu.memory_space<vmem>>, %arg7: memref<2x64x256xf32, #tpu.memory_space<vmem>>, %arg8: memref<64x64xf32, #tpu.memory_space<vmem>>) attributes {dimension_semantics = [#tpu.dimension_semantics<parallel>], iteration_bounds = array<i64: 1>, scalar_prefetch = 0 : i64, scratch_operands = 0 : i64, tpu.core_type = #tpu.core_type<tc>, window_params = [{transform_indices = @transform_0, window_bounds = array<i64: 64, 192>}, {pipeline_mode = #tpu.pipeline_mode<synchronous>, transform_indices = @transform_1, window_bounds = array<i64: 192, 64>}, {pipeline_mode = #tpu.pipeline_mode<synchronous>, transform_indices = @transform_2, window_bounds = array<i64: 1, 64>}, {pipeline_mode = #tpu.pipeline_mode<synchronous>, transform_indices = @transform_3, window_bounds = array<i64: 64, 128>}, {pipeline_mode = #tpu.pipeline_mode<synchronous>, transform_indices = @transform_4, window_bounds = array<i64: 1, 128>}, {transform_indices = @transform_5, window_bounds = array<i64: 64, 8>}, {transform_indices = @transform_6, window_bounds = array<i64: 2, 64, 256>}, {transform_indices = @transform_7, window_bounds = array<i64: 64, 64>}]} {
    %c0 = arith.constant 0 : index
    %c0_0 = arith.constant 0 : index
    %0 = vector.load %arg1[%c0, %c0_0] : memref<64x192xbf16, #tpu.memory_space<vmem>>, vector<64x192xbf16>
    %c0_1 = arith.constant 0 : index
    %c0_2 = arith.constant 0 : index
    %1 = vector.load %arg2[%c0_1, %c0_2] : memref<192x64xbf16, #tpu.memory_space<vmem>>, vector<192x64xbf16>
    %cst = arith.constant dense<0.000000e+00> : vector<64x64xf32>
    %2 = tpu.matmul %0, %1, %cst {dimension_numbers = #tpu.dot_dimension_numbers<[1], [0], [0], [1], [0, 0, 1, 1], [], []>} : vector<64x192xbf16>, vector<192x64xbf16>, vector<64x64xf32> -> vector<64x64xf32>
    %c0_3 = arith.constant 0 : index
    %c0_4 = arith.constant 0 : index
    %3 = vector.load %arg3[%c0_3, %c0_4] : memref<1x64xf32, #tpu.memory_space<vmem>>, vector<1x64xf32>
    %4 = vector.broadcast %3 : vector<1x64xf32> to vector<64x64xf32>
    %5 = arith.addf %2, %4 : vector<64x64xf32>
    %cst_5 = arith.constant 0.000000e+00 : f32
    %6 = vector.broadcast %cst_5 : f32 to vector<64x64xf32>
    %7 = arith.maximumf %5, %6 : vector<64x64xf32>
    %8 = arith.truncf %7 : vector<64x64xf32> to vector<64x64xbf16>
    %c0_6 = arith.constant 0 : index
    %c0_7 = arith.constant 0 : index
    %9 = vector.load %arg4[%c0_6, %c0_7] : memref<64x128xbf16, #tpu.memory_space<vmem>>, vector<64x128xbf16>
    %cst_8 = arith.constant dense<0.000000e+00> : vector<64x128xf32>
    %10 = tpu.matmul %8, %9, %cst_8 {dimension_numbers = #tpu.dot_dimension_numbers<[1], [0], [0], [1], [0, 0, 1, 1], [], []>} : vector<64x64xbf16>, vector<64x128xbf16>, vector<64x128xf32> -> vector<64x128xf32>
    %c0_9 = arith.constant 0 : index
    %c0_10 = arith.constant 0 : index
    %11 = vector.load %arg5[%c0_9, %c0_10] : memref<1x128xf32, #tpu.memory_space<vmem>>, vector<1x128xf32>
    %12 = vector.broadcast %11 : vector<1x128xf32> to vector<64x128xf32>
    %13 = arith.addf %10, %12 : vector<64x128xf32>
    %14 = vector.extract_strided_slice %13 {offsets = [0, 0], sizes = [64, 64], strides = [1, 1]} : vector<64x128xf32> to vector<64x64xf32>
    %15 = arith.truncf %14 : vector<64x64xf32> to vector<64x64xbf16>
    %16 = vector.extract_strided_slice %13 {offsets = [0, 64], sizes = [64, 64], strides = [1, 1]} : vector<64x128xf32> to vector<64x64xf32>
    %cst_11 = arith.constant dense<0xFF800000> : vector<64xf32>
    %17 = vector.multi_reduction <maximumf>, %16, %cst_11 [1] : vector<64x64xf32> to vector<64xf32>
    %18 = vector.shape_cast %17 : vector<64xf32> to vector<64x1xf32>
    %19 = vector.broadcast %18 : vector<64x1xf32> to vector<64x64xf32>
    %20 = arith.subf %16, %19 : vector<64x64xf32>
    %21 = math.exp %20 : vector<64x64xf32>
    %cst_12 = arith.constant dense<0.000000e+00> : vector<64xf32>
    %22 = vector.multi_reduction <add>, %21, %cst_12 [1] : vector<64x64xf32> to vector<64xf32>
    %23 = vector.shape_cast %22 : vector<64xf32> to vector<64x1xf32>
    %24 = tpu.reciprocal %23 {approx = true} : vector<64x1xf32> -> vector<64x1xf32>
    %25 = vector.broadcast %24 : vector<64x1xf32> to vector<64x64xf32>
    %26 = arith.mulf %21, %25 : vector<64x64xf32>
    %c0_13 = arith.constant 0 : index
    %c0_14 = arith.constant 0 : index
    %27 = vector.load %arg8[%c0_13, %c0_14] : memref<64x64xf32, #tpu.memory_space<vmem>>, vector<64x64xf32>
    tpu.vector_store %arg8[%c0_13, %c0_14], %26 {strides = array<i32>} : memref<64x64xf32, #tpu.memory_space<vmem>>, vector<64x64xf32>,
    %28 = tpu.iota {dimensions = array<i32: 1>} : vector<32x256xi32>
    %c0_15 = arith.constant 0 : index
    %c0_16 = arith.constant 0 : index
    %29 = vector.load %arg6[%c0_15, %c0_16] : memref<64x8xi32, #tpu.memory_space<vmem>>, vector<64x8xi32>
    %cst_17 = arith.constant 0.000000e+00 : f32
    %30 = vector.broadcast %cst_17 : f32 to vector<32x256xf32>
    %31 = vector.extract_strided_slice %29 {offsets = [0, 0], sizes = [32, 1], strides = [1, 1]} : vector<64x8xi32> to vector<32x1xi32>
    %32 = vector.broadcast %31 : vector<32x1xi32> to vector<32x256xi32>
    %33 = arith.cmpi eq, %28, %32 : vector<32x256xi32>
    %34 = vector.extract_strided_slice %26 {offsets = [0, 0], sizes = [32, 1], strides = [1, 1]} : vector<64x64xf32> to vector<32x1xf32>
    %cst_18 = arith.constant 0.000000e+00 : f32
    %35 = vector.shape_cast %34 : vector<32x1xf32> to vector<32x1xf32>
    %36 = vector.broadcast %35 : vector<32x1xf32> to vector<32x256xf32>
    %37 = vector.broadcast %cst_18 : f32 to vector<32x256xf32>
    %38 = arith.select %33, %36, %37 : vector<32x256xi1>, vector<32x256xf32>
    %39 = arith.addf %30, %38 : vector<32x256xf32>
    %40 = vector.extract_strided_slice %29 {offsets = [0, 1], sizes = [32, 1], strides = [1, 1]} : vector<64x8xi32> to vector<32x1xi32>
    %41 = vector.broadcast %40 : vector<32x1xi32> to vector<32x256xi32>
    %42 = arith.cmpi eq, %28, %41 : vector<32x256xi32>
    %43 = vector.extract_strided_slice %26 {offsets = [0, 1], sizes = [32, 1], strides = [1, 1]} : vector<64x64xf32> to vector<32x1xf32>
    %cst_19 = arith.constant 0.000000e+00 : f32
    %44 = vector.shape_cast %43 : vector<32x1xf32> to vector<32x1xf32>
    %45 = vector.broadcast %44 : vector<32x1xf32> to vector<32x256xf32>
    %46 = vector.broadcast %cst_19 : f32 to vector<32x256xf32>
    %47 = arith.select %42, %45, %46 : vector<32x256xi1>, vector<32x256xf32>
    %48 = arith.addf %39, %47 : vector<32x256xf32>
    %49 = vector.extract_strided_slice %29 {offsets = [0, 2], sizes = [32, 1], strides = [1, 1]} : vector<64x8xi32> to vector<32x1xi32>
    %50 = vector.broadcast %49 : vector<32x1xi32> to vector<32x256xi32>
    %51 = arith.cmpi eq, %28, %50 : vector<32x256xi32>
    %52 = vector.extract_strided_slice %26 {offsets = [0, 2], sizes = [32, 1], strides = [1, 1]} : vector<64x64xf32> to vector<32x1xf32>
    %cst_20 = arith.constant 0.000000e+00 : f32
    %53 = vector.shape_cast %52 : vector<32x1xf32> to vector<32x1xf32>
    %54 = vector.broadcast %53 : vector<32x1xf32> to vector<32x256xf32>
    %55 = vector.broadcast %cst_20 : f32 to vector<32x256xf32>
    %56 = arith.select %51, %54, %55 : vector<32x256xi1>, vector<32x256xf32>
    %57 = arith.addf %48, %56 : vector<32x256xf32>
    %58 = vector.extract_strided_slice %29 {offsets = [0, 3], sizes = [32, 1], strides = [1, 1]} : vector<64x8xi32> to vector<32x1xi32>
    %59 = vector.broadcast %58 : vector<32x1xi32> to vector<32x256xi32>
    %60 = arith.cmpi eq, %28, %59 : vector<32x256xi32>
    %61 = vector.extract_strided_slice %26 {offsets = [0, 3], sizes = [32, 1], strides = [1, 1]} : vector<64x64xf32> to vector<32x1xf32>
    %cst_21 = arith.constant 0.000000e+00 : f32
    %62 = vector.shape_cast %61 : vector<32x1xf32> to vector<32x1xf32>
    %63 = vector.broadcast %62 : vector<32x1xf32> to vector<32x256xf32>
    %64 = vector.broadcast %cst_21 : f32 to vector<32x256xf32>
    %65 = arith.select %60, %63, %64 : vector<32x256xi1>, vector<32x256xf32>
    %66 = arith.addf %57, %65 : vector<32x256xf32>
    %67 = vector.extract_strided_slice %29 {offsets = [0, 4], sizes = [32, 1], strides = [1, 1]} : vector<64x8xi32> to vector<32x1xi32>
    %68 = vector.broadcast %67 : vector<32x1xi32> to vector<32x256xi32>
    %69 = arith.cmpi eq, %28, %68 : vector<32x256xi32>
    %70 = vector.extract_strided_slice %26 {offsets = [0, 4], sizes = [32, 1], strides = [1, 1]} : vector<64x64xf32> to vector<32x1xf32>
    %cst_22 = arith.constant 0.000000e+00 : f32
    %71 = vector.shape_cast %70 : vector<32x1xf32> to vector<32x1xf32>
    %72 = vector.broadcast %71 : vector<32x1xf32> to vector<32x256xf32>
    %73 = vector.broadcast %cst_22 : f32 to vector<32x256xf32>
    %74 = arith.select %69, %72, %73 : vector<32x256xi1>, vector<32x256xf32>
    %75 = arith.addf %66, %74 : vector<32x256xf32>
    %76 = vector.extract_strided_slice %29 {offsets = [0, 5], sizes = [32, 1], strides = [1, 1]} : vector<64x8xi32> to vector<32x1xi32>
    %77 = vector.broadcast %76 : vector<32x1xi32> to vector<32x256xi32>
    %78 = arith.cmpi eq, %28, %77 : vector<32x256xi32>
    %79 = vector.extract_strided_slice %26 {offsets = [0, 5], sizes = [32, 1], strides = [1, 1]} : vector<64x64xf32> to vector<32x1xf32>
    %cst_23 = arith.constant 0.000000e+00 : f32
    %80 = vector.shape_cast %79 : vector<32x1xf32> to vector<32x1xf32>
    %81 = vector.broadcast %80 : vector<32x1xf32> to vector<32x256xf32>
    %82 = vector.broadcast %cst_23 : f32 to vector<32x256xf32>
    %83 = arith.select %78, %81, %82 : vector<32x256xi1>, vector<32x256xf32>
    %84 = arith.addf %75, %83 : vector<32x256xf32>
    %85 = vector.extract_strided_slice %29 {offsets = [0, 6], sizes = [32, 1], strides = [1, 1]} : vector<64x8xi32> to vector<32x1xi32>
    %86 = vector.broadcast %85 : vector<32x1xi32> to vector<32x256xi32>
    %87 = arith.cmpi eq, %28, %86 : vector<32x256xi32>
    %88 = vector.extract_strided_slice %26 {offsets = [0, 6], sizes = [32, 1], strides = [1, 1]} : vector<64x64xf32> to vector<32x1xf32>
    %cst_24 = arith.constant 0.000000e+00 : f32
    %89 = vector.shape_cast %88 : vector<32x1xf32> to vector<32x1xf32>
    %90 = vector.broadcast %89 : vector<32x1xf32> to vector<32x256xf32>
    %91 = vector.broadcast %cst_24 : f32 to vector<32x256xf32>
    %92 = arith.select %87, %90, %91 : vector<32x256xi1>, vector<32x256xf32>
    %93 = arith.addf %84, %92 : vector<32x256xf32>
    %94 = vector.extract_strided_slice %29 {offsets = [0, 7], sizes = [32, 1], strides = [1, 1]} : vector<64x8xi32> to vector<32x1xi32>
    %95 = vector.broadcast %94 : vector<32x1xi32> to vector<32x256xi32>
    %96 = arith.cmpi eq, %28, %95 : vector<32x256xi32>
    %97 = vector.extract_strided_slice %26 {offsets = [0, 7], sizes = [32, 1], strides = [1, 1]} : vector<64x64xf32> to vector<32x1xf32>
    %cst_25 = arith.constant 0.000000e+00 : f32
    %98 = vector.shape_cast %97 : vector<32x1xf32> to vector<32x1xf32>
    %99 = vector.broadcast %98 : vector<32x1xf32> to vector<32x256xf32>
    %100 = vector.broadcast %cst_25 : f32 to vector<32x256xf32>
    %101 = arith.select %96, %99, %100 : vector<32x256xi1>, vector<32x256xf32>
    %102 = arith.addf %93, %101 : vector<32x256xf32>
    %103 = vector.extract_strided_slice %15 {offsets = [0, 0], sizes = [32, 64], strides = [1, 1]} : vector<64x64xbf16> to vector<32x64xbf16>
    %104 = arith.truncf %102 : vector<32x256xf32> to vector<32x256xbf16>
    %cst_26 = arith.constant dense<0.000000e+00> : vector<64x256xf32>
    %105 = tpu.matmul %103, %104, %cst_26 {dimension_numbers = #tpu.dot_dimension_numbers<[0], [0], [1], [1], [0, 1, 1, 1], [], []>} : vector<32x64xbf16>, vector<32x256xbf16>, vector<64x256xf32> -> vector<64x256xf32>
    %c0_27 = arith.constant 0 : index
    %c0_28 = arith.constant 0 : index
    %c0_29 = arith.constant 0 : index
    %106 = vector.load %arg7[%c0_27, %c0_28, %c0_29] : memref<2x64x256xf32, #tpu.memory_space<vmem>>, vector<1x64x256xf32>
    %107 = vector.shape_cast %106 : vector<1x64x256xf32> to vector<64x256xf32>
    %108 = vector.shape_cast %105 : vector<64x256xf32> to vector<1x64x256xf32>
    tpu.vector_store %arg7[%c0_27, %c0_28, %c0_29], %108 {strides = array<i32>} : memref<2x64x256xf32, #tpu.memory_space<vmem>>, vector<1x64x256xf32>,
    %cst_30 = arith.constant 0.000000e+00 : f32
    %109 = vector.broadcast %cst_30 : f32 to vector<32x256xf32>
    %110 = vector.extract_strided_slice %29 {offsets = [32, 0], sizes = [32, 1], strides = [1, 1]} : vector<64x8xi32> to vector<32x1xi32>
    %111 = vector.broadcast %110 : vector<32x1xi32> to vector<32x256xi32>
    %112 = arith.cmpi eq, %28, %111 : vector<32x256xi32>
    %113 = vector.extract_strided_slice %26 {offsets = [32, 0], sizes = [32, 1], strides = [1, 1]} : vector<64x64xf32> to vector<32x1xf32>
    %cst_31 = arith.constant 0.000000e+00 : f32
    %114 = vector.shape_cast %113 : vector<32x1xf32> to vector<32x1xf32>
    %115 = vector.broadcast %114 : vector<32x1xf32> to vector<32x256xf32>
    %116 = vector.broadcast %cst_31 : f32 to vector<32x256xf32>
    %117 = arith.select %112, %115, %116 : vector<32x256xi1>, vector<32x256xf32>
    %118 = arith.addf %109, %117 : vector<32x256xf32>
    %119 = vector.extract_strided_slice %29 {offsets = [32, 1], sizes = [32, 1], strides = [1, 1]} : vector<64x8xi32> to vector<32x1xi32>
    %120 = vector.broadcast %119 : vector<32x1xi32> to vector<32x256xi32>
    %121 = arith.cmpi eq, %28, %120 : vector<32x256xi32>
    %122 = vector.extract_strided_slice %26 {offsets = [32, 1], sizes = [32, 1], strides = [1, 1]} : vector<64x64xf32> to vector<32x1xf32>
    %cst_32 = arith.constant 0.000000e+00 : f32
    %123 = vector.shape_cast %122 : vector<32x1xf32> to vector<32x1xf32>
    %124 = vector.broadcast %123 : vector<32x1xf32> to vector<32x256xf32>
    %125 = vector.broadcast %cst_32 : f32 to vector<32x256xf32>
    %126 = arith.select %121, %124, %125 : vector<32x256xi1>, vector<32x256xf32>
    %127 = arith.addf %118, %126 : vector<32x256xf32>
    %128 = vector.extract_strided_slice %29 {offsets = [32, 2], sizes = [32, 1], strides = [1, 1]} : vector<64x8xi32> to vector<32x1xi32>
    %129 = vector.broadcast %128 : vector<32x1xi32> to vector<32x256xi32>
    %130 = arith.cmpi eq, %28, %129 : vector<32x256xi32>
    %131 = vector.extract_strided_slice %26 {offsets = [32, 2], sizes = [32, 1], strides = [1, 1]} : vector<64x64xf32> to vector<32x1xf32>
    %cst_33 = arith.constant 0.000000e+00 : f32
    %132 = vector.shape_cast %131 : vector<32x1xf32> to vector<32x1xf32>
    %133 = vector.broadcast %132 : vector<32x1xf32> to vector<32x256xf32>
    %134 = vector.broadcast %cst_33 : f32 to vector<32x256xf32>
    %135 = arith.select %130, %133, %134 : vector<32x256xi1>, vector<32x256xf32>
    %136 = arith.addf %127, %135 : vector<32x256xf32>
    %137 = vector.extract_strided_slice %29 {offsets = [32, 3], sizes = [32, 1], strides = [1, 1]} : vector<64x8xi32> to vector<32x1xi32>
    %138 = vector.broadcast %137 : vector<32x1xi32> to vector<32x256xi32>
    %139 = arith.cmpi eq, %28, %138 : vector<32x256xi32>
    %140 = vector.extract_strided_slice %26 {offsets = [32, 3], sizes = [32, 1], strides = [1, 1]} : vector<64x64xf32> to vector<32x1xf32>
    %cst_34 = arith.constant 0.000000e+00 : f32
    %141 = vector.shape_cast %140 : vector<32x1xf32> to vector<32x1xf32>
    %142 = vector.broadcast %141 : vector<32x1xf32> to vector<32x256xf32>
    %143 = vector.broadcast %cst_34 : f32 to vector<32x256xf32>
    %144 = arith.select %139, %142, %143 : vector<32x256xi1>, vector<32x256xf32>
    %145 = arith.addf %136, %144 : vector<32x256xf32>
    %146 = vector.extract_strided_slice %29 {offsets = [32, 4], sizes = [32, 1], strides = [1, 1]} : vector<64x8xi32> to vector<32x1xi32>
    %147 = vector.broadcast %146 : vector<32x1xi32> to vector<32x256xi32>
    %148 = arith.cmpi eq, %28, %147 : vector<32x256xi32>
    %149 = vector.extract_strided_slice %26 {offsets = [32, 4], sizes = [32, 1], strides = [1, 1]} : vector<64x64xf32> to vector<32x1xf32>
    %cst_35 = arith.constant 0.000000e+00 : f32
    %150 = vector.shape_cast %149 : vector<32x1xf32> to vector<32x1xf32>
    %151 = vector.broadcast %150 : vector<32x1xf32> to vector<32x256xf32>
    %152 = vector.broadcast %cst_35 : f32 to vector<32x256xf32>
    %153 = arith.select %148, %151, %152 : vector<32x256xi1>, vector<32x256xf32>
    %154 = arith.addf %145, %153 : vector<32x256xf32>
    %155 = vector.extract_strided_slice %29 {offsets = [32, 5], sizes = [32, 1], strides = [1, 1]} : vector<64x8xi32> to vector<32x1xi32>
    %156 = vector.broadcast %155 : vector<32x1xi32> to vector<32x256xi32>
    %157 = arith.cmpi eq, %28, %156 : vector<32x256xi32>
    %158 = vector.extract_strided_slice %26 {offsets = [32, 5], sizes = [32, 1], strides = [1, 1]} : vector<64x64xf32> to vector<32x1xf32>
    %cst_36 = arith.constant 0.000000e+00 : f32
    %159 = vector.shape_cast %158 : vector<32x1xf32> to vector<32x1xf32>
    %160 = vector.broadcast %159 : vector<32x1xf32> to vector<32x256xf32>
    %161 = vector.broadcast %cst_36 : f32 to vector<32x256xf32>
    %162 = arith.select %157, %160, %161 : vector<32x256xi1>, vector<32x256xf32>
    %163 = arith.addf %154, %162 : vector<32x256xf32>
    %164 = vector.extract_strided_slice %29 {offsets = [32, 6], sizes = [32, 1], strides = [1, 1]} : vector<64x8xi32> to vector<32x1xi32>
    %165 = vector.broadcast %164 : vector<32x1xi32> to vector<32x256xi32>
    %166 = arith.cmpi eq, %28, %165 : vector<32x256xi32>
    %167 = vector.extract_strided_slice %26 {offsets = [32, 6], sizes = [32, 1], strides = [1, 1]} : vector<64x64xf32> to vector<32x1xf32>
    %cst_37 = arith.constant 0.000000e+00 : f32
    %168 = vector.shape_cast %167 : vector<32x1xf32> to vector<32x1xf32>
    %169 = vector.broadcast %168 : vector<32x1xf32> to vector<32x256xf32>
    %170 = vector.broadcast %cst_37 : f32 to vector<32x256xf32>
    %171 = arith.select %166, %169, %170 : vector<32x256xi1>, vector<32x256xf32>
    %172 = arith.addf %163, %171 : vector<32x256xf32>
    %173 = vector.extract_strided_slice %29 {offsets = [32, 7], sizes = [32, 1], strides = [1, 1]} : vector<64x8xi32> to vector<32x1xi32>
    %174 = vector.broadcast %173 : vector<32x1xi32> to vector<32x256xi32>
    %175 = arith.cmpi eq, %28, %174 : vector<32x256xi32>
    %176 = vector.extract_strided_slice %26 {offsets = [32, 7], sizes = [32, 1], strides = [1, 1]} : vector<64x64xf32> to vector<32x1xf32>
    %cst_38 = arith.constant 0.000000e+00 : f32
    %177 = vector.shape_cast %176 : vector<32x1xf32> to vector<32x1xf32>
    %178 = vector.broadcast %177 : vector<32x1xf32> to vector<32x256xf32>
    %179 = vector.broadcast %cst_38 : f32 to vector<32x256xf32>
    %180 = arith.select %175, %178, %179 : vector<32x256xi1>, vector<32x256xf32>
    %181 = arith.addf %172, %180 : vector<32x256xf32>
    %182 = vector.extract_strided_slice %15 {offsets = [32, 0], sizes = [32, 64], strides = [1, 1]} : vector<64x64xbf16> to vector<32x64xbf16>
    %183 = arith.truncf %181 : vector<32x256xf32> to vector<32x256xbf16>
    %cst_39 = arith.constant dense<0.000000e+00> : vector<64x256xf32>
    %184 = tpu.matmul %182, %183, %cst_39 {dimension_numbers = #tpu.dot_dimension_numbers<[0], [0], [1], [1], [0, 1, 1, 1], [], []>} : vector<32x64xbf16>, vector<32x256xbf16>, vector<64x256xf32> -> vector<64x256xf32>
    %c1 = arith.constant 1 : index
    %c0_40 = arith.constant 0 : index
    %c0_41 = arith.constant 0 : index
    %185 = vector.load %arg7[%c1, %c0_40, %c0_41] : memref<2x64x256xf32, #tpu.memory_space<vmem>>, vector<1x64x256xf32>
    %186 = vector.shape_cast %185 : vector<1x64x256xf32> to vector<64x256xf32>
    %187 = vector.shape_cast %184 : vector<64x256xf32> to vector<1x64x256xf32>
    tpu.vector_store %arg7[%c1, %c0_40, %c0_41], %187 {strides = array<i32>} : memref<2x64x256xf32, #tpu.memory_space<vmem>>, vector<1x64x256xf32>,
    return
  }
  func.func @transform_0(%arg0: i32) -> (i32, i32) {
    %c0_i32 = arith.constant 0 : i32
    %c0_i32_0 = arith.constant 0 : i32
    return %arg0, %c0_i32 : i32, i32
  }
  func.func @transform_1(%arg0: i32) -> (i32, i32) {
    %c0_i32 = arith.constant 0 : i32
    %c0_i32_0 = arith.constant 0 : i32
    %c0_i32_1 = arith.constant 0 : i32
    return %c0_i32, %c0_i32_0 : i32, i32
  }
  func.func @transform_2(%arg0: i32) -> (i32, i32) {
    %c0_i32 = arith.constant 0 : i32
    %c0_i32_0 = arith.constant 0 : i32
    %c0_i32_1 = arith.constant 0 : i32
    return %c0_i32, %c0_i32_0 : i32, i32
  }
  func.func @transform_3(%arg0: i32) -> (i32, i32) {
    %c0_i32 = arith.constant 0 : i32
    %c0_i32_0 = arith.constant 0 : i32
    %c0_i32_1 = arith.constant 0 : i32
    return %c0_i32, %c0_i32_0 : i32, i32
  }
  func.func @transform_4(%arg0: i32) -> (i32, i32) {
    %c0_i32 = arith.constant 0 : i32
    %c0_i32_0 = arith.constant 0 : i32
    %c0_i32_1 = arith.constant 0 : i32
    return %c0_i32, %c0_i32_0 : i32, i32
  }
  func.func @transform_5(%arg0: i32) -> (i32, i32) {
    %c0_i32 = arith.constant 0 : i32
    %c0_i32_0 = arith.constant 0 : i32
    return %arg0, %c0_i32 : i32, i32
  }
  func.func @transform_6(%arg0: i32) -> (i32, i32, i32) {
    %c0_i32 = arith.constant 0 : i32
    %c0_i32_0 = arith.constant 0 : i32
    %c0_i32_1 = arith.constant 0 : i32
    return %arg0, %c0_i32, %c0_i32_0 : i32, i32, i32
  }
  func.func @transform_7(%arg0: i32) -> (i32, i32) {
    %c0_i32 = arith.constant 0 : i32
    %c0_i32_0 = arith.constant 0 : i32
    return %arg0, %c0_i32 : i32, i32
  }
}

</mosaic_0001>

<llo_original>
// kernel: custom-call.22
$region0: #{custom-call.22}
  %s0 = inlined_call_operand.hbm [shape: f32[2,2,4,4], index: 0, kind: input, shape index: {}]
  %s1 = inlined_call_operand.vmem [shape: f32[2,2,4,4], index: 1, kind: output, shape index: {0}]
  %s2 = inlined_call_operand.hbm [shape: s32[2,2,4], index: 2, kind: output, shape index: {1}]
  %s3 = inlined_call_operand.vmem [shape: s32[2,2,4], index: 3, kind: output, shape index: {2}]
  %4 = xla_tuple %s1, %s2, %s3
  $region1: #{custom-call.22} parent=0
    #allocation0 [shape = 'u8[4096]{0}', space=vmem, size = 0x1000, scoped, tag = 'operand span for operand 0']
    #allocation1 [shape = 'u8[4096]{0}', space=vmem, size = 0x1000, scoped, tag = 'packed  for operand 0']
    #allocation2 [shape = 's32[2]{0}', space=sflag, size = 0x8, scoped, tag = 'scoped memory for custom-call.22']
    #allocation3 [shape = 's32[2]{0}', space=sflag, size = 0x8, scoped, tag = 'scoped memory for custom-call.22']
    #allocation4 [shape = 'u8[4096]{0}', space=vmem, size = 0x1000, scoped, tag = 'operand span for operand 1']
    #allocation5 [shape = 'u8[4096]{0}', space=vmem, size = 0x1000, scoped, tag = 'packed  for operand 1']
    #allocation6 [shape = 'u8[4096]{0}', space=vmem, size = 0x1000, scoped, tag = 'operand span for operand 2']
    #allocation7 [shape = 'u8[2048]{0}', space=vmem, size = 0x800, scoped, tag = 'packed  for operand 2']
    #allocation8 [shape = 'u8[4096]{0}', space=vmem, size = 0x1000, scoped, tag = 'operand span for operand 3']
    #allocation9 [shape = 'u8[2048]{0}', space=vmem, size = 0x800, scoped, tag = 'packed  for operand 3']
    %5 = vsyncpa [#allocation2], 0
    %s6 = scalar_lea.sflag [#allocation2], 1
    %7 = vsyncpa %s6, 0
    %8 = vsyncpa [#allocation3], 0
    %s9 = scalar_lea.sflag [#allocation3], 1
    %10 = vsyncpa %s9, 0
    loop: start=0, step=1, limit=6
    $region2: #{custom-call.22} parent=1 // loop_pre_header
      _
    $region3: #{custom-call.22} parent=1 // loop_header
      %s12 = sphi 0, %s16
      %p13 = scmp.ge.s32.totalorder %s12, 6
      %s19 = sphi 0, %s31
      %s20 = sphi 0, %s27
      %s21 = sphi 0, %s19
      %s22 = sphi 0, %s20
      %s23 = sphi 0, %s21
      %s24 = sphi 0, %s22
      %s38 = sphi 0, %s40
      %s41 = sphi 0, %s38
      %s42 = sphi 0, %s41
      %s58 = sphi 0, %s42
      %s68 = sphi 0, %s70
      %s71 = sphi 0, %s68
      %s72 = sphi 0, %s71
      %s88 = sphi 0, %s72
    $region4: #{custom-call.22} parent=1 // loop_header_branch
      %15 = sbr.rel (%p13) target = $region8
    $region5: #{custom-call.22} parent=1 // loop_body
      %s17 = ssub.s32 %s12, 1
      %s18 = ssub.s32 %s12, 2
      %s25 = sadd.s32 1, %s20
      %p26 = scmp.ge.s32.totalorder %s25, 2
      %s27 = scalar_select %p26, 0, %s25
      %s28 = sadd.s32 1, %s19
      %s29 = scalar_select %p26, %s28, %s19
      %p30 = scmp.ge.s32.totalorder %s29, 2
      %s31 = scalar_select %p30, 0, %s29
      %s32 = sshrl.u32 %s20, 3
      %s33 = sshrl.u32 %s27, 3
      %s34 = ssub.s32 %s19, %s31
      %s35 = ssub.s32 %s32, %s33
      %s36 = sor.u32 %s34, %s35
      %p37 = scmp.eq.s32.totalorder %s36, 0
      %s39 = sadd.s32 %s38, 1
      %s40 = scalar_select %p37, %s38, %s39
      %p43 = pneg %p37
      %p44 = scmp.eq.s32.totalorder %s12, 3
      %p45 = por %p43, %p44
      %p46 = scmp.ne.s32.totalorder %s38, %s41
      %p47 = scmp.eq.s32.totalorder %s12, 0
      %p48 = por %p46, %p47
      %p49 = scmp.ne.s32.totalorder %s38, %s41
      %p50 = scmp.eq.s32.totalorder %s17, 3
      %p51 = por %p49, %p50
      %p52 = scmp.ne.s32.totalorder %s41, %s42
      %p53 = scmp.eq.s32.totalorder %s17, 0
      %p54 = por %p52, %p53
      %p55 = scmp.ne.s32.totalorder %s41, %s42
      %p56 = scmp.eq.s32.totalorder %s18, 3
      %p57 = por %p55, %p56
      %p59 = scmp.ne.s32.totalorder %s42, %s58
      %p60 = scmp.eq.s32.totalorder %s18, 0
      %p61 = por %p59, %p60
      %s62 = sshrl.u32 %s20, 3
      %s63 = sshrl.u32 %s27, 3
      %s64 = ssub.s32 %s19, %s31
      %s65 = ssub.s32 %s62, %s63
      %s66 = sor.u32 %s64, %s65
      %p67 = scmp.eq.s32.totalorder %s66, 0
      %s69 = sadd.s32 %s68, 1
      %s70 = scalar_select %p67, %s68, %s69
      %p73 = pneg %p67
      %p74 = scmp.eq.s32.totalorder %s12, 3
      %p75 = por %p73, %p74
      %p76 = scmp.ne.s32.totalorder %s68, %s71
      %p77 = scmp.eq.s32.totalorder %s12, 0
      %p78 = por %p76, %p77
      %p79 = scmp.ne.s32.totalorder %s68, %s71
      %p80 = scmp.eq.s32.totalorder %s17, 3
      %p81 = por %p79, %p80
      %p82 = scmp.ne.s32.totalorder %s71, %s72
      %p83 = scmp.eq.s32.totalorder %s17, 0
      %p84 = por %p82, %p83
      %p85 = scmp.ne.s32.totalorder %s71, %s72
      %p86 = scmp.eq.s32.totalorder %s18, 3
      %p87 = por %p85, %p86
      %p89 = scmp.ne.s32.totalorder %s72, %s88
      %p90 = scmp.eq.s32.totalorder %s18, 0
      %p91 = por %p89, %p90
      %p92 = scmp.le.s32.totalorder 1, %s12
      %p93 = scmp.lt.s32.totalorder %s12, 5
      %p94 = pnand %p92, %p93
      %p95 = pneg %p94
      // Predicated region
      $region9: #{custom-call.22} parent=5 // pred_check
        _
      $region10: #{custom-call.22} parent=5 // pred_check_branch
        %97 = sbr.rel (%p94) target = $region12
      $region11: #{custom-call.22} parent=5 // pred_region
        %s98 = ssub.s32 %s12, 1
      $region12: #{custom-call.22} parent=5 // pred_fallthru
        _
      %p99 = scmp.lt.s32.totalorder %s12, 4
      // Predicated region
      $region13: #{custom-call.22} parent=5 // pred_check
        %p100 = pneg %p99
      $region14: #{custom-call.22} parent=5 // pred_check_branch
        %102 = sbr.rel (%p100) target = $region16
      $region15: #{custom-call.22} parent=5 // pred_region
        %s103 = sand.u32 %s12, 1
        %s104 = scalar_lea.sflag [#allocation2], %s103
        %s105 = sand.u32 %s12, 1
        %s106 = smul.addr %s105, 4
        %s107 = scalar_lea.vmem [#allocation1], %s106
        %109 = vsyncadd %s104, 0
        %s110 = smul.addr %s19, 2
        %s111 = sadd.s32 %s20, %s110
        %s112 = smul.addr %s111, 4
        %s113 = scalar_lea.hbm %s0, %s112
        %s115 = sshll.u32 %s113, 4
        %s116 = int_to_ptr.hbm [resolvable:$true] %s115
        %s117 = sshll.u32 %s107, 4
        %s118 = int_to_ptr.vmem [resolvable:$true] %s117
        %120 = dma.hbm_to_vmem [thread:$0]  %s116, 64, %s118, %s104
      $region16: #{custom-call.22} parent=5 // pred_fallthru
        _
      %p121 = scmp.le.s32.totalorder 1, %s12
      %p122 = scmp.lt.s32.totalorder %s12, 5
      %p123 = pnand %p121, %p122
      %p124 = pneg %p123
      // Predicated region
      $region17: #{custom-call.22} parent=5 // pred_check
        _
      $region18: #{custom-call.22} parent=5 // pred_check_branch
        %126 = sbr.rel (%p123) target = $region20
      $region19: #{custom-call.22} parent=5 // pred_region
        #allocation10 [shape = 's32[4,128]{1,0}', space=vmem, size = 0x1000, scoped, tag = 'scratch for permutations']
        %s127 = ssub.s32 %s12, 1
        %s128 = sand.u32 %s17, 1
        %s129 = scalar_lea.sflag [#allocation2], %s128
        %s130 = sand.u32 %s17, 1
        %s131 = smul.addr %s130, 4
        %s132 = scalar_lea.vmem [#allocation1], %s131
        %134 = dma.done %s129, 64
        %s135 = sand.u32 %s17, 1
        %s136 = scalar_lea.sflag [#allocation2], %s135
        %s137 = sand.u32 %s17, 1
        %s138 = smul.addr %s137, 4
        %s139 = scalar_lea.vmem [#allocation1], %s138
        %s140 = sand.u32 %s17, 1
        %s141 = sand.u32 %s17, 1
        %s142 = smul.addr %s141, 4
        %s143 = scalar_lea.vmem [#allocation5], %s142
        %p144 = pneg %p54
        %p145 = pneg %p51
        %s146 = sand.u32 %s41, 1
        %s147 = scalar_lea.sflag [#allocation3], %s146
        %s148 = sand.u32 %s41, 1
        %s149 = smul.addr %s148, 2
        %s150 = scalar_lea.vmem [#allocation7], %s149
        %p151 = pneg %p84
        %p152 = pneg %p81
        %s153 = sand.u32 %s71, 1
        %s154 = sand.u32 %s71, 1
        %s155 = smul.addr %s154, 2
        %s156 = scalar_lea.vmem [#allocation9], %s155
        %s158 = ssub.s32 16, 1
        %v159 = vld [vmem:[%s139] sm:%s158]
        %160 = vst [vmem:[#allocation0] sm:%s158] %v159
        %s161 = sshrl.u32 %s22, 3
        %s162 = sshrl.u32 %s22, 3
        %v163 = vld [vmem:[#allocation0] sm:$0xff]
        %164 = vst [vmem:[#allocation4] sm:$0xff] %v163
        %s165 = sand.u32 %s22, 7
        %s166 = scalar_lea.vmem [#allocation6], %s165
        %s167 = sand.u32 %s22, 7
        %s168 = scalar_lea.vmem [#allocation8], %s167
        %169 = vst [vmem:[%s166] sm:$0x1] 0
        %v170 = vlaneseq
        %v171 = vshrl.u32 %v170, 7
        %v172 = vmov %v171
        %174 = vst [vmem:[#allocation10] sm:$0xff] %v172
        loop: start=0, step=1, limit=4
        $region22: #{custom-call.22} parent=19 // loop_pre_header
          _
        $region23: #{custom-call.22} parent=19 // loop_header
          %s176 = sphi 0, %s180
          %p177 = scmp.ge.s32.totalorder %s176, 4
        $region24: #{custom-call.22} parent=19 // loop_header_branch
          %179 = sbr.rel (%p177) target = $region28
        $region25: #{custom-call.22} parent=19 // loop_body
          %v181 = vstv %s176
          %v182 = vlaneseq
          %v183 = vshrl.u32 %v182, 7
          %v184 = vmov %v183
          %v185 = vld [vmem:[#allocation4] sm:$0xff]
          %v186 = vand.u32 2147483647, %v185
          %v188 = vstv %s176
          %vm189 = vcmp.ge.s32.totalorder %v184, %v188
          %vm190 = vcmp.lt.s32.totalorder %v184, 4
          %vm191 = vmand %vm189, %vm190
          %vm192 = vcmp.lt.f32.partialorder -inf, %v186
          %vm193 = vmand %vm191, %vm192
          %v194 = vsel %vm193, %v184, %v181
          %v195 = vsel %vm193, %v186, -inf
          %v196 = vrot.slane %v195, 1
          %v197 = vrot.slane %v194, 1
          %vm198 = vcmp.ge.f32.partialorder %v196, %v195
          %v199 = vsel %vm198, %v196, %v195
          %v200 = vsel %vm198, %v197, %v194
          %v201 = vrot.slane %v196, 1
          %v202 = vrot.slane %v197, 1
          %vm203 = vcmp.ge.f32.partialorder %v201, %v199
          %v204 = vsel %vm203, %v201, %v199
          %v205 = vsel %vm203, %v202, %v200
          %v206 = vrot.slane %v201, 1
          %v207 = vrot.slane %v202, 1
          %vm208 = vcmp.ge.f32.partialorder %v206, %v204
          %v209 = vsel %vm208, %v206, %v204
          %v210 = vsel %vm208, %v207, %v205
          %v211 = vrot.slane %v206, 1
          %v212 = vrot.slane %v207, 1
          %vm213 = vcmp.ge.f32.partialorder %v211, %v209
          %v214 = vsel %vm213, %v211, %v209
          %v215 = vsel %vm213, %v212, %v210
          %v216 = vrot.slane %v211, 1
          %v217 = vrot.slane %v212, 1
          %vm218 = vcmp.ge.f32.partialorder %v216, %v214
          %v219 = vsel %vm218, %v216, %v214
          %v220 = vsel %vm218, %v217, %v215
          %v221 = vrot.slane %v216, 1
          %v222 = vrot.slane %v217, 1
          %vm223 = vcmp.ge.f32.partialorder %v221, %v219
          %v224 = vsel %vm223, %v221, %v219
          %v225 = vsel %vm223, %v222, %v220
          %v226 = vrot.slane %v221, 1
          %v227 = vrot.slane %v222, 1
          %vm228 = vcmp.ge.f32.partialorder %v226, %v224
          %v229 = vsel %vm228, %v226, %v224
          %v230 = vsel %vm228, %v227, %v225
          %s231 = ssub.s32 128, %s176
          %232 = vrot.lane.b32.xlu0 %v230, %s231
          %v233 = vpop.permute.xlu0 %232
          %s234 = vtos %v233
          %v235 = vstv %s176
          %v236 = vlaneseq
          %v237 = vand.u32 %v236, 127
          %vm238 = vcmp.eq.s32.totalorder %v237, %v235
          %v239 = vstv %s234
          %v240 = vld [vmem:[%s166] ss:$0 sm:$0xff]
          %v241 = vsel %vm238, %v239, %v240
          %242 = vst [vmem:[%s166] sm:$0x1] %v241
          %s243 = scalar_lea.vmem [#allocation4], %s176
          %s244 = scalar_lea.vmem [#allocation4], %s234
          %v245 = vld [vmem:[%s243] ss:$0 sm:$0xff]
          %v246 = vld [vmem:[%s244] ss:$0 sm:$0xff]
          %247 = vst [vmem:[%s244] sm:$0x1] %v245
          %248 = vst [vmem:[%s243] sm:$0x1] %v246
          %s249 = scalar_lea.vmem [#allocation10], %s176
          %s250 = scalar_lea.vmem [#allocation10], %s234
          %v251 = vld [vmem:[%s249] ss:$0 sm:$0xff]
          %v252 = vld [vmem:[%s250] ss:$0 sm:$0xff]
          %253 = vst [vmem:[%s250] sm:$0x1] %v251
          %254 = vst [vmem:[%s249] sm:$0x1] %v252
          %vm255 = vcmp.ne.f32.partialorder %v246, 0.0
          %vm256 = vmand %vm238, %vm255
          %v257 = vsel %vm256, %v246, 1.0
          %v258 = vlaneseq
          %v259 = vand.u32 %v258, 127
          %v260 = vstv %s176
          %vm261 = vcmp.gt.s32.totalorder %v259, %v260
          %v262 = vsel %vm261, %v246, 0.0
          %v263 = vlaneseq
          %v264 = vshrl.u32 %v263, 7
          %v265 = vmov %v264
          %v266 = vld [vmem:[#allocation4] sm:$0xff]
          %v268 = vstv %s176
          %vm269 = vcmp.gt.s32.totalorder %v265, %v268
          %v270 = vsel %vm269, %v257, 1.0
          %v271 = vrcp.pop %v270
          %v272 = vmul.f32 %v270, %v271
          %v273 = vsub.f32 1.0, %v272
          %v274 = vmul.f32 %v271, %v273
          %v275 = vadd.f32 %v271, %v274
          %vm276 = vweird.f32 %v270
          %vm277 = vweird.f32 %v271
          %vm278 = vmor %vm276, %vm277
          %v279 = vsel %vm278, %v271, %v275
          %v280 = vand.u32 2147483647, %v270
          %vm281 = vcmp.eq.f32.partialorder %v280, 8.507059e+37
          %v282 = vand.u32 %v270, 2147483648
          %v283 = vor.u32 1.1754944e-38, %v282
          %v284 = vsel %vm281, %v283, %v279
          %v285 = vmul.f32 %v266, %v284
          %vm286 = vmand %vm269, %vm238
          %v287 = vsel %vm286, %v285, 0.0
          %288 = vadd.xlane.f32.xlu0 %v287
          %v289 = vpop.xlane.xlu0 %288
          %v290 = vmul.f32 %v289, %v262
          %v291 = vsub.f32 %v285, %v290
          %292 = vst [vmem:[#allocation4] sm:$0xff] %v291
        $region26: #{custom-call.22} parent=19 // loop_footer
          %s180 = sadd.s32 1, %s176
        $region27: #{custom-call.22} parent=19 // loop_footer_branch
          %175 = sbr.rel target = $region23
        $region28: #{custom-call.22} parent=19 // loop_exit
          _
        %v293 = vld [vmem:[#allocation10] sm:$0xff]
        %s294 = scalar_lea.vmem [#allocation10], 8
        %s295 = scalar_lea.vmem [#allocation10], 16
        %s296 = scalar_lea.vmem [#allocation10], 24
        %s297 = scalar_lea.vmem [#allocation10], 32
        %s298 = scalar_lea.vmem [#allocation10], 40
        %s299 = scalar_lea.vmem [#allocation10], 48
        %s300 = scalar_lea.vmem [#allocation10], 56
        %s301 = scalar_lea.vmem [#allocation10], 64
        %s302 = scalar_lea.vmem [#allocation10], 72
        %s303 = scalar_lea.vmem [#allocation10], 80
        %s304 = scalar_lea.vmem [#allocation10], 88
        %s305 = scalar_lea.vmem [#allocation10], 96
        %s306 = scalar_lea.vmem [#allocation10], 104
        %s307 = scalar_lea.vmem [#allocation10], 112
        %s308 = scalar_lea.vmem [#allocation10], 120
        %309 = vxpose.xlu0.b32.start [1/16] %v293, 128
        %310 = vxpose.xlu0.b32.cont [2/16] 0, 128
        %311 = vxpose.xlu0.b32.cont [3/16] 0, 128
        %312 = vxpose.xlu0.b32.cont [4/16] 0, 128
        %313 = vxpose.xlu0.b32.cont [5/16] 0, 128
        %314 = vxpose.xlu0.b32.cont [6/16] 0, 128
        %315 = vxpose.xlu0.b32.cont [7/16] 0, 128
        %316 = vxpose.xlu0.b32.cont [8/16] 0, 128
        %317 = vxpose.xlu0.b32.cont [9/16] 0, 128
        %318 = vxpose.xlu0.b32.cont [10/16] 0, 128
        %319 = vxpose.xlu0.b32.cont [11/16] 0, 128
        %320 = vxpose.xlu0.b32.cont [12/16] 0, 128
        %321 = vxpose.xlu0.b32.cont [13/16] 0, 128
        %322 = vxpose.xlu0.b32.cont [14/16] 0, 128
        %323 = vxpose.xlu0.b32.cont [15/16] 0, 128
        %324 = vxpose.xlu0.b32.end [16/16] 0, 128
        %v325 = vpop.trf.xlu0
        %v326 = vpop.trf.xlu0
        %v327 = vpop.trf.xlu0
        %v328 = vpop.trf.xlu0
        %v329 = vpop.trf.xlu0
        %v330 = vpop.trf.xlu0
        %v331 = vpop.trf.xlu0
        %v332 = vpop.trf.xlu0
        %v333 = vpop.trf.xlu0
        %v334 = vpop.trf.xlu0
        %v335 = vpop.trf.xlu0
        %v336 = vpop.trf.xlu0
        %v337 = vpop.trf.xlu0
        %v338 = vpop.trf.xlu0
        %v339 = vpop.trf.xlu0
        %v340 = vpop.trf.xlu0
        %341 = vst [vmem:[%s168] sm:$0x1] %v325
        %s343 = ssub.s32 16, 1
        %v344 = vld [vmem:[#allocation4] sm:%s343]
        %s346 = ssub.s32 16, 1
        %347 = vst [vmem:[%s143] sm:%s346] %v344
        %s349 = ssub.s32 4, 1
        %v350 = vld [vmem:[#allocation6] sm:%s349]
        %s352 = ssub.s32 4, 1
        %353 = vst [vmem:[%s150] sm:%s352] %v350
        %s355 = ssub.s32 4, 1
        %v356 = vld [vmem:[#allocation8] sm:%s355]
        %s358 = ssub.s32 4, 1
        %359 = vst [vmem:[%s156] sm:%s358] %v356
        %s360 = sand.u32 %s17, 1
        %s361 = sand.u32 %s17, 1
        %s362 = smul.addr %s361, 4
        %s363 = scalar_lea.vmem [#allocation5], %s362
        %s364 = sand.u32 %s41, 1
        %s365 = scalar_lea.sflag [#allocation3], %s364
        %s366 = sand.u32 %s41, 1
        %s367 = smul.addr %s366, 2
        %s368 = scalar_lea.vmem [#allocation7], %s367
        %s369 = sand.u32 %s71, 1
        %s370 = sand.u32 %s71, 1
        %s371 = smul.addr %s370, 2
        %s372 = scalar_lea.vmem [#allocation9], %s371
        %s373 = smul.addr %s21, 2
        %s374 = sadd.s32 %s22, %s373
        %s375 = smul.addr %s374, 4
        %s376 = scalar_lea.vmem %s1, %s375
        // Predicated region
        $region29: #{custom-call.22} parent=19 // pred_check
          _
        $region30: #{custom-call.22} parent=19 // pred_check_branch
          %378 = sbr.rel (0) target = $region32
        $region31: #{custom-call.22} parent=19 // pred_region
          // Predicated region
          $region33: #{custom-call.22} parent=31 // pred_check
            _
          $region34: #{custom-call.22} parent=31 // pred_check_branch
            %380 = sbr.rel target = $region36
          $region35: #{custom-call.22} parent=31 // pred_region
            // Predicated region
            $region48: #{custom-call.22} parent=35 // pred_check
              _
            $region49: #{custom-call.22} parent=35 // pred_check_branch
              %396 = sbr.rel (0) target = $region51
            $region50: #{custom-call.22} parent=35 // pred_region
              %s398 = ssub.s32 16, 1
              loop: start=0, step=1, limit=1
              $region52: #{custom-call.22} parent=50 // loop_pre_header
                _
              $region53: #{custom-call.22} parent=50 // loop_header
                %s400 = sphi 0, %s404
                %p401 = scmp.ge.s32.totalorder %s400, 1
                %s405 = sphi %s363, %s363
                %s406 = sphi %s376, %s376
              $region54: #{custom-call.22} parent=50 // loop_header_branch
                %403 = sbr.rel (%p401) target = $region58
              $region55: #{custom-call.22} parent=50 // loop_body
                %v407 = vld [vmem:[%s405] sm:%s398]
                %408 = vst [vmem:[%s406] sm:%s398] %v407
              $region56: #{custom-call.22} parent=50 // loop_footer
                %s404 = sadd.s32 1, %s400
              $region57: #{custom-call.22} parent=50 // loop_footer_branch
                %399 = sbr.rel target = $region53
              $region58: #{custom-call.22} parent=50 // loop_exit
                _
            $region51: #{custom-call.22} parent=35 // pred_fallthru
              _
          $region36: #{custom-call.22} parent=31 // pred_fallthru
            _
          // Predicated region
          $region37: #{custom-call.22} parent=31 // pred_check
            _
          $region38: #{custom-call.22} parent=31 // pred_check_branch
            %382 = sbr.rel (0) target = $region40
          $region39: #{custom-call.22} parent=31 // pred_region
            %s384 = ssub.s32 16, 1
            loop: start=0, step=1, limit=1
            $region41: #{custom-call.22} parent=39 // loop_pre_header
              _
            $region42: #{custom-call.22} parent=39 // loop_header
              %s386 = sphi 0, %s390
              %p387 = scmp.ge.s32.totalorder %s386, 1
              %s391 = sphi %s363, %s363
              %s392 = sphi %s376, %s376
            $region43: #{custom-call.22} parent=39 // loop_header_branch
              %389 = sbr.rel (%p387) target = $region47
            $region44: #{custom-call.22} parent=39 // loop_body
              %v393 = vld [vmem:[%s391] sm:%s384]
              %394 = vst [vmem:[%s392] sm:%s384] %v393
            $region45: #{custom-call.22} parent=39 // loop_footer
              %s390 = sadd.s32 1, %s386
            $region46: #{custom-call.22} parent=39 // loop_footer_branch
              %385 = sbr.rel target = $region42
            $region47: #{custom-call.22} parent=39 // loop_exit
              _
          $region40: #{custom-call.22} parent=31 // pred_fallthru
            _
        $region32: #{custom-call.22} parent=19 // pred_fallthru
          _
        %409 = vnop
        // Predicated region
        $region59: #{custom-call.22} parent=19 // pred_check
          %p410 = pneg %p51
        $region60: #{custom-call.22} parent=19 // pred_check_branch
          %412 = sbr.rel (%p410) target = $region62
        $region61: #{custom-call.22} parent=19 // pred_region
          %s413 = sshrl.u32 %s22, 3
          %415 = vsyncadd %s365, 0
          %s416 = sadd.s32 %s413, %s21
          %s417 = smul.addr %s416, 2
          %s418 = scalar_lea.hbm %s2, %s417
          %s420 = sshll.u32 %s368, 4
          %s421 = int_to_ptr.vmem [resolvable:$true] %s420
          %s422 = sshll.u32 %s418, 4
          %s423 = int_to_ptr.hbm [resolvable:$true] %s422
          %425 = dma.vmem_to_hbm [thread:$0]  %s421, 32, %s423, %s365
        $region62: #{custom-call.22} parent=19 // pred_fallthru
          _
        // Predicated region
        $region63: #{custom-call.22} parent=19 // pred_check
          %p426 = pneg %p81
        $region64: #{custom-call.22} parent=19 // pred_check_branch
          %428 = sbr.rel (%p426) target = $region66
        $region65: #{custom-call.22} parent=19 // pred_region
          %s429 = sshrl.u32 %s22, 3
          %s430 = sadd.s32 %s429, %s21
          %s431 = smul.addr %s430, 2
          %s432 = scalar_lea.vmem %s3, %s431
          // Predicated region
          $region67: #{custom-call.22} parent=65 // pred_check
            _
          $region68: #{custom-call.22} parent=65 // pred_check_branch
            %434 = sbr.rel (0) target = $region70
          $region69: #{custom-call.22} parent=65 // pred_region
            // Predicated region
            $region71: #{custom-call.22} parent=69 // pred_check
              _
            $region72: #{custom-call.22} parent=69 // pred_check_branch
              %436 = sbr.rel target = $region74
            $region73: #{custom-call.22} parent=69 // pred_region
              // Predicated region
              $region86: #{custom-call.22} parent=73 // pred_check
                _
              $region87: #{custom-call.22} parent=73 // pred_check_branch
                %452 = sbr.rel (0) target = $region89
              $region88: #{custom-call.22} parent=73 // pred_region
                %s454 = ssub.s32 4, 1
                loop: start=0, step=1, limit=1
                $region90: #{custom-call.22} parent=88 // loop_pre_header
                  _
                $region91: #{custom-call.22} parent=88 // loop_header
                  %s456 = sphi 0, %s460
                  %p457 = scmp.ge.s32.totalorder %s456, 1
                  %s461 = sphi %s372, %s372
                  %s462 = sphi %s432, %s432
                $region92: #{custom-call.22} parent=88 // loop_header_branch
                  %459 = sbr.rel (%p457) target = $region96
                $region93: #{custom-call.22} parent=88 // loop_body
                  %v463 = vld [vmem:[%s461] sm:%s454]
                  %464 = vst [vmem:[%s462] sm:%s454] %v463
                $region94: #{custom-call.22} parent=88 // loop_footer
                  %s460 = sadd.s32 1, %s456
                $region95: #{custom-call.22} parent=88 // loop_footer_branch
                  %455 = sbr.rel target = $region91
                $region96: #{custom-call.22} parent=88 // loop_exit
                  _
              $region89: #{custom-call.22} parent=73 // pred_fallthru
                _
            $region74: #{custom-call.22} parent=69 // pred_fallthru
              _
            // Predicated region
            $region75: #{custom-call.22} parent=69 // pred_check
              _
            $region76: #{custom-call.22} parent=69 // pred_check_branch
              %438 = sbr.rel (0) target = $region78
            $region77: #{custom-call.22} parent=69 // pred_region
              %s440 = ssub.s32 4, 1
              loop: start=0, step=1, limit=1
              $region79: #{custom-call.22} parent=77 // loop_pre_header
                _
              $region80: #{custom-call.22} parent=77 // loop_header
                %s442 = sphi 0, %s446
                %p443 = scmp.ge.s32.totalorder %s442, 1
                %s447 = sphi %s372, %s372
                %s448 = sphi %s432, %s432
              $region81: #{custom-call.22} parent=77 // loop_header_branch
                %445 = sbr.rel (%p443) target = $region85
              $region82: #{custom-call.22} parent=77 // loop_body
                %v449 = vld [vmem:[%s447] sm:%s440]
                %450 = vst [vmem:[%s448] sm:%s440] %v449
              $region83: #{custom-call.22} parent=77 // loop_footer
                %s446 = sadd.s32 1, %s442
              $region84: #{custom-call.22} parent=77 // loop_footer_branch
                %441 = sbr.rel target = $region80
              $region85: #{custom-call.22} parent=77 // loop_exit
                _
            $region78: #{custom-call.22} parent=69 // pred_fallthru
              _
          $region70: #{custom-call.22} parent=65 // pred_fallthru
            _
          %465 = vnop
        $region66: #{custom-call.22} parent=19 // pred_fallthru
          _
      $region20: #{custom-call.22} parent=5 // pred_fallthru
        _
      %p466 = scmp.le.s32.totalorder 2, %s12
      // Predicated region
      $region97: #{custom-call.22} parent=5 // pred_check
        %p467 = pneg %p466
      $region98: #{custom-call.22} parent=5 // pred_check_branch
        %469 = sbr.rel (%p467) target = $region100
      $region99: #{custom-call.22} parent=5 // pred_region
        %s470 = ssub.s32 %s12, 2
        %s471 = sand.u32 %s18, 1
        %s472 = sand.u32 %s18, 1
        %s473 = smul.addr %s472, 4
        %s474 = scalar_lea.vmem [#allocation5], %s473
        // Predicated region
        $region101: #{custom-call.22} parent=99 // pred_check
          %p475 = pneg %p57
        $region102: #{custom-call.22} parent=99 // pred_check_branch
          %477 = sbr.rel (%p475) target = $region104
        $region103: #{custom-call.22} parent=99 // pred_region
          %s478 = sand.u32 %s42, 1
          %s479 = scalar_lea.sflag [#allocation3], %s478
          %s480 = sand.u32 %s42, 1
          %s481 = smul.addr %s480, 2
          %s482 = scalar_lea.vmem [#allocation7], %s481
          %484 = dma.done %s479, 32
        $region104: #{custom-call.22} parent=99 // pred_fallthru
          _
        // Predicated region
        $region105: #{custom-call.22} parent=99 // pred_check
          %p485 = pneg %p87
        $region106: #{custom-call.22} parent=99 // pred_check_branch
          %487 = sbr.rel (%p485) target = $region108
        $region107: #{custom-call.22} parent=99 // pred_region
          %s488 = sand.u32 %s72, 1
          %s489 = sand.u32 %s72, 1
          %s490 = smul.addr %s489, 2
          %s491 = scalar_lea.vmem [#allocation9], %s490
        $region108: #{custom-call.22} parent=99 // pred_fallthru
          _
      $region100: #{custom-call.22} parent=5 // pred_fallthru
        _
    $region6: #{custom-call.22} parent=1 // loop_footer
      %s16 = sadd.s32 1, %s12
    $region7: #{custom-call.22} parent=1 // loop_footer_branch
      %11 = sbr.rel target = $region3
    $region8: #{custom-call.22} parent=1 // loop_exit
      _
    %492 = vsyncpa [#allocation2], 1
    %s493 = scalar_lea.sflag [#allocation2], 1
    %494 = vsyncpa %s493, 1
    %495 = vsyncpa [#allocation3], 1
    %s496 = scalar_lea.sflag [#allocation3], 1
    %497 = vsyncpa %s496, 1

// kernel: custom-call.24
$region0: #{custom-call.24}
  %s0 = inlined_call_operand.vmem [shape: f32[2,2,1,4,4], index: 0, kind: input, shape index: {}]
  %s1 = inlined_call_operand.vmem [shape: f32[2,2,1,4,4], index: 1, kind: output, shape index: {}]
  $region1: #{custom-call.24} parent=0
    #allocation0 [shape = 'u8[4096]{0}', space=vmem, size = 0x1000, scoped, tag = 'operand span for operand 0']
    #allocation1 [shape = 'u8[4096]{0}', space=vmem, size = 0x1000, scoped, tag = 'packed  for operand 0']
    #allocation2 [shape = 'u8[4096]{0}', space=vmem, size = 0x1000, scoped, tag = 'operand span for operand 1']
    #allocation3 [shape = 'u8[4096]{0}', space=vmem, size = 0x1000, scoped, tag = 'packed  for operand 1']
    loop: start=0, step=1, limit=6
    $region2: #{custom-call.24} parent=1 // loop_pre_header
      _
    $region3: #{custom-call.24} parent=1 // loop_header
      %s3 = sphi 0, %s7
      %p4 = scmp.ge.s32.totalorder %s3, 6
      %s10 = sphi 0, %s43
      %s11 = sphi 0, %s39
      %s12 = sphi 0, %s35
      %s13 = sphi 0, %s31
      %s14 = sphi 0, %s27
      %s15 = sphi 0, %s10
      %s16 = sphi 0, %s11
      %s17 = sphi 0, %s12
      %s18 = sphi 0, %s13
      %s19 = sphi 0, %s14
      %s20 = sphi 0, %s15
      %s21 = sphi 0, %s16
      %s22 = sphi 0, %s17
      %s23 = sphi 0, %s18
      %s24 = sphi 0, %s19
    $region4: #{custom-call.24} parent=1 // loop_header_branch
      %6 = sbr.rel (%p4) target = $region8
    $region5: #{custom-call.24} parent=1 // loop_body
      %s8 = ssub.s32 %s3, 1
      %s9 = ssub.s32 %s3, 2
      %s25 = sadd.s32 1, %s14
      %p26 = scmp.ge.s32.totalorder %s25, 1
      %s27 = scalar_select %p26, 0, %s25
      %s28 = sadd.s32 1, %s13
      %s29 = scalar_select %p26, %s28, %s13
      %p30 = scmp.ge.s32.totalorder %s29, 1
      %s31 = scalar_select %p30, 0, %s29
      %s32 = sadd.s32 1, %s12
      %s33 = scalar_select %p30, %s32, %s12
      %p34 = scmp.ge.s32.totalorder %s33, 1
      %s35 = scalar_select %p34, 0, %s33
      %s36 = sadd.s32 1, %s11
      %s37 = scalar_select %p34, %s36, %s11
      %p38 = scmp.ge.s32.totalorder %s37, 2
      %s39 = scalar_select %p38, 0, %s37
      %s40 = sadd.s32 1, %s10
      %s41 = scalar_select %p38, %s40, %s10
      %p42 = scmp.ge.s32.totalorder %s41, 2
      %s43 = scalar_select %p42, 0, %s41
      %p44 = scmp.le.s32.totalorder 1, %s3
      %p45 = scmp.lt.s32.totalorder %s3, 5
      %p46 = pnand %p44, %p45
      %p47 = pneg %p46
      // Predicated region
      $region9: #{custom-call.24} parent=5 // pred_check
        _
      $region10: #{custom-call.24} parent=5 // pred_check_branch
        %49 = sbr.rel (%p46) target = $region12
      $region11: #{custom-call.24} parent=5 // pred_region
        %s50 = ssub.s32 %s3, 1
      $region12: #{custom-call.24} parent=5 // pred_fallthru
        _
      %p51 = scmp.lt.s32.totalorder %s3, 4
      // Predicated region
      $region13: #{custom-call.24} parent=5 // pred_check
        %p52 = pneg %p51
      $region14: #{custom-call.24} parent=5 // pred_check_branch
        %54 = sbr.rel (%p52) target = $region16
      $region15: #{custom-call.24} parent=5 // pred_region
        %s55 = sand.u32 %s3, 1
        %s56 = sand.u32 %s3, 1
        %s57 = smul.addr %s56, 4
        %s58 = scalar_lea.vmem [#allocation1], %s57
        %s59 = sadd.s32 %s14, %s13
        %s60 = sadd.s32 %s59, %s12
        %s61 = sadd.s32 %s60, %s11
        %s62 = smul.addr %s10, 2
        %s63 = sadd.s32 %s61, %s62
        %s64 = smul.addr %s63, 4
        %s65 = scalar_lea.vmem %s0, %s64
        // Predicated region
        $region17: #{custom-call.24} parent=15 // pred_check
          _
        $region18: #{custom-call.24} parent=15 // pred_check_branch
          %67 = sbr.rel (0) target = $region20
        $region19: #{custom-call.24} parent=15 // pred_region
          // Predicated region
          $region21: #{custom-call.24} parent=19 // pred_check
            _
          $region22: #{custom-call.24} parent=19 // pred_check_branch
            %69 = sbr.rel target = $region24
          $region23: #{custom-call.24} parent=19 // pred_region
            // Predicated region
            $region36: #{custom-call.24} parent=23 // pred_check
              _
            $region37: #{custom-call.24} parent=23 // pred_check_branch
              %85 = sbr.rel (0) target = $region39
            $region38: #{custom-call.24} parent=23 // pred_region
              %s87 = ssub.s32 16, 1
              loop: start=0, step=1, limit=1
              $region40: #{custom-call.24} parent=38 // loop_pre_header
                _
              $region41: #{custom-call.24} parent=38 // loop_header
                %s89 = sphi 0, %s93
                %p90 = scmp.ge.s32.totalorder %s89, 1
                %s94 = sphi %s65, %s65
                %s95 = sphi %s58, %s58
              $region42: #{custom-call.24} parent=38 // loop_header_branch
                %92 = sbr.rel (%p90) target = $region46
              $region43: #{custom-call.24} parent=38 // loop_body
                %v96 = vld [vmem:[%s94] sm:%s87]
                %97 = vst [vmem:[%s95] sm:%s87] %v96
              $region44: #{custom-call.24} parent=38 // loop_footer
                %s93 = sadd.s32 1, %s89
              $region45: #{custom-call.24} parent=38 // loop_footer_branch
                %88 = sbr.rel target = $region41
              $region46: #{custom-call.24} parent=38 // loop_exit
                _
            $region39: #{custom-call.24} parent=23 // pred_fallthru
              _
          $region24: #{custom-call.24} parent=19 // pred_fallthru
            _
          // Predicated region
          $region25: #{custom-call.24} parent=19 // pred_check
            _
          $region26: #{custom-call.24} parent=19 // pred_check_branch
            %71 = sbr.rel (0) target = $region28
          $region27: #{custom-call.24} parent=19 // pred_region
            %s73 = ssub.s32 16, 1
            loop: start=0, step=1, limit=1
            $region29: #{custom-call.24} parent=27 // loop_pre_header
              _
            $region30: #{custom-call.24} parent=27 // loop_header
              %s75 = sphi 0, %s79
              %p76 = scmp.ge.s32.totalorder %s75, 1
              %s80 = sphi %s65, %s65
              %s81 = sphi %s58, %s58
            $region31: #{custom-call.24} parent=27 // loop_header_branch
              %78 = sbr.rel (%p76) target = $region35
            $region32: #{custom-call.24} parent=27 // loop_body
              %v82 = vld [vmem:[%s80] sm:%s73]
              %83 = vst [vmem:[%s81] sm:%s73] %v82
            $region33: #{custom-call.24} parent=27 // loop_footer
              %s79 = sadd.s32 1, %s75
            $region34: #{custom-call.24} parent=27 // loop_footer_branch
              %74 = sbr.rel target = $region30
            $region35: #{custom-call.24} parent=27 // loop_exit
              _
          $region28: #{custom-call.24} parent=19 // pred_fallthru
            _
        $region20: #{custom-call.24} parent=15 // pred_fallthru
          _
        %98 = vnop
      $region16: #{custom-call.24} parent=5 // pred_fallthru
        _
      %p99 = scmp.le.s32.totalorder 1, %s3
      %p100 = scmp.lt.s32.totalorder %s3, 5
      %p101 = pnand %p99, %p100
      %p102 = pneg %p101
      // Predicated region
      $region47: #{custom-call.24} parent=5 // pred_check
        _
      $region48: #{custom-call.24} parent=5 // pred_check_branch
        %104 = sbr.rel (%p101) target = $region50
      $region49: #{custom-call.24} parent=5 // pred_region
        #allocation4 [shape = 'f32[4,4]{1,0}', space=vmem, size = 0x1000, scoped, tag = 'rescaled input a']
        %s105 = ssub.s32 %s3, 1
        %s106 = sand.u32 %s8, 1
        %s107 = sand.u32 %s8, 1
        %s108 = smul.addr %s107, 4
        %s109 = scalar_lea.vmem [#allocation1], %s108
        %s110 = sand.u32 %s8, 1
        %s111 = sand.u32 %s8, 1
        %s112 = smul.addr %s111, 4
        %s113 = scalar_lea.vmem [#allocation1], %s112
        %s114 = sand.u32 %s8, 1
        %s115 = sand.u32 %s8, 1
        %s116 = smul.addr %s115, 4
        %s117 = scalar_lea.vmem [#allocation3], %s116
        %s119 = ssub.s32 16, 1
        %v120 = vld [vmem:[%s113] sm:%s119]
        %121 = vst [vmem:[#allocation0] sm:%s119] %v120
        %v122 = vlaneseq
        %v123 = vand.u32 %v122, 127
        %vm124 = vcmp.lt.s32.totalorder %v123, 4
        %v125 = vlaneseq
        %v126 = vshrl.u32 %v125, 7
        %vm128 = vcmp.eq.s32.totalorder %v126, %v123
        %v129 = vld [vmem:[#allocation0] sm:$0xff]
        %v130 = vsel %vm128, %v129, 0.0
        %131 = vadd.xlane.f32.xlu0 %v130
        %v132 = vpop.xlane.xlu0 %131
        %vm133 = vcmp.ge.s32.totalorder %v126, %v123
        %vm134 = vmand %vm133, %vm124
        %v135 = vsel %vm134, %v129, 0.0
        %v136 = vrcp.pop %v132
        %v137 = vmul.f32 %v132, %v136
        %v138 = vsub.f32 1.0, %v137
        %v139 = vmul.f32 %v136, %v138
        %v140 = vadd.f32 %v136, %v139
        %vm141 = vweird.f32 %v132
        %vm142 = vweird.f32 %v136
        %vm143 = vmor %vm141, %vm142
        %v144 = vsel %vm143, %v136, %v140
        %v145 = vand.u32 2147483647, %v132
        %vm146 = vcmp.eq.f32.partialorder %v145, 8.507059e+37
        %v147 = vand.u32 %v132, 2147483648
        %v148 = vor.u32 1.1754944e-38, %v147
        %v149 = vsel %vm146, %v148, %v144
        %v150 = vmul.f32 %v135, %v149
        %151 = vst [vmem:[#allocation4] sm:$0xff] %v150
        %v152 = vlaneseq
        %v153 = vand.u32 %v152, 127
        %v154 = vlaneseq
        %v155 = vshrl.u32 %v154, 7
        %vm157 = vcmp.eq.s32.totalorder %v153, %v155
        %v158 = vlaneseq
        %v159 = vand.u32 %v158, 127
        %vm160 = vcmp.eq.s32.totalorder %v159, 0
        %v161 = vsel %vm160, 1.0, -1.0
        %v162 = vsel %vm157, %v161, 0.0
        %s163 = scalar_lea.vmem [#allocation4], 1
        %v164 = vld [vmem:[%s163] ss:$0 sm:$0xff]
        %v165 = vxor.u32 %v164, 2147483648
        %v166 = vlaneseq
        %v167 = vand.u32 %v166, 127
        %vm168 = vcmp.eq.s32.totalorder %v167, 1
        %v169 = vmul.f32 %v165, %v162
        %170 = vadd.xlane.f32.xlu0 %v169
        %v171 = vpop.xlane.xlu0 %170
        %v172 = vsel %vm168, %v171, %v162
        %s173 = scalar_lea.vmem [#allocation4], 2
        %v174 = vld [vmem:[%s173] ss:$0 sm:$0xff]
        %v175 = vxor.u32 %v174, 2147483648
        %v176 = vlaneseq
        %v177 = vand.u32 %v176, 127
        %vm178 = vcmp.eq.s32.totalorder %v177, 2
        %v179 = vmul.f32 %v175, %v172
        %180 = vadd.xlane.f32.xlu0 %v179
        %v181 = vpop.xlane.xlu0 %180
        %v182 = vsel %vm178, %v181, %v172
        %s183 = scalar_lea.vmem [#allocation4], 3
        %v184 = vld [vmem:[%s183] ss:$0 sm:$0xff]
        %v185 = vxor.u32 %v184, 2147483648
        %v186 = vlaneseq
        %v187 = vand.u32 %v186, 127
        %vm188 = vcmp.eq.s32.totalorder %v187, 3
        %v189 = vmul.f32 %v185, %v182
        %190 = vadd.xlane.f32.xlu0 %v189
        %v191 = vpop.xlane.xlu0 %190
        %v192 = vsel %vm188, %v191, %v182
        %v193 = vrcp.pop %v132
        %v194 = vmul.f32 %v132, %v193
        %v195 = vsub.f32 1.0, %v194
        %v196 = vmul.f32 %v193, %v195
        %v197 = vadd.f32 %v193, %v196
        %vm198 = vweird.f32 %v132
        %vm199 = vweird.f32 %v193
        %vm200 = vmor %vm198, %vm199
        %v201 = vsel %vm200, %v193, %v197
        %v202 = vand.u32 2147483647, %v132
        %vm203 = vcmp.eq.f32.partialorder %v202, 8.507059e+37
        %v204 = vand.u32 %v132, 2147483648
        %v205 = vor.u32 1.1754944e-38, %v204
        %v206 = vsel %vm203, %v205, %v201
        %v207 = vmul.f32 %v192, %v206
        %vm208 = vweird.f32 %v132
        %v209 = vsel %vm208, %v192, %v207
        %210 = vst [vmem:[#allocation2] sm:$0xff] %v209
        %s212 = ssub.s32 16, 1
        %v213 = vld [vmem:[#allocation2] sm:%s212]
        %s215 = ssub.s32 16, 1
        %216 = vst [vmem:[%s117] sm:%s215] %v213
        %s217 = sand.u32 %s8, 1
        %s218 = sand.u32 %s8, 1
        %s219 = smul.addr %s218, 4
        %s220 = scalar_lea.vmem [#allocation3], %s219
        %s221 = sadd.s32 %s19, %s18
        %s222 = sadd.s32 %s221, %s17
        %s223 = sadd.s32 %s222, %s16
        %s224 = smul.addr %s15, 2
        %s225 = sadd.s32 %s223, %s224
        %s226 = smul.addr %s225, 4
        %s227 = scalar_lea.vmem %s1, %s226
        // Predicated region
        $region51: #{custom-call.24} parent=49 // pred_check
          _
        $region52: #{custom-call.24} parent=49 // pred_check_branch
          %229 = sbr.rel (0) target = $region54
        $region53: #{custom-call.24} parent=49 // pred_region
          // Predicated region
          $region55: #{custom-call.24} parent=53 // pred_check
            _
          $region56: #{custom-call.24} parent=53 // pred_check_branch
            %231 = sbr.rel target = $region58
          $region57: #{custom-call.24} parent=53 // pred_region
            // Predicated region
            $region70: #{custom-call.24} parent=57 // pred_check
              _
            $region71: #{custom-call.24} parent=57 // pred_check_branch
              %247 = sbr.rel (0) target = $region73
            $region72: #{custom-call.24} parent=57 // pred_region
              %s249 = ssub.s32 16, 1
              loop: start=0, step=1, limit=1
              $region74: #{custom-call.24} parent=72 // loop_pre_header
                _
              $region75: #{custom-call.24} parent=72 // loop_header
                %s251 = sphi 0, %s255
                %p252 = scmp.ge.s32.totalorder %s251, 1
                %s256 = sphi %s220, %s220
                %s257 = sphi %s227, %s227
              $region76: #{custom-call.24} parent=72 // loop_header_branch
                %254 = sbr.rel (%p252) target = $region80
              $region77: #{custom-call.24} parent=72 // loop_body
                %v258 = vld [vmem:[%s256] sm:%s249]
                %259 = vst [vmem:[%s257] sm:%s249] %v258
              $region78: #{custom-call.24} parent=72 // loop_footer
                %s255 = sadd.s32 1, %s251
              $region79: #{custom-call.24} parent=72 // loop_footer_branch
                %250 = sbr.rel target = $region75
              $region80: #{custom-call.24} parent=72 // loop_exit
                _
            $region73: #{custom-call.24} parent=57 // pred_fallthru
              _
          $region58: #{custom-call.24} parent=53 // pred_fallthru
            _
          // Predicated region
          $region59: #{custom-call.24} parent=53 // pred_check
            _
          $region60: #{custom-call.24} parent=53 // pred_check_branch
            %233 = sbr.rel (0) target = $region62
          $region61: #{custom-call.24} parent=53 // pred_region
            %s235 = ssub.s32 16, 1
            loop: start=0, step=1, limit=1
            $region63: #{custom-call.24} parent=61 // loop_pre_header
              _
            $region64: #{custom-call.24} parent=61 // loop_header
              %s237 = sphi 0, %s241
              %p238 = scmp.ge.s32.totalorder %s237, 1
              %s242 = sphi %s220, %s220
              %s243 = sphi %s227, %s227
            $region65: #{custom-call.24} parent=61 // loop_header_branch
              %240 = sbr.rel (%p238) target = $region69
            $region66: #{custom-call.24} parent=61 // loop_body
              %v244 = vld [vmem:[%s242] sm:%s235]
              %245 = vst [vmem:[%s243] sm:%s235] %v244
            $region67: #{custom-call.24} parent=61 // loop_footer
              %s241 = sadd.s32 1, %s237
            $region68: #{custom-call.24} parent=61 // loop_footer_branch
              %236 = sbr.rel target = $region64
            $region69: #{custom-call.24} parent=61 // loop_exit
              _
          $region62: #{custom-call.24} parent=53 // pred_fallthru
            _
        $region54: #{custom-call.24} parent=49 // pred_fallthru
          _
        %260 = vnop
      $region50: #{custom-call.24} parent=5 // pred_fallthru
        _
      %p261 = scmp.le.s32.totalorder 2, %s3
      // Predicated region
      $region81: #{custom-call.24} parent=5 // pred_check
        %p262 = pneg %p261
      $region82: #{custom-call.24} parent=5 // pred_check_branch
        %264 = sbr.rel (%p262) target = $region84
      $region83: #{custom-call.24} parent=5 // pred_region
        %s265 = ssub.s32 %s3, 2
        %s266 = sand.u32 %s9, 1
        %s267 = sand.u32 %s9, 1
        %s268 = smul.addr %s267, 4
        %s269 = scalar_lea.vmem [#allocation3], %s268
      $region84: #{custom-call.24} parent=5 // pred_fallthru
        _
    $region6: #{custom-call.24} parent=1 // loop_footer
      %s7 = sadd.s32 1, %s3
    $region7: #{custom-call.24} parent=1 // loop_footer_branch
      %2 = sbr.rel target = $region3
    $region8: #{custom-call.24} parent=1 // loop_exit
      _

// kernel: custom-call.23
$region0: #{custom-call.23}
  %s0 = inlined_call_operand.vmem [shape: f32[2,2,1,4,4], index: 0, kind: input, shape index: {}]
  %s1 = inlined_call_operand.vmem [shape: f32[2,2,1,4,4], index: 1, kind: output, shape index: {}]
  $region1: #{custom-call.23} parent=0
    #allocation0 [shape = 'u8[4096]{0}', space=vmem, size = 0x1000, scoped, tag = 'operand span for operand 0']
    #allocation1 [shape = 'u8[4096]{0}', space=vmem, size = 0x1000, scoped, tag = 'packed  for operand 0']
    #allocation2 [shape = 'u8[4096]{0}', space=vmem, size = 0x1000, scoped, tag = 'operand span for operand 1']
    #allocation3 [shape = 'u8[4096]{0}', space=vmem, size = 0x1000, scoped, tag = 'packed  for operand 1']
    loop: start=0, step=1, limit=6
    $region2: #{custom-call.23} parent=1 // loop_pre_header
      _
    $region3: #{custom-call.23} parent=1 // loop_header
      %s3 = sphi 0, %s7
      %p4 = scmp.ge.s32.totalorder %s3, 6
      %s10 = sphi 0, %s43
      %s11 = sphi 0, %s39
      %s12 = sphi 0, %s35
      %s13 = sphi 0, %s31
      %s14 = sphi 0, %s27
      %s15 = sphi 0, %s10
      %s16 = sphi 0, %s11
      %s17 = sphi 0, %s12
      %s18 = sphi 0, %s13
      %s19 = sphi 0, %s14
      %s20 = sphi 0, %s15
      %s21 = sphi 0, %s16
      %s22 = sphi 0, %s17
      %s23 = sphi 0, %s18
      %s24 = sphi 0, %s19
    $region4: #{custom-call.23} parent=1 // loop_header_branch
      %6 = sbr.rel (%p4) target = $region8
    $region5: #{custom-call.23} parent=1 // loop_body
      %s8 = ssub.s32 %s3, 1
      %s9 = ssub.s32 %s3, 2
      %s25 = sadd.s32 1, %s14
      %p26 = scmp.ge.s32.totalorder %s25, 1
      %s27 = scalar_select %p26, 0, %s25
      %s28 = sadd.s32 1, %s13
      %s29 = scalar_select %p26, %s28, %s13
      %p30 = scmp.ge.s32.totalorder %s29, 1
      %s31 = scalar_select %p30, 0, %s29
      %s32 = sadd.s32 1, %s12
      %s33 = scalar_select %p30, %s32, %s12
      %p34 = scmp.ge.s32.totalorder %s33, 1
      %s35 = scalar_select %p34, 0, %s33
      %s36 = sadd.s32 1, %s11
      %s37 = scalar_select %p34, %s36, %s11
      %p38 = scmp.ge.s32.totalorder %s37, 2
      %s39 = scalar_select %p38, 0, %s37
      %s40 = sadd.s32 1, %s10
      %s41 = scalar_select %p38, %s40, %s10
      %p42 = scmp.ge.s32.totalorder %s41, 2
      %s43 = scalar_select %p42, 0, %s41
      %p44 = scmp.le.s32.totalorder 1, %s3
      %p45 = scmp.lt.s32.totalorder %s3, 5
      %p46 = pnand %p44, %p45
      %p47 = pneg %p46
      // Predicated region
      $region9: #{custom-call.23} parent=5 // pred_check
        _
      $region10: #{custom-call.23} parent=5 // pred_check_branch
        %49 = sbr.rel (%p46) target = $region12
      $region11: #{custom-call.23} parent=5 // pred_region
        %s50 = ssub.s32 %s3, 1
      $region12: #{custom-call.23} parent=5 // pred_fallthru
        _
      %p51 = scmp.lt.s32.totalorder %s3, 4
      // Predicated region
      $region13: #{custom-call.23} parent=5 // pred_check
        %p52 = pneg %p51
      $region14: #{custom-call.23} parent=5 // pred_check_branch
        %54 = sbr.rel (%p52) target = $region16
      $region15: #{custom-call.23} parent=5 // pred_region
        %s55 = sand.u32 %s3, 1
        %s56 = sand.u32 %s3, 1
        %s57 = smul.addr %s56, 4
        %s58 = scalar_lea.vmem [#allocation1], %s57
        %s59 = sadd.s32 %s14, %s13
        %s60 = sadd.s32 %s59, %s12
        %s61 = sadd.s32 %s60, %s11
        %s62 = smul.addr %s10, 2
        %s63 = sadd.s32 %s61, %s62
        %s64 = smul.addr %s63, 4
        %s65 = scalar_lea.vmem %s0, %s64
        // Predicated region
        $region17: #{custom-call.23} parent=15 // pred_check
          _
        $region18: #{custom-call.23} parent=15 // pred_check_branch
          %67 = sbr.rel (0) target = $region20
        $region19: #{custom-call.23} parent=15 // pred_region
          // Predicated region
          $region21: #{custom-call.23} parent=19 // pred_check
            _
          $region22: #{custom-call.23} parent=19 // pred_check_branch
            %69 = sbr.rel target = $region24
          $region23: #{custom-call.23} parent=19 // pred_region
            // Predicated region
            $region36: #{custom-call.23} parent=23 // pred_check
              _
            $region37: #{custom-call.23} parent=23 // pred_check_branch
              %85 = sbr.rel (0) target = $region39
            $region38: #{custom-call.23} parent=23 // pred_region
              %s87 = ssub.s32 16, 1
              loop: start=0, step=1, limit=1
              $region40: #{custom-call.23} parent=38 // loop_pre_header
                _
              $region41: #{custom-call.23} parent=38 // loop_header
                %s89 = sphi 0, %s93
                %p90 = scmp.ge.s32.totalorder %s89, 1
                %s94 = sphi %s65, %s65
                %s95 = sphi %s58, %s58
              $region42: #{custom-call.23} parent=38 // loop_header_branch
                %92 = sbr.rel (%p90) target = $region46
              $region43: #{custom-call.23} parent=38 // loop_body
                %v96 = vld [vmem:[%s94] sm:%s87]
                %97 = vst [vmem:[%s95] sm:%s87] %v96
              $region44: #{custom-call.23} parent=38 // loop_footer
                %s93 = sadd.s32 1, %s89
              $region45: #{custom-call.23} parent=38 // loop_footer_branch
                %88 = sbr.rel target = $region41
              $region46: #{custom-call.23} parent=38 // loop_exit
                _
            $region39: #{custom-call.23} parent=23 // pred_fallthru
              _
          $region24: #{custom-call.23} parent=19 // pred_fallthru
            _
          // Predicated region
          $region25: #{custom-call.23} parent=19 // pred_check
            _
          $region26: #{custom-call.23} parent=19 // pred_check_branch
            %71 = sbr.rel (0) target = $region28
          $region27: #{custom-call.23} parent=19 // pred_region
            %s73 = ssub.s32 16, 1
            loop: start=0, step=1, limit=1
            $region29: #{custom-call.23} parent=27 // loop_pre_header
              _
            $region30: #{custom-call.23} parent=27 // loop_header
              %s75 = sphi 0, %s79
              %p76 = scmp.ge.s32.totalorder %s75, 1
              %s80 = sphi %s65, %s65
              %s81 = sphi %s58, %s58
            $region31: #{custom-call.23} parent=27 // loop_header_branch
              %78 = sbr.rel (%p76) target = $region35
            $region32: #{custom-call.23} parent=27 // loop_body
              %v82 = vld [vmem:[%s80] sm:%s73]
              %83 = vst [vmem:[%s81] sm:%s73] %v82
            $region33: #{custom-call.23} parent=27 // loop_footer
              %s79 = sadd.s32 1, %s75
            $region34: #{custom-call.23} parent=27 // loop_footer_branch
              %74 = sbr.rel target = $region30
            $region35: #{custom-call.23} parent=27 // loop_exit
              _
          $region28: #{custom-call.23} parent=19 // pred_fallthru
            _
        $region20: #{custom-call.23} parent=15 // pred_fallthru
          _
        %98 = vnop
      $region16: #{custom-call.23} parent=5 // pred_fallthru
        _
      %p99 = scmp.le.s32.totalorder 1, %s3
      %p100 = scmp.lt.s32.totalorder %s3, 5
      %p101 = pnand %p99, %p100
      %p102 = pneg %p101
      // Predicated region
      $region47: #{custom-call.23} parent=5 // pred_check
        _
      $region48: #{custom-call.23} parent=5 // pred_check_branch
        %104 = sbr.rel (%p101) target = $region50
      $region49: #{custom-call.23} parent=5 // pred_region
        #allocation4 [shape = 'f32[4,4]{1,0}', space=vmem, size = 0x1000, scoped, tag = 'rescaled input a']
        %s105 = ssub.s32 %s3, 1
        %s106 = sand.u32 %s8, 1
        %s107 = sand.u32 %s8, 1
        %s108 = smul.addr %s107, 4
        %s109 = scalar_lea.vmem [#allocation1], %s108
        %s110 = sand.u32 %s8, 1
        %s111 = sand.u32 %s8, 1
        %s112 = smul.addr %s111, 4
        %s113 = scalar_lea.vmem [#allocation1], %s112
        %s114 = sand.u32 %s8, 1
        %s115 = sand.u32 %s8, 1
        %s116 = smul.addr %s115, 4
        %s117 = scalar_lea.vmem [#allocation3], %s116
        %s119 = ssub.s32 16, 1
        %v120 = vld [vmem:[%s113] sm:%s119]
        %121 = vst [vmem:[#allocation0] sm:%s119] %v120
        %v122 = vlaneseq
        %v123 = vand.u32 %v122, 127
        %vm124 = vcmp.lt.s32.totalorder %v123, 4
        %v125 = vlaneseq
        %v126 = vshrl.u32 %v125, 7
        %vm128 = vcmp.eq.s32.totalorder %v126, %v123
        %v129 = vld [vmem:[#allocation0] sm:$0xff]
        %v130 = vsel %vm128, %v129, 0.0
        %131 = vadd.xlane.f32.xlu0 %v130
        %v132 = vpop.xlane.xlu0 %131
        %vm133 = vcmp.le.s32.totalorder %v126, %v123
        %vm134 = vmand %vm133, %vm124
        %v135 = vsel %vm134, %v129, 0.0
        %v136 = vrcp.pop %v132
        %v137 = vmul.f32 %v132, %v136
        %v138 = vsub.f32 1.0, %v137
        %v139 = vmul.f32 %v136, %v138
        %v140 = vadd.f32 %v136, %v139
        %vm141 = vweird.f32 %v132
        %vm142 = vweird.f32 %v136
        %vm143 = vmor %vm141, %vm142
        %v144 = vsel %vm143, %v136, %v140
        %v145 = vand.u32 2147483647, %v132
        %vm146 = vcmp.eq.f32.partialorder %v145, 8.507059e+37
        %v147 = vand.u32 %v132, 2147483648
        %v148 = vor.u32 1.1754944e-38, %v147
        %v149 = vsel %vm146, %v148, %v144
        %v150 = vmul.f32 %v135, %v149
        %151 = vst [vmem:[#allocation4] sm:$0xff] %v150
        %v152 = vlaneseq
        %v153 = vand.u32 %v152, 127
        %v154 = vlaneseq
        %v155 = vshrl.u32 %v154, 7
        %vm157 = vcmp.eq.s32.totalorder %v153, %v155
        %v158 = vlaneseq
        %v159 = vand.u32 %v158, 127
        %vm160 = vcmp.eq.s32.totalorder %v159, 3
        %v161 = vsel %vm160, 1.0, -1.0
        %v162 = vsel %vm157, %v161, 0.0
        %s163 = scalar_lea.vmem [#allocation4], 2
        %v164 = vld [vmem:[%s163] ss:$0 sm:$0xff]
        %v165 = vxor.u32 %v164, 2147483648
        %v166 = vlaneseq
        %v167 = vand.u32 %v166, 127
        %vm168 = vcmp.eq.s32.totalorder %v167, 2
        %v169 = vmul.f32 %v165, %v162
        %170 = vadd.xlane.f32.xlu0 %v169
        %v171 = vpop.xlane.xlu0 %170
        %v172 = vsel %vm168, %v171, %v162
        %s173 = scalar_lea.vmem [#allocation4], 1
        %v174 = vld [vmem:[%s173] ss:$0 sm:$0xff]
        %v175 = vxor.u32 %v174, 2147483648
        %v176 = vlaneseq
        %v177 = vand.u32 %v176, 127
        %vm178 = vcmp.eq.s32.totalorder %v177, 1
        %v179 = vmul.f32 %v175, %v172
        %180 = vadd.xlane.f32.xlu0 %v179
        %v181 = vpop.xlane.xlu0 %180
        %v182 = vsel %vm178, %v181, %v172
        %v183 = vld [vmem:[#allocation4] ss:$0 sm:$0xff]
        %v184 = vxor.u32 %v183, 2147483648
        %v185 = vlaneseq
        %v186 = vand.u32 %v185, 127
        %vm187 = vcmp.eq.s32.totalorder %v186, 0
        %v188 = vmul.f32 %v184, %v182
        %189 = vadd.xlane.f32.xlu0 %v188
        %v190 = vpop.xlane.xlu0 %189
        %v191 = vsel %vm187, %v190, %v182
        %v192 = vrcp.pop %v132
        %v193 = vmul.f32 %v132, %v192
        %v194 = vsub.f32 1.0, %v193
        %v195 = vmul.f32 %v192, %v194
        %v196 = vadd.f32 %v192, %v195
        %vm197 = vweird.f32 %v132
        %vm198 = vweird.f32 %v192
        %vm199 = vmor %vm197, %vm198
        %v200 = vsel %vm199, %v192, %v196
        %v201 = vand.u32 2147483647, %v132
        %vm202 = vcmp.eq.f32.partialorder %v201, 8.507059e+37
        %v203 = vand.u32 %v132, 2147483648
        %v204 = vor.u32 1.1754944e-38, %v203
        %v205 = vsel %vm202, %v204, %v200
        %v206 = vmul.f32 %v191, %v205
        %vm207 = vweird.f32 %v132
        %v208 = vsel %vm207, %v191, %v206
        %209 = vst [vmem:[#allocation2] sm:$0xff] %v208
        %s211 = ssub.s32 16, 1
        %v212 = vld [vmem:[#allocation2] sm:%s211]
        %s214 = ssub.s32 16, 1
        %215 = vst [vmem:[%s117] sm:%s214] %v212
        %s216 = sand.u32 %s8, 1
        %s217 = sand.u32 %s8, 1
        %s218 = smul.addr %s217, 4
        %s219 = scalar_lea.vmem [#allocation3], %s218
        %s220 = sadd.s32 %s19, %s18
        %s221 = sadd.s32 %s220, %s17
        %s222 = sadd.s32 %s221, %s16
        %s223 = smul.addr %s15, 2
        %s224 = sadd.s32 %s222, %s223
        %s225 = smul.addr %s224, 4
        %s226 = scalar_lea.vmem %s1, %s225
        // Predicated region
        $region51: #{custom-call.23} parent=49 // pred_check
          _
        $region52: #{custom-call.23} parent=49 // pred_check_branch
          %228 = sbr.rel (0) target = $region54
        $region53: #{custom-call.23} parent=49 // pred_region
          // Predicated region
          $region55: #{custom-call.23} parent=53 // pred_check
            _
          $region56: #{custom-call.23} parent=53 // pred_check_branch
            %230 = sbr.rel target = $region58
          $region57: #{custom-call.23} parent=53 // pred_region
            // Predicated region
            $region70: #{custom-call.23} parent=57 // pred_check
              _
            $region71: #{custom-call.23} parent=57 // pred_check_branch
              %246 = sbr.rel (0) target = $region73
            $region72: #{custom-call.23} parent=57 // pred_region
              %s248 = ssub.s32 16, 1
              loop: start=0, step=1, limit=1
              $region74: #{custom-call.23} parent=72 // loop_pre_header
                _
              $region75: #{custom-call.23} parent=72 // loop_header
                %s250 = sphi 0, %s254
                %p251 = scmp.ge.s32.totalorder %s250, 1
                %s255 = sphi %s219, %s219
                %s256 = sphi %s226, %s226
              $region76: #{custom-call.23} parent=72 // loop_header_branch
                %253 = sbr.rel (%p251) target = $region80
              $region77: #{custom-call.23} parent=72 // loop_body
                %v257 = vld [vmem:[%s255] sm:%s248]
                %258 = vst [vmem:[%s256] sm:%s248] %v257
              $region78: #{custom-call.23} parent=72 // loop_footer
                %s254 = sadd.s32 1, %s250
              $region79: #{custom-call.23} parent=72 // loop_footer_branch
                %249 = sbr.rel target = $region75
              $region80: #{custom-call.23} parent=72 // loop_exit
                _
            $region73: #{custom-call.23} parent=57 // pred_fallthru
              _
          $region58: #{custom-call.23} parent=53 // pred_fallthru
            _
          // Predicated region
          $region59: #{custom-call.23} parent=53 // pred_check
            _
          $region60: #{custom-call.23} parent=53 // pred_check_branch
            %232 = sbr.rel (0) target = $region62
          $region61: #{custom-call.23} parent=53 // pred_region
            %s234 = ssub.s32 16, 1
            loop: start=0, step=1, limit=1
            $region63: #{custom-call.23} parent=61 // loop_pre_header
              _
            $region64: #{custom-call.23} parent=61 // loop_header
              %s236 = sphi 0, %s240
              %p237 = scmp.ge.s32.totalorder %s236, 1
              %s241 = sphi %s219, %s219
              %s242 = sphi %s226, %s226
            $region65: #{custom-call.23} parent=61 // loop_header_branch
              %239 = sbr.rel (%p237) target = $region69
            $region66: #{custom-call.23} parent=61 // loop_body
              %v243 = vld [vmem:[%s241] sm:%s234]
              %244 = vst [vmem:[%s242] sm:%s234] %v243
            $region67: #{custom-call.23} parent=61 // loop_footer
              %s240 = sadd.s32 1, %s236
            $region68: #{custom-call.23} parent=61 // loop_footer_branch
              %235 = sbr.rel target = $region64
            $region69: #{custom-call.23} parent=61 // loop_exit
              _
          $region62: #{custom-call.23} parent=53 // pred_fallthru
            _
        $region54: #{custom-call.23} parent=49 // pred_fallthru
          _
        %259 = vnop
      $region50: #{custom-call.23} parent=5 // pred_fallthru
        _
      %p260 = scmp.le.s32.totalorder 2, %s3
      // Predicated region
      $region81: #{custom-call.23} parent=5 // pred_check
        %p261 = pneg %p260
      $region82: #{custom-call.23} parent=5 // pred_check_branch
        %263 = sbr.rel (%p261) target = $region84
      $region83: #{custom-call.23} parent=5 // pred_region
        %s264 = ssub.s32 %s3, 2
        %s265 = sand.u32 %s9, 1
        %s266 = sand.u32 %s9, 1
        %s267 = smul.addr %s266, 4
        %s268 = scalar_lea.vmem [#allocation3], %s267
      $region84: #{custom-call.23} parent=5 // pred_fallthru
        _
    $region6: #{custom-call.23} parent=1 // loop_footer
      %s7 = sadd.s32 1, %s3
    $region7: #{custom-call.23} parent=1 // loop_footer_branch
      %2 = sbr.rel target = $region3
    $region8: #{custom-call.23} parent=1 // loop_exit
      _

// kernel: custom-call.25
$region0: #{custom-call.25}
  %s0 = inlined_call_operand.vmem [shape: f32[2,2,3,3], index: 0, kind: input, shape index: {}]
  %s1 = inlined_call_operand.vmem [shape: f32[2,2,3,3], index: 1, kind: output, shape index: {0}]
  %s2 = inlined_call_operand.hbm [shape: s32[2,2,3], index: 2, kind: output, shape index: {1}]
  %s3 = inlined_call_operand.vmem [shape: s32[2,2,3], index: 3, kind: output, shape index: {2}]
  %4 = xla_tuple %s1, %s2, %s3
  $region1: #{custom-call.25} parent=0
    #allocation0 [shape = 'u8[4096]{0}', space=vmem, size = 0x1000, scoped, tag = 'operand span for operand 0']
    #allocation1 [shape = 'u8[4096]{0}', space=vmem, size = 0x1000, scoped, tag = 'packed  for operand 0']
    #allocation2 [shape = 'u8[4096]{0}', space=vmem, size = 0x1000, scoped, tag = 'operand span for operand 1']
    #allocation3 [shape = 'u8[4096]{0}', space=vmem, size = 0x1000, scoped, tag = 'packed  for operand 1']
    #allocation4 [shape = 'u8[4096]{0}', space=vmem, size = 0x1000, scoped, tag = 'operand span for operand 2']
    #allocation5 [shape = 'u8[2048]{0}', space=vmem, size = 0x800, scoped, tag = 'packed  for operand 2']
    #allocation6 [shape = 's32[2]{0}', space=sflag, size = 0x8, scoped, tag = 'scoped memory for custom-call.25']
    #allocation7 [shape = 'u8[4096]{0}', space=vmem, size = 0x1000, scoped, tag = 'operand span for operand 3']
    #allocation8 [shape = 'u8[2048]{0}', space=vmem, size = 0x800, scoped, tag = 'packed  for operand 3']
    %5 = vsyncpa [#allocation6], 0
    %s6 = scalar_lea.sflag [#allocation6], 1
    %7 = vsyncpa %s6, 0
    loop: start=0, step=1, limit=6
    $region2: #{custom-call.25} parent=1 // loop_pre_header
      _
    $region3: #{custom-call.25} parent=1 // loop_header
      %s9 = sphi 0, %s13
      %p10 = scmp.ge.s32.totalorder %s9, 6
      %s16 = sphi 0, %s28
      %s17 = sphi 0, %s24
      %s18 = sphi 0, %s16
      %s19 = sphi 0, %s17
      %s20 = sphi 0, %s18
      %s21 = sphi 0, %s19
      %s35 = sphi 0, %s37
      %s38 = sphi 0, %s35
      %s39 = sphi 0, %s38
      %s55 = sphi 0, %s39
      %s65 = sphi 0, %s67
      %s68 = sphi 0, %s65
      %s69 = sphi 0, %s68
      %s85 = sphi 0, %s69
    $region4: #{custom-call.25} parent=1 // loop_header_branch
      %12 = sbr.rel (%p10) target = $region8
    $region5: #{custom-call.25} parent=1 // loop_body
      %s14 = ssub.s32 %s9, 1
      %s15 = ssub.s32 %s9, 2
      %s22 = sadd.s32 1, %s17
      %p23 = scmp.ge.s32.totalorder %s22, 2
      %s24 = scalar_select %p23, 0, %s22
      %s25 = sadd.s32 1, %s16
      %s26 = scalar_select %p23, %s25, %s16
      %p27 = scmp.ge.s32.totalorder %s26, 2
      %s28 = scalar_select %p27, 0, %s26
      %s29 = sshrl.u32 %s17, 3
      %s30 = sshrl.u32 %s24, 3
      %s31 = ssub.s32 %s16, %s28
      %s32 = ssub.s32 %s29, %s30
      %s33 = sor.u32 %s31, %s32
      %p34 = scmp.eq.s32.totalorder %s33, 0
      %s36 = sadd.s32 %s35, 1
      %s37 = scalar_select %p34, %s35, %s36
      %p40 = pneg %p34
      %p41 = scmp.eq.s32.totalorder %s9, 3
      %p42 = por %p40, %p41
      %p43 = scmp.ne.s32.totalorder %s35, %s38
      %p44 = scmp.eq.s32.totalorder %s9, 0
      %p45 = por %p43, %p44
      %p46 = scmp.ne.s32.totalorder %s35, %s38
      %p47 = scmp.eq.s32.totalorder %s14, 3
      %p48 = por %p46, %p47
      %p49 = scmp.ne.s32.totalorder %s38, %s39
      %p50 = scmp.eq.s32.totalorder %s14, 0
      %p51 = por %p49, %p50
      %p52 = scmp.ne.s32.totalorder %s38, %s39
      %p53 = scmp.eq.s32.totalorder %s15, 3
      %p54 = por %p52, %p53
      %p56 = scmp.ne.s32.totalorder %s39, %s55
      %p57 = scmp.eq.s32.totalorder %s15, 0
      %p58 = por %p56, %p57
      %s59 = sshrl.u32 %s17, 3
      %s60 = sshrl.u32 %s24, 3
      %s61 = ssub.s32 %s16, %s28
      %s62 = ssub.s32 %s59, %s60
      %s63 = sor.u32 %s61, %s62
      %p64 = scmp.eq.s32.totalorder %s63, 0
      %s66 = sadd.s32 %s65, 1
      %s67 = scalar_select %p64, %s65, %s66
      %p70 = pneg %p64
      %p71 = scmp.eq.s32.totalorder %s9, 3
      %p72 = por %p70, %p71
      %p73 = scmp.ne.s32.totalorder %s65, %s68
      %p74 = scmp.eq.s32.totalorder %s9, 0
      %p75 = por %p73, %p74
      %p76 = scmp.ne.s32.totalorder %s65, %s68
      %p77 = scmp.eq.s32.totalorder %s14, 3
      %p78 = por %p76, %p77
      %p79 = scmp.ne.s32.totalorder %s68, %s69
      %p80 = scmp.eq.s32.totalorder %s14, 0
      %p81 = por %p79, %p80
      %p82 = scmp.ne.s32.totalorder %s68, %s69
      %p83 = scmp.eq.s32.totalorder %s15, 3
      %p84 = por %p82, %p83
      %p86 = scmp.ne.s32.totalorder %s69, %s85
      %p87 = scmp.eq.s32.totalorder %s15, 0
      %p88 = por %p86, %p87
      %p89 = scmp.le.s32.totalorder 1, %s9
      %p90 = scmp.lt.s32.totalorder %s9, 5
      %p91 = pnand %p89, %p90
      %p92 = pneg %p91
      // Predicated region
      $region9: #{custom-call.25} parent=5 // pred_check
        _
      $region10: #{custom-call.25} parent=5 // pred_check_branch
        %94 = sbr.rel (%p91) target = $region12
      $region11: #{custom-call.25} parent=5 // pred_region
        %s95 = ssub.s32 %s9, 1
      $region12: #{custom-call.25} parent=5 // pred_fallthru
        _
      %p96 = scmp.lt.s32.totalorder %s9, 4
      // Predicated region
      $region13: #{custom-call.25} parent=5 // pred_check
        %p97 = pneg %p96
      $region14: #{custom-call.25} parent=5 // pred_check_branch
        %99 = sbr.rel (%p97) target = $region16
      $region15: #{custom-call.25} parent=5 // pred_region
        %s100 = sand.u32 %s9, 1
        %s101 = sand.u32 %s9, 1
        %s102 = smul.addr %s101, 4
        %s103 = scalar_lea.vmem [#allocation1], %s102
        %s104 = smul.addr %s16, 2
        %s105 = sadd.s32 %s17, %s104
        %s106 = smul.addr %s105, 4
        %s107 = scalar_lea.vmem %s0, %s106
        // Predicated region
        $region17: #{custom-call.25} parent=15 // pred_check
          _
        $region18: #{custom-call.25} parent=15 // pred_check_branch
          %109 = sbr.rel (0) target = $region20
        $region19: #{custom-call.25} parent=15 // pred_region
          // Predicated region
          $region21: #{custom-call.25} parent=19 // pred_check
            _
          $region22: #{custom-call.25} parent=19 // pred_check_branch
            %111 = sbr.rel target = $region24
          $region23: #{custom-call.25} parent=19 // pred_region
            // Predicated region
            $region36: #{custom-call.25} parent=23 // pred_check
              _
            $region37: #{custom-call.25} parent=23 // pred_check_branch
              %127 = sbr.rel (0) target = $region39
            $region38: #{custom-call.25} parent=23 // pred_region
              %s129 = ssub.s32 16, 1
              loop: start=0, step=1, limit=1
              $region40: #{custom-call.25} parent=38 // loop_pre_header
                _
              $region41: #{custom-call.25} parent=38 // loop_header
                %s131 = sphi 0, %s135
                %p132 = scmp.ge.s32.totalorder %s131, 1
                %s136 = sphi %s107, %s107
                %s137 = sphi %s103, %s103
              $region42: #{custom-call.25} parent=38 // loop_header_branch
                %134 = sbr.rel (%p132) target = $region46
              $region43: #{custom-call.25} parent=38 // loop_body
                %v138 = vld [vmem:[%s136] sm:%s129]
                %139 = vst [vmem:[%s137] sm:%s129] %v138
              $region44: #{custom-call.25} parent=38 // loop_footer
                %s135 = sadd.s32 1, %s131
              $region45: #{custom-call.25} parent=38 // loop_footer_branch
                %130 = sbr.rel target = $region41
              $region46: #{custom-call.25} parent=38 // loop_exit
                _
            $region39: #{custom-call.25} parent=23 // pred_fallthru
              _
          $region24: #{custom-call.25} parent=19 // pred_fallthru
            _
          // Predicated region
          $region25: #{custom-call.25} parent=19 // pred_check
            _
          $region26: #{custom-call.25} parent=19 // pred_check_branch
            %113 = sbr.rel (0) target = $region28
          $region27: #{custom-call.25} parent=19 // pred_region
            %s115 = ssub.s32 16, 1
            loop: start=0, step=1, limit=1
            $region29: #{custom-call.25} parent=27 // loop_pre_header
              _
            $region30: #{custom-call.25} parent=27 // loop_header
              %s117 = sphi 0, %s121
              %p118 = scmp.ge.s32.totalorder %s117, 1
              %s122 = sphi %s107, %s107
              %s123 = sphi %s103, %s103
            $region31: #{custom-call.25} parent=27 // loop_header_branch
              %120 = sbr.rel (%p118) target = $region35
            $region32: #{custom-call.25} parent=27 // loop_body
              %v124 = vld [vmem:[%s122] sm:%s115]
              %125 = vst [vmem:[%s123] sm:%s115] %v124
            $region33: #{custom-call.25} parent=27 // loop_footer
              %s121 = sadd.s32 1, %s117
            $region34: #{custom-call.25} parent=27 // loop_footer_branch
              %116 = sbr.rel target = $region30
            $region35: #{custom-call.25} parent=27 // loop_exit
              _
          $region28: #{custom-call.25} parent=19 // pred_fallthru
            _
        $region20: #{custom-call.25} parent=15 // pred_fallthru
          _
        %140 = vnop
      $region16: #{custom-call.25} parent=5 // pred_fallthru
        _
      %p141 = scmp.le.s32.totalorder 1, %s9
      %p142 = scmp.lt.s32.totalorder %s9, 5
      %p143 = pnand %p141, %p142
      %p144 = pneg %p143
      // Predicated region
      $region47: #{custom-call.25} parent=5 // pred_check
        _
      $region48: #{custom-call.25} parent=5 // pred_check_branch
        %146 = sbr.rel (%p143) target = $region50
      $region49: #{custom-call.25} parent=5 // pred_region
        #allocation9 [shape = 's32[3,128]{1,0}', space=vmem, size = 0x1000, scoped, tag = 'scratch for permutations']
        %s147 = ssub.s32 %s9, 1
        %s148 = sand.u32 %s14, 1
        %s149 = sand.u32 %s14, 1
        %s150 = smul.addr %s149, 4
        %s151 = scalar_lea.vmem [#allocation1], %s150
        %s152 = sand.u32 %s14, 1
        %s153 = sand.u32 %s14, 1
        %s154 = smul.addr %s153, 4
        %s155 = scalar_lea.vmem [#allocation1], %s154
        %s156 = sand.u32 %s14, 1
        %s157 = sand.u32 %s14, 1
        %s158 = smul.addr %s157, 4
        %s159 = scalar_lea.vmem [#allocation3], %s158
        %p160 = pneg %p51
        %p161 = pneg %p48
        %s162 = sand.u32 %s38, 1
        %s163 = scalar_lea.sflag [#allocation6], %s162
        %s164 = sand.u32 %s38, 1
        %s165 = smul.addr %s164, 2
        %s166 = scalar_lea.vmem [#allocation5], %s165
        %p167 = pneg %p81
        %p168 = pneg %p78
        %s169 = sand.u32 %s68, 1
        %s170 = sand.u32 %s68, 1
        %s171 = smul.addr %s170, 2
        %s172 = scalar_lea.vmem [#allocation8], %s171
        %s174 = ssub.s32 16, 1
        %v175 = vld [vmem:[%s155] sm:%s174]
        %176 = vst [vmem:[#allocation0] sm:%s174] %v175
        %s177 = sshrl.u32 %s19, 3
        %s178 = sshrl.u32 %s19, 3
        %v179 = vld [vmem:[#allocation0] sm:$0xff]
        %180 = vst [vmem:[#allocation2] sm:$0xff] %v179
        %s181 = sand.u32 %s19, 7
        %s182 = scalar_lea.vmem [#allocation4], %s181
        %s183 = sand.u32 %s19, 7
        %s184 = scalar_lea.vmem [#allocation7], %s183
        %185 = vst [vmem:[%s182] sm:$0x1] 0
        %v186 = vlaneseq
        %v187 = vshrl.u32 %v186, 7
        %v188 = vmov %v187
        %190 = vst [vmem:[#allocation9] sm:$0xff] %v188
        loop: start=0, step=1, limit=3
        $region52: #{custom-call.25} parent=49 // loop_pre_header
          _
        $region53: #{custom-call.25} parent=49 // loop_header
          %s192 = sphi 0, %s196
          %p193 = scmp.ge.s32.totalorder %s192, 3
        $region54: #{custom-call.25} parent=49 // loop_header_branch
          %195 = sbr.rel (%p193) target = $region58
        $region55: #{custom-call.25} parent=49 // loop_body
          %v197 = vstv %s192
          %v198 = vlaneseq
          %v199 = vshrl.u32 %v198, 7
          %v200 = vmov %v199
          %v201 = vld [vmem:[#allocation2] sm:$0xff]
          %v202 = vand.u32 2147483647, %v201
          %v204 = vstv %s192
          %vm205 = vcmp.ge.s32.totalorder %v200, %v204
          %vm206 = vcmp.lt.s32.totalorder %v200, 3
          %vm207 = vmand %vm205, %vm206
          %vm208 = vcmp.lt.f32.partialorder -inf, %v202
          %vm209 = vmand %vm207, %vm208
          %v210 = vsel %vm209, %v200, %v197
          %v211 = vsel %vm209, %v202, -inf
          %v212 = vrot.slane %v211, 1
          %v213 = vrot.slane %v210, 1
          %vm214 = vcmp.ge.f32.partialorder %v212, %v211
          %v215 = vsel %vm214, %v212, %v211
          %v216 = vsel %vm214, %v213, %v210
          %v217 = vrot.slane %v212, 1
          %v218 = vrot.slane %v213, 1
          %vm219 = vcmp.ge.f32.partialorder %v217, %v215
          %v220 = vsel %vm219, %v217, %v215
          %v221 = vsel %vm219, %v218, %v216
          %v222 = vrot.slane %v217, 1
          %v223 = vrot.slane %v218, 1
          %vm224 = vcmp.ge.f32.partialorder %v222, %v220
          %v225 = vsel %vm224, %v222, %v220
          %v226 = vsel %vm224, %v223, %v221
          %v227 = vrot.slane %v222, 1
          %v228 = vrot.slane %v223, 1
          %vm229 = vcmp.ge.f32.partialorder %v227, %v225
          %v230 = vsel %vm229, %v227, %v225
          %v231 = vsel %vm229, %v228, %v226
          %v232 = vrot.slane %v227, 1
          %v233 = vrot.slane %v228, 1
          %vm234 = vcmp.ge.f32.partialorder %v232, %v230
          %v235 = vsel %vm234, %v232, %v230
          %v236 = vsel %vm234, %v233, %v231
          %v237 = vrot.slane %v232, 1
          %v238 = vrot.slane %v233, 1
          %vm239 = vcmp.ge.f32.partialorder %v237, %v235
          %v240 = vsel %vm239, %v237, %v235
          %v241 = vsel %vm239, %v238, %v236
          %v242 = vrot.slane %v237, 1
          %v243 = vrot.slane %v238, 1
          %vm244 = vcmp.ge.f32.partialorder %v242, %v240
          %v245 = vsel %vm244, %v242, %v240
          %v246 = vsel %vm244, %v243, %v241
          %s247 = ssub.s32 128, %s192
          %248 = vrot.lane.b32.xlu0 %v246, %s247
          %v249 = vpop.permute.xlu0 %248
          %s250 = vtos %v249
          %v251 = vstv %s192
          %v252 = vlaneseq
          %v253 = vand.u32 %v252, 127
          %vm254 = vcmp.eq.s32.totalorder %v253, %v251
          %v255 = vstv %s250
          %v256 = vld [vmem:[%s182] ss:$0 sm:$0xff]
          %v257 = vsel %vm254, %v255, %v256
          %258 = vst [vmem:[%s182] sm:$0x1] %v257
          %s259 = scalar_lea.vmem [#allocation2], %s192
          %s260 = scalar_lea.vmem [#allocation2], %s250
          %v261 = vld [vmem:[%s259] ss:$0 sm:$0xff]
          %v262 = vld [vmem:[%s260] ss:$0 sm:$0xff]
          %263 = vst [vmem:[%s260] sm:$0x1] %v261
          %264 = vst [vmem:[%s259] sm:$0x1] %v262
          %s265 = scalar_lea.vmem [#allocation9], %s192
          %s266 = scalar_lea.vmem [#allocation9], %s250
          %v267 = vld [vmem:[%s265] ss:$0 sm:$0xff]
          %v268 = vld [vmem:[%s266] ss:$0 sm:$0xff]
          %269 = vst [vmem:[%s266] sm:$0x1] %v267
          %270 = vst [vmem:[%s265] sm:$0x1] %v268
          %vm271 = vcmp.ne.f32.partialorder %v262, 0.0
          %vm272 = vmand %vm254, %vm271
          %v273 = vsel %vm272, %v262, 1.0
          %v274 = vlaneseq
          %v275 = vand.u32 %v274, 127
          %v276 = vstv %s192
          %vm277 = vcmp.gt.s32.totalorder %v275, %v276
          %v278 = vsel %vm277, %v262, 0.0
          %v279 = vlaneseq
          %v280 = vshrl.u32 %v279, 7
          %v281 = vmov %v280
          %v282 = vld [vmem:[#allocation2] sm:$0xff]
          %v284 = vstv %s192
          %vm285 = vcmp.gt.s32.totalorder %v281, %v284
          %v286 = vsel %vm285, %v273, 1.0
          %v287 = vrcp.pop %v286
          %v288 = vmul.f32 %v286, %v287
          %v289 = vsub.f32 1.0, %v288
          %v290 = vmul.f32 %v287, %v289
          %v291 = vadd.f32 %v287, %v290
          %vm292 = vweird.f32 %v286
          %vm293 = vweird.f32 %v287
          %vm294 = vmor %vm292, %vm293
          %v295 = vsel %vm294, %v287, %v291
          %v296 = vand.u32 2147483647, %v286
          %vm297 = vcmp.eq.f32.partialorder %v296, 8.507059e+37
          %v298 = vand.u32 %v286, 2147483648
          %v299 = vor.u32 1.1754944e-38, %v298
          %v300 = vsel %vm297, %v299, %v295
          %v301 = vmul.f32 %v282, %v300
          %vm302 = vmand %vm285, %vm254
          %v303 = vsel %vm302, %v301, 0.0
          %304 = vadd.xlane.f32.xlu0 %v303
          %v305 = vpop.xlane.xlu0 %304
          %v306 = vmul.f32 %v305, %v278
          %v307 = vsub.f32 %v301, %v306
          %308 = vst [vmem:[#allocation2] sm:$0xff] %v307
        $region56: #{custom-call.25} parent=49 // loop_footer
          %s196 = sadd.s32 1, %s192
        $region57: #{custom-call.25} parent=49 // loop_footer_branch
          %191 = sbr.rel target = $region53
        $region58: #{custom-call.25} parent=49 // loop_exit
          _
        %v309 = vld [vmem:[#allocation9] sm:$0xff]
        %s310 = scalar_lea.vmem [#allocation9], 8
        %s311 = scalar_lea.vmem [#allocation9], 16
        %s312 = scalar_lea.vmem [#allocation9], 24
        %s313 = scalar_lea.vmem [#allocation9], 32
        %s314 = scalar_lea.vmem [#allocation9], 40
        %s315 = scalar_lea.vmem [#allocation9], 48
        %s316 = scalar_lea.vmem [#allocation9], 56
        %s317 = scalar_lea.vmem [#allocation9], 64
        %s318 = scalar_lea.vmem [#allocation9], 72
        %s319 = scalar_lea.vmem [#allocation9], 80
        %s320 = scalar_lea.vmem [#allocation9], 88
        %s321 = scalar_lea.vmem [#allocation9], 96
        %s322 = scalar_lea.vmem [#allocation9], 104
        %s323 = scalar_lea.vmem [#allocation9], 112
        %s324 = scalar_lea.vmem [#allocation9], 120
        %325 = vxpose.xlu0.b32.start [1/16] %v309, 128
        %326 = vxpose.xlu0.b32.cont [2/16] 0, 128
        %327 = vxpose.xlu0.b32.cont [3/16] 0, 128
        %328 = vxpose.xlu0.b32.cont [4/16] 0, 128
        %329 = vxpose.xlu0.b32.cont [5/16] 0, 128
        %330 = vxpose.xlu0.b32.cont [6/16] 0, 128
        %331 = vxpose.xlu0.b32.cont [7/16] 0, 128
        %332 = vxpose.xlu0.b32.cont [8/16] 0, 128
        %333 = vxpose.xlu0.b32.cont [9/16] 0, 128
        %334 = vxpose.xlu0.b32.cont [10/16] 0, 128
        %335 = vxpose.xlu0.b32.cont [11/16] 0, 128
        %336 = vxpose.xlu0.b32.cont [12/16] 0, 128
        %337 = vxpose.xlu0.b32.cont [13/16] 0, 128
        %338 = vxpose.xlu0.b32.cont [14/16] 0, 128
        %339 = vxpose.xlu0.b32.cont [15/16] 0, 128
        %340 = vxpose.xlu0.b32.end [16/16] 0, 128
        %v341 = vpop.trf.xlu0
        %v342 = vpop.trf.xlu0
        %v343 = vpop.trf.xlu0
        %v344 = vpop.trf.xlu0
        %v345 = vpop.trf.xlu0
        %v346 = vpop.trf.xlu0
        %v347 = vpop.trf.xlu0
        %v348 = vpop.trf.xlu0
        %v349 = vpop.trf.xlu0
        %v350 = vpop.trf.xlu0
        %v351 = vpop.trf.xlu0
        %v352 = vpop.trf.xlu0
        %v353 = vpop.trf.xlu0
        %v354 = vpop.trf.xlu0
        %v355 = vpop.trf.xlu0
        %v356 = vpop.trf.xlu0
        %357 = vst [vmem:[%s184] sm:$0x1] %v341
        %s359 = ssub.s32 16, 1
        %v360 = vld [vmem:[#allocation2] sm:%s359]
        %s362 = ssub.s32 16, 1
        %363 = vst [vmem:[%s159] sm:%s362] %v360
        %s365 = ssub.s32 4, 1
        %v366 = vld [vmem:[#allocation4] sm:%s365]
        %s368 = ssub.s32 4, 1
        %369 = vst [vmem:[%s166] sm:%s368] %v366
        %s371 = ssub.s32 4, 1
        %v372 = vld [vmem:[#allocation7] sm:%s371]
        %s374 = ssub.s32 4, 1
        %375 = vst [vmem:[%s172] sm:%s374] %v372
        %s376 = sand.u32 %s14, 1
        %s377 = sand.u32 %s14, 1
        %s378 = smul.addr %s377, 4
        %s379 = scalar_lea.vmem [#allocation3], %s378
        %s380 = sand.u32 %s38, 1
        %s381 = scalar_lea.sflag [#allocation6], %s380
        %s382 = sand.u32 %s38, 1
        %s383 = smul.addr %s382, 2
        %s384 = scalar_lea.vmem [#allocation5], %s383
        %s385 = sand.u32 %s68, 1
        %s386 = sand.u32 %s68, 1
        %s387 = smul.addr %s386, 2
        %s388 = scalar_lea.vmem [#allocation8], %s387
        %s389 = smul.addr %s18, 2
        %s390 = sadd.s32 %s19, %s389
        %s391 = smul.addr %s390, 4
        %s392 = scalar_lea.vmem %s1, %s391
        // Predicated region
        $region59: #{custom-call.25} parent=49 // pred_check
          _
        $region60: #{custom-call.25} parent=49 // pred_check_branch
          %394 = sbr.rel (0) target = $region62
        $region61: #{custom-call.25} parent=49 // pred_region
          // Predicated region
          $region63: #{custom-call.25} parent=61 // pred_check
            _
          $region64: #{custom-call.25} parent=61 // pred_check_branch
            %396 = sbr.rel target = $region66
          $region65: #{custom-call.25} parent=61 // pred_region
            // Predicated region
            $region78: #{custom-call.25} parent=65 // pred_check
              _
            $region79: #{custom-call.25} parent=65 // pred_check_branch
              %412 = sbr.rel (0) target = $region81
            $region80: #{custom-call.25} parent=65 // pred_region
              %s414 = ssub.s32 16, 1
              loop: start=0, step=1, limit=1
              $region82: #{custom-call.25} parent=80 // loop_pre_header
                _
              $region83: #{custom-call.25} parent=80 // loop_header
                %s416 = sphi 0, %s420
                %p417 = scmp.ge.s32.totalorder %s416, 1
                %s421 = sphi %s379, %s379
                %s422 = sphi %s392, %s392
              $region84: #{custom-call.25} parent=80 // loop_header_branch
                %419 = sbr.rel (%p417) target = $region88
              $region85: #{custom-call.25} parent=80 // loop_body
                %v423 = vld [vmem:[%s421] sm:%s414]
                %424 = vst [vmem:[%s422] sm:%s414] %v423
              $region86: #{custom-call.25} parent=80 // loop_footer
                %s420 = sadd.s32 1, %s416
              $region87: #{custom-call.25} parent=80 // loop_footer_branch
                %415 = sbr.rel target = $region83
              $region88: #{custom-call.25} parent=80 // loop_exit
                _
            $region81: #{custom-call.25} parent=65 // pred_fallthru
              _
          $region66: #{custom-call.25} parent=61 // pred_fallthru
            _
          // Predicated region
          $region67: #{custom-call.25} parent=61 // pred_check
            _
          $region68: #{custom-call.25} parent=61 // pred_check_branch
            %398 = sbr.rel (0) target = $region70
          $region69: #{custom-call.25} parent=61 // pred_region
            %s400 = ssub.s32 16, 1
            loop: start=0, step=1, limit=1
            $region71: #{custom-call.25} parent=69 // loop_pre_header
              _
            $region72: #{custom-call.25} parent=69 // loop_header
              %s402 = sphi 0, %s406
              %p403 = scmp.ge.s32.totalorder %s402, 1
              %s407 = sphi %s379, %s379
              %s408 = sphi %s392, %s392
            $region73: #{custom-call.25} parent=69 // loop_header_branch
              %405 = sbr.rel (%p403) target = $region77
            $region74: #{custom-call.25} parent=69 // loop_body
              %v409 = vld [vmem:[%s407] sm:%s400]
              %410 = vst [vmem:[%s408] sm:%s400] %v409
            $region75: #{custom-call.25} parent=69 // loop_footer
              %s406 = sadd.s32 1, %s402
            $region76: #{custom-call.25} parent=69 // loop_footer_branch
              %401 = sbr.rel target = $region72
            $region77: #{custom-call.25} parent=69 // loop_exit
              _
          $region70: #{custom-call.25} parent=61 // pred_fallthru
            _
        $region62: #{custom-call.25} parent=49 // pred_fallthru
          _
        %425 = vnop
        // Predicated region
        $region89: #{custom-call.25} parent=49 // pred_check
          %p426 = pneg %p48
        $region90: #{custom-call.25} parent=49 // pred_check_branch
          %428 = sbr.rel (%p426) target = $region92
        $region91: #{custom-call.25} parent=49 // pred_region
          %s429 = sshrl.u32 %s19, 3
          %431 = vsyncadd %s381, 0
          %s432 = sadd.s32 %s429, %s18
          %s433 = smul.addr %s432, 2
          %s434 = scalar_lea.hbm %s2, %s433
          %s436 = sshll.u32 %s384, 4
          %s437 = int_to_ptr.vmem [resolvable:$true] %s436
          %s438 = sshll.u32 %s434, 4
          %s439 = int_to_ptr.hbm [resolvable:$true] %s438
          %441 = dma.vmem_to_hbm [thread:$0]  %s437, 32, %s439, %s381
        $region92: #{custom-call.25} parent=49 // pred_fallthru
          _
        // Predicated region
        $region93: #{custom-call.25} parent=49 // pred_check
          %p442 = pneg %p78
        $region94: #{custom-call.25} parent=49 // pred_check_branch
          %444 = sbr.rel (%p442) target = $region96
        $region95: #{custom-call.25} parent=49 // pred_region
          %s445 = sshrl.u32 %s19, 3
          %s446 = sadd.s32 %s445, %s18
          %s447 = smul.addr %s446, 2
          %s448 = scalar_lea.vmem %s3, %s447
          // Predicated region
          $region97: #{custom-call.25} parent=95 // pred_check
            _
          $region98: #{custom-call.25} parent=95 // pred_check_branch
            %450 = sbr.rel (0) target = $region100
          $region99: #{custom-call.25} parent=95 // pred_region
            // Predicated region
            $region101: #{custom-call.25} parent=99 // pred_check
              _
            $region102: #{custom-call.25} parent=99 // pred_check_branch
              %452 = sbr.rel target = $region104
            $region103: #{custom-call.25} parent=99 // pred_region
              // Predicated region
              $region116: #{custom-call.25} parent=103 // pred_check
                _
              $region117: #{custom-call.25} parent=103 // pred_check_branch
                %468 = sbr.rel (0) target = $region119
              $region118: #{custom-call.25} parent=103 // pred_region
                %s470 = ssub.s32 4, 1
                loop: start=0, step=1, limit=1
                $region120: #{custom-call.25} parent=118 // loop_pre_header
                  _
                $region121: #{custom-call.25} parent=118 // loop_header
                  %s472 = sphi 0, %s476
                  %p473 = scmp.ge.s32.totalorder %s472, 1
                  %s477 = sphi %s388, %s388
                  %s478 = sphi %s448, %s448
                $region122: #{custom-call.25} parent=118 // loop_header_branch
                  %475 = sbr.rel (%p473) target = $region126
                $region123: #{custom-call.25} parent=118 // loop_body
                  %v479 = vld [vmem:[%s477] sm:%s470]
                  %480 = vst [vmem:[%s478] sm:%s470] %v479
                $region124: #{custom-call.25} parent=118 // loop_footer
                  %s476 = sadd.s32 1, %s472
                $region125: #{custom-call.25} parent=118 // loop_footer_branch
                  %471 = sbr.rel target = $region121
                $region126: #{custom-call.25} parent=118 // loop_exit
                  _
              $region119: #{custom-call.25} parent=103 // pred_fallthru
                _
            $region104: #{custom-call.25} parent=99 // pred_fallthru
              _
            // Predicated region
            $region105: #{custom-call.25} parent=99 // pred_check
              _
            $region106: #{custom-call.25} parent=99 // pred_check_branch
              %454 = sbr.rel (0) target = $region108
            $region107: #{custom-call.25} parent=99 // pred_region
              %s456 = ssub.s32 4, 1
              loop: start=0, step=1, limit=1
              $region109: #{custom-call.25} parent=107 // loop_pre_header
                _
              $region110: #{custom-call.25} parent=107 // loop_header
                %s458 = sphi 0, %s462
                %p459 = scmp.ge.s32.totalorder %s458, 1
                %s463 = sphi %s388, %s388
                %s464 = sphi %s448, %s448
              $region111: #{custom-call.25} parent=107 // loop_header_branch
                %461 = sbr.rel (%p459) target = $region115
              $region112: #{custom-call.25} parent=107 // loop_body
                %v465 = vld [vmem:[%s463] sm:%s456]
                %466 = vst [vmem:[%s464] sm:%s456] %v465
              $region113: #{custom-call.25} parent=107 // loop_footer
                %s462 = sadd.s32 1, %s458
              $region114: #{custom-call.25} parent=107 // loop_footer_branch
                %457 = sbr.rel target = $region110
              $region115: #{custom-call.25} parent=107 // loop_exit
                _
            $region108: #{custom-call.25} parent=99 // pred_fallthru
              _
          $region100: #{custom-call.25} parent=95 // pred_fallthru
            _
          %481 = vnop
        $region96: #{custom-call.25} parent=49 // pred_fallthru
          _
      $region50: #{custom-call.25} parent=5 // pred_fallthru
        _
      %p482 = scmp.le.s32.totalorder 2, %s9
      // Predicated region
      $region127: #{custom-call.25} parent=5 // pred_check
        %p483 = pneg %p482
      $region128: #{custom-call.25} parent=5 // pred_check_branch
        %485 = sbr.rel (%p483) target = $region130
      $region129: #{custom-call.25} parent=5 // pred_region
        %s486 = ssub.s32 %s9, 2
        %s487 = sand.u32 %s15, 1
        %s488 = sand.u32 %s15, 1
        %s489 = smul.addr %s488, 4
        %s490 = scalar_lea.vmem [#allocation3], %s489
        // Predicated region
        $region131: #{custom-call.25} parent=129 // pred_check
          %p491 = pneg %p54
        $region132: #{custom-call.25} parent=129 // pred_check_branch
          %493 = sbr.rel (%p491) target = $region134
        $region133: #{custom-call.25} parent=129 // pred_region
          %s494 = sand.u32 %s39, 1
          %s495 = scalar_lea.sflag [#allocation6], %s494
          %s496 = sand.u32 %s39, 1
          %s497 = smul.addr %s496, 2
          %s498 = scalar_lea.vmem [#allocation5], %s497
          %500 = dma.done %s495, 32
        $region134: #{custom-call.25} parent=129 // pred_fallthru
          _
        // Predicated region
        $region135: #{custom-call.25} parent=129 // pred_check
          %p501 = pneg %p84
        $region136: #{custom-call.25} parent=129 // pred_check_branch
          %503 = sbr.rel (%p501) target = $region138
        $region137: #{custom-call.25} parent=129 // pred_region
          %s504 = sand.u32 %s69, 1
          %s505 = sand.u32 %s69, 1
          %s506 = smul.addr %s505, 2
          %s507 = scalar_lea.vmem [#allocation8], %s506
        $region138: #{custom-call.25} parent=129 // pred_fallthru
          _
      $region130: #{custom-call.25} parent=5 // pred_fallthru
        _
    $region6: #{custom-call.25} parent=1 // loop_footer
      %s13 = sadd.s32 1, %s9
    $region7: #{custom-call.25} parent=1 // loop_footer_branch
      %8 = sbr.rel target = $region3
    $region8: #{custom-call.25} parent=1 // loop_exit
      _
    %508 = vsyncpa [#allocation6], 1
    %s509 = scalar_lea.sflag [#allocation6], 1
    %510 = vsyncpa %s509, 1

// kernel: custom-call.27
$region0: #{custom-call.27}
  %s0 = inlined_call_operand.vmem [shape: f32[2,2,1,3,3], index: 0, kind: input, shape index: {}]
  %s1 = inlined_call_operand.vmem [shape: f32[2,2,1,3,3], index: 1, kind: output, shape index: {}]
  $region1: #{custom-call.27} parent=0
    #allocation0 [shape = 'u8[4096]{0}', space=vmem, size = 0x1000, scoped, tag = 'operand span for operand 0']
    #allocation1 [shape = 'u8[4096]{0}', space=vmem, size = 0x1000, scoped, tag = 'packed  for operand 0']
    #allocation2 [shape = 'u8[4096]{0}', space=vmem, size = 0x1000, scoped, tag = 'operand span for operand 1']
    #allocation3 [shape = 'u8[4096]{0}', space=vmem, size = 0x1000, scoped, tag = 'packed  for operand 1']
    loop: start=0, step=1, limit=6
    $region2: #{custom-call.27} parent=1 // loop_pre_header
      _
    $region3: #{custom-call.27} parent=1 // loop_header
      %s3 = sphi 0, %s7
      %p4 = scmp.ge.s32.totalorder %s3, 6
      %s10 = sphi 0, %s43
      %s11 = sphi 0, %s39
      %s12 = sphi 0, %s35
      %s13 = sphi 0, %s31
      %s14 = sphi 0, %s27
      %s15 = sphi 0, %s10
      %s16 = sphi 0, %s11
      %s17 = sphi 0, %s12
      %s18 = sphi 0, %s13
      %s19 = sphi 0, %s14
      %s20 = sphi 0, %s15
      %s21 = sphi 0, %s16
      %s22 = sphi 0, %s17
      %s23 = sphi 0, %s18
      %s24 = sphi 0, %s19
    $region4: #{custom-call.27} parent=1 // loop_header_branch
      %6 = sbr.rel (%p4) target = $region8
    $region5: #{custom-call.27} parent=1 // loop_body
      %s8 = ssub.s32 %s3, 1
      %s9 = ssub.s32 %s3, 2
      %s25 = sadd.s32 1, %s14
      %p26 = scmp.ge.s32.totalorder %s25, 1
      %s27 = scalar_select %p26, 0, %s25
      %s28 = sadd.s32 1, %s13
      %s29 = scalar_select %p26, %s28, %s13
      %p30 = scmp.ge.s32.totalorder %s29, 1
      %s31 = scalar_select %p30, 0, %s29
      %s32 = sadd.s32 1, %s12
      %s33 = scalar_select %p30, %s32, %s12
      %p34 = scmp.ge.s32.totalorder %s33, 1
      %s35 = scalar_select %p34, 0, %s33
      %s36 = sadd.s32 1, %s11
      %s37 = scalar_select %p34, %s36, %s11
      %p38 = scmp.ge.s32.totalorder %s37, 2
      %s39 = scalar_select %p38, 0, %s37
      %s40 = sadd.s32 1, %s10
      %s41 = scalar_select %p38, %s40, %s10
      %p42 = scmp.ge.s32.totalorder %s41, 2
      %s43 = scalar_select %p42, 0, %s41
      %p44 = scmp.le.s32.totalorder 1, %s3
      %p45 = scmp.lt.s32.totalorder %s3, 5
      %p46 = pnand %p44, %p45
      %p47 = pneg %p46
      // Predicated region
      $region9: #{custom-call.27} parent=5 // pred_check
        _
      $region10: #{custom-call.27} parent=5 // pred_check_branch
        %49 = sbr.rel (%p46) target = $region12
      $region11: #{custom-call.27} parent=5 // pred_region
        %s50 = ssub.s32 %s3, 1
      $region12: #{custom-call.27} parent=5 // pred_fallthru
        _
      %p51 = scmp.lt.s32.totalorder %s3, 4
      // Predicated region
      $region13: #{custom-call.27} parent=5 // pred_check
        %p52 = pneg %p51
      $region14: #{custom-call.27} parent=5 // pred_check_branch
        %54 = sbr.rel (%p52) target = $region16
      $region15: #{custom-call.27} parent=5 // pred_region
        %s55 = sand.u32 %s3, 1
        %s56 = sand.u32 %s3, 1
        %s57 = smul.addr %s56, 4
        %s58 = scalar_lea.vmem [#allocation1], %s57
        %s59 = sadd.s32 %s14, %s13
        %s60 = sadd.s32 %s59, %s12
        %s61 = sadd.s32 %s60, %s11
        %s62 = smul.addr %s10, 2
        %s63 = sadd.s32 %s61, %s62
        %s64 = smul.addr %s63, 4
        %s65 = scalar_lea.vmem %s0, %s64
        // Predicated region
        $region17: #{custom-call.27} parent=15 // pred_check
          _
        $region18: #{custom-call.27} parent=15 // pred_check_branch
          %67 = sbr.rel (0) target = $region20
        $region19: #{custom-call.27} parent=15 // pred_region
          // Predicated region
          $region21: #{custom-call.27} parent=19 // pred_check
            _
          $region22: #{custom-call.27} parent=19 // pred_check_branch
            %69 = sbr.rel target = $region24
          $region23: #{custom-call.27} parent=19 // pred_region
            // Predicated region
            $region36: #{custom-call.27} parent=23 // pred_check
              _
            $region37: #{custom-call.27} parent=23 // pred_check_branch
              %85 = sbr.rel (0) target = $region39
            $region38: #{custom-call.27} parent=23 // pred_region
              %s87 = ssub.s32 16, 1
              loop: start=0, step=1, limit=1
              $region40: #{custom-call.27} parent=38 // loop_pre_header
                _
              $region41: #{custom-call.27} parent=38 // loop_header
                %s89 = sphi 0, %s93
                %p90 = scmp.ge.s32.totalorder %s89, 1
                %s94 = sphi %s65, %s65
                %s95 = sphi %s58, %s58
              $region42: #{custom-call.27} parent=38 // loop_header_branch
                %92 = sbr.rel (%p90) target = $region46
              $region43: #{custom-call.27} parent=38 // loop_body
                %v96 = vld [vmem:[%s94] sm:%s87]
                %97 = vst [vmem:[%s95] sm:%s87] %v96
              $region44: #{custom-call.27} parent=38 // loop_footer
                %s93 = sadd.s32 1, %s89
              $region45: #{custom-call.27} parent=38 // loop_footer_branch
                %88 = sbr.rel target = $region41
              $region46: #{custom-call.27} parent=38 // loop_exit
                _
            $region39: #{custom-call.27} parent=23 // pred_fallthru
              _
          $region24: #{custom-call.27} parent=19 // pred_fallthru
            _
          // Predicated region
          $region25: #{custom-call.27} parent=19 // pred_check
            _
          $region26: #{custom-call.27} parent=19 // pred_check_branch
            %71 = sbr.rel (0) target = $region28
          $region27: #{custom-call.27} parent=19 // pred_region
            %s73 = ssub.s32 16, 1
            loop: start=0, step=1, limit=1
            $region29: #{custom-call.27} parent=27 // loop_pre_header
              _
            $region30: #{custom-call.27} parent=27 // loop_header
              %s75 = sphi 0, %s79
              %p76 = scmp.ge.s32.totalorder %s75, 1
              %s80 = sphi %s65, %s65
              %s81 = sphi %s58, %s58
            $region31: #{custom-call.27} parent=27 // loop_header_branch
              %78 = sbr.rel (%p76) target = $region35
            $region32: #{custom-call.27} parent=27 // loop_body
              %v82 = vld [vmem:[%s80] sm:%s73]
              %83 = vst [vmem:[%s81] sm:%s73] %v82
            $region33: #{custom-call.27} parent=27 // loop_footer
              %s79 = sadd.s32 1, %s75
            $region34: #{custom-call.27} parent=27 // loop_footer_branch
              %74 = sbr.rel target = $region30
            $region35: #{custom-call.27} parent=27 // loop_exit
              _
          $region28: #{custom-call.27} parent=19 // pred_fallthru
            _
        $region20: #{custom-call.27} parent=15 // pred_fallthru
          _
        %98 = vnop
      $region16: #{custom-call.27} parent=5 // pred_fallthru
        _
      %p99 = scmp.le.s32.totalorder 1, %s3
      %p100 = scmp.lt.s32.totalorder %s3, 5
      %p101 = pnand %p99, %p100
      %p102 = pneg %p101
      // Predicated region
      $region47: #{custom-call.27} parent=5 // pred_check
        _
      $region48: #{custom-call.27} parent=5 // pred_check_branch
        %104 = sbr.rel (%p101) target = $region50
      $region49: #{custom-call.27} parent=5 // pred_region
        #allocation4 [shape = 'f32[3,3]{1,0}', space=vmem, size = 0x1000, scoped, tag = 'rescaled input a']
        %s105 = ssub.s32 %s3, 1
        %s106 = sand.u32 %s8, 1
        %s107 = sand.u32 %s8, 1
        %s108 = smul.addr %s107, 4
        %s109 = scalar_lea.vmem [#allocation1], %s108
        %s110 = sand.u32 %s8, 1
        %s111 = sand.u32 %s8, 1
        %s112 = smul.addr %s111, 4
        %s113 = scalar_lea.vmem [#allocation1], %s112
        %s114 = sand.u32 %s8, 1
        %s115 = sand.u32 %s8, 1
        %s116 = smul.addr %s115, 4
        %s117 = scalar_lea.vmem [#allocation3], %s116
        %s119 = ssub.s32 16, 1
        %v120 = vld [vmem:[%s113] sm:%s119]
        %121 = vst [vmem:[#allocation0] sm:%s119] %v120
        %v122 = vlaneseq
        %v123 = vand.u32 %v122, 127
        %vm124 = vcmp.lt.s32.totalorder %v123, 3
        %v125 = vlaneseq
        %v126 = vshrl.u32 %v125, 7
        %vm128 = vcmp.eq.s32.totalorder %v126, %v123
        %v129 = vld [vmem:[#allocation0] sm:$0xff]
        %v130 = vsel %vm128, %v129, 0.0
        %131 = vadd.xlane.f32.xlu0 %v130
        %v132 = vpop.xlane.xlu0 %131
        %vm133 = vcmp.ge.s32.totalorder %v126, %v123
        %vm134 = vmand %vm133, %vm124
        %v135 = vsel %vm134, %v129, 0.0
        %v136 = vrcp.pop %v132
        %v137 = vmul.f32 %v132, %v136
        %v138 = vsub.f32 1.0, %v137
        %v139 = vmul.f32 %v136, %v138
        %v140 = vadd.f32 %v136, %v139
        %vm141 = vweird.f32 %v132
        %vm142 = vweird.f32 %v136
        %vm143 = vmor %vm141, %vm142
        %v144 = vsel %vm143, %v136, %v140
        %v145 = vand.u32 2147483647, %v132
        %vm146 = vcmp.eq.f32.partialorder %v145, 8.507059e+37
        %v147 = vand.u32 %v132, 2147483648
        %v148 = vor.u32 1.1754944e-38, %v147
        %v149 = vsel %vm146, %v148, %v144
        %v150 = vmul.f32 %v135, %v149
        %151 = vst [vmem:[#allocation4] sm:$0xff] %v150
        %v152 = vlaneseq
        %v153 = vand.u32 %v152, 127
        %v154 = vlaneseq
        %v155 = vshrl.u32 %v154, 7
        %vm157 = vcmp.eq.s32.totalorder %v153, %v155
        %v158 = vlaneseq
        %v159 = vand.u32 %v158, 127
        %vm160 = vcmp.eq.s32.totalorder %v159, 0
        %v161 = vsel %vm160, 1.0, -1.0
        %v162 = vsel %vm157, %v161, 0.0
        %s163 = scalar_lea.vmem [#allocation4], 1
        %v164 = vld [vmem:[%s163] ss:$0 sm:$0xff]
        %v165 = vxor.u32 %v164, 2147483648
        %v166 = vlaneseq
        %v167 = vand.u32 %v166, 127
        %vm168 = vcmp.eq.s32.totalorder %v167, 1
        %v169 = vmul.f32 %v165, %v162
        %170 = vadd.xlane.f32.xlu0 %v169
        %v171 = vpop.xlane.xlu0 %170
        %v172 = vsel %vm168, %v171, %v162
        %s173 = scalar_lea.vmem [#allocation4], 2
        %v174 = vld [vmem:[%s173] ss:$0 sm:$0xff]
        %v175 = vxor.u32 %v174, 2147483648
        %v176 = vlaneseq
        %v177 = vand.u32 %v176, 127
        %vm178 = vcmp.eq.s32.totalorder %v177, 2
        %v179 = vmul.f32 %v175, %v172
        %180 = vadd.xlane.f32.xlu0 %v179
        %v181 = vpop.xlane.xlu0 %180
        %v182 = vsel %vm178, %v181, %v172
        %v183 = vrcp.pop %v132
        %v184 = vmul.f32 %v132, %v183
        %v185 = vsub.f32 1.0, %v184
        %v186 = vmul.f32 %v183, %v185
        %v187 = vadd.f32 %v183, %v186
        %vm188 = vweird.f32 %v132
        %vm189 = vweird.f32 %v183
        %vm190 = vmor %vm188, %vm189
        %v191 = vsel %vm190, %v183, %v187
        %v192 = vand.u32 2147483647, %v132
        %vm193 = vcmp.eq.f32.partialorder %v192, 8.507059e+37
        %v194 = vand.u32 %v132, 2147483648
        %v195 = vor.u32 1.1754944e-38, %v194
        %v196 = vsel %vm193, %v195, %v191
        %v197 = vmul.f32 %v182, %v196
        %vm198 = vweird.f32 %v132
        %v199 = vsel %vm198, %v182, %v197
        %200 = vst [vmem:[#allocation2] sm:$0xff] %v199
        %s202 = ssub.s32 16, 1
        %v203 = vld [vmem:[#allocation2] sm:%s202]
        %s205 = ssub.s32 16, 1
        %206 = vst [vmem:[%s117] sm:%s205] %v203
        %s207 = sand.u32 %s8, 1
        %s208 = sand.u32 %s8, 1
        %s209 = smul.addr %s208, 4
        %s210 = scalar_lea.vmem [#allocation3], %s209
        %s211 = sadd.s32 %s19, %s18
        %s212 = sadd.s32 %s211, %s17
        %s213 = sadd.s32 %s212, %s16
        %s214 = smul.addr %s15, 2
        %s215 = sadd.s32 %s213, %s214
        %s216 = smul.addr %s215, 4
        %s217 = scalar_lea.vmem %s1, %s216
        // Predicated region
        $region51: #{custom-call.27} parent=49 // pred_check
          _
        $region52: #{custom-call.27} parent=49 // pred_check_branch
          %219 = sbr.rel (0) target = $region54
        $region53: #{custom-call.27} parent=49 // pred_region
          // Predicated region
          $region55: #{custom-call.27} parent=53 // pred_check
            _
          $region56: #{custom-call.27} parent=53 // pred_check_branch
            %221 = sbr.rel target = $region58
          $region57: #{custom-call.27} parent=53 // pred_region
            // Predicated region
            $region70: #{custom-call.27} parent=57 // pred_check
              _
            $region71: #{custom-call.27} parent=57 // pred_check_branch
              %237 = sbr.rel (0) target = $region73
            $region72: #{custom-call.27} parent=57 // pred_region
              %s239 = ssub.s32 16, 1
              loop: start=0, step=1, limit=1
              $region74: #{custom-call.27} parent=72 // loop_pre_header
                _
              $region75: #{custom-call.27} parent=72 // loop_header
                %s241 = sphi 0, %s245
                %p242 = scmp.ge.s32.totalorder %s241, 1
                %s246 = sphi %s210, %s210
                %s247 = sphi %s217, %s217
              $region76: #{custom-call.27} parent=72 // loop_header_branch
                %244 = sbr.rel (%p242) target = $region80
              $region77: #{custom-call.27} parent=72 // loop_body
                %v248 = vld [vmem:[%s246] sm:%s239]
                %249 = vst [vmem:[%s247] sm:%s239] %v248
              $region78: #{custom-call.27} parent=72 // loop_footer
                %s245 = sadd.s32 1, %s241
              $region79: #{custom-call.27} parent=72 // loop_footer_branch
                %240 = sbr.rel target = $region75
              $region80: #{custom-call.27} parent=72 // loop_exit
                _
            $region73: #{custom-call.27} parent=57 // pred_fallthru
              _
          $region58: #{custom-call.27} parent=53 // pred_fallthru
            _
          // Predicated region
          $region59: #{custom-call.27} parent=53 // pred_check
            _
          $region60: #{custom-call.27} parent=53 // pred_check_branch
            %223 = sbr.rel (0) target = $region62
          $region61: #{custom-call.27} parent=53 // pred_region
            %s225 = ssub.s32 16, 1
            loop: start=0, step=1, limit=1
            $region63: #{custom-call.27} parent=61 // loop_pre_header
              _
            $region64: #{custom-call.27} parent=61 // loop_header
              %s227 = sphi 0, %s231
              %p228 = scmp.ge.s32.totalorder %s227, 1
              %s232 = sphi %s210, %s210
              %s233 = sphi %s217, %s217
            $region65: #{custom-call.27} parent=61 // loop_header_branch
              %230 = sbr.rel (%p228) target = $region69
            $region66: #{custom-call.27} parent=61 // loop_body
              %v234 = vld [vmem:[%s232] sm:%s225]
              %235 = vst [vmem:[%s233] sm:%s225] %v234
            $region67: #{custom-call.27} parent=61 // loop_footer
              %s231 = sadd.s32 1, %s227
            $region68: #{custom-call.27} parent=61 // loop_footer_branch
              %226 = sbr.rel target = $region64
            $region69: #{custom-call.27} parent=61 // loop_exit
              _
          $region62: #{custom-call.27} parent=53 // pred_fallthru
            _
        $region54: #{custom-call.27} parent=49 // pred_fallthru
          _
        %250 = vnop
      $region50: #{custom-call.27} parent=5 // pred_fallthru
        _
      %p251 = scmp.le.s32.totalorder 2, %s3
      // Predicated region
      $region81: #{custom-call.27} parent=5 // pred_check
        %p252 = pneg %p251
      $region82: #{custom-call.27} parent=5 // pred_check_branch
        %254 = sbr.rel (%p252) target = $region84
      $region83: #{custom-call.27} parent=5 // pred_region
        %s255 = ssub.s32 %s3, 2
        %s256 = sand.u32 %s9, 1
        %s257 = sand.u32 %s9, 1
        %s258 = smul.addr %s257, 4
        %s259 = scalar_lea.vmem [#allocation3], %s258
      $region84: #{custom-call.27} parent=5 // pred_fallthru
        _
    $region6: #{custom-call.27} parent=1 // loop_footer
      %s7 = sadd.s32 1, %s3
    $region7: #{custom-call.27} parent=1 // loop_footer_branch
      %2 = sbr.rel target = $region3
    $region8: #{custom-call.27} parent=1 // loop_exit
      _

// kernel: custom-call.26
$region0: #{custom-call.26}
  %s0 = inlined_call_operand.vmem [shape: f32[2,2,1,3,3], index: 0, kind: input, shape index: {}]
  %s1 = inlined_call_operand.vmem [shape: f32[2,2,1,3,3], index: 1, kind: output, shape index: {}]
  $region1: #{custom-call.26} parent=0
    #allocation0 [shape = 'u8[4096]{0}', space=vmem, size = 0x1000, scoped, tag = 'operand span for operand 0']
    #allocation1 [shape = 'u8[4096]{0}', space=vmem, size = 0x1000, scoped, tag = 'packed  for operand 0']
    #allocation2 [shape = 'u8[4096]{0}', space=vmem, size = 0x1000, scoped, tag = 'operand span for operand 1']
    #allocation3 [shape = 'u8[4096]{0}', space=vmem, size = 0x1000, scoped, tag = 'packed  for operand 1']
    loop: start=0, step=1, limit=6
    $region2: #{custom-call.26} parent=1 // loop_pre_header
      _
    $region3: #{custom-call.26} parent=1 // loop_header
      %s3 = sphi 0, %s7
      %p4 = scmp.ge.s32.totalorder %s3, 6
      %s10 = sphi 0, %s43
      %s11 = sphi 0, %s39
      %s12 = sphi 0, %s35
      %s13 = sphi 0, %s31
      %s14 = sphi 0, %s27
      %s15 = sphi 0, %s10
      %s16 = sphi 0, %s11
      %s17 = sphi 0, %s12
      %s18 = sphi 0, %s13
      %s19 = sphi 0, %s14
      %s20 = sphi 0, %s15
      %s21 = sphi 0, %s16
      %s22 = sphi 0, %s17
      %s23 = sphi 0, %s18
      %s24 = sphi 0, %s19
    $region4: #{custom-call.26} parent=1 // loop_header_branch
      %6 = sbr.rel (%p4) target = $region8
    $region5: #{custom-call.26} parent=1 // loop_body
      %s8 = ssub.s32 %s3, 1
      %s9 = ssub.s32 %s3, 2
      %s25 = sadd.s32 1, %s14
      %p26 = scmp.ge.s32.totalorder %s25, 1
      %s27 = scalar_select %p26, 0, %s25
      %s28 = sadd.s32 1, %s13
      %s29 = scalar_select %p26, %s28, %s13
      %p30 = scmp.ge.s32.totalorder %s29, 1
      %s31 = scalar_select %p30, 0, %s29
      %s32 = sadd.s32 1, %s12
      %s33 = scalar_select %p30, %s32, %s12
      %p34 = scmp.ge.s32.totalorder %s33, 1
      %s35 = scalar_select %p34, 0, %s33
      %s36 = sadd.s32 1, %s11
      %s37 = scalar_select %p34, %s36, %s11
      %p38 = scmp.ge.s32.totalorder %s37, 2
      %s39 = scalar_select %p38, 0, %s37
      %s40 = sadd.s32 1, %s10
      %s41 = scalar_select %p38, %s40, %s10
      %p42 = scmp.ge.s32.totalorder %s41, 2
      %s43 = scalar_select %p42, 0, %s41
      %p44 = scmp.le.s32.totalorder 1, %s3
      %p45 = scmp.lt.s32.totalorder %s3, 5
      %p46 = pnand %p44, %p45
      %p47 = pneg %p46
      // Predicated region
      $region9: #{custom-call.26} parent=5 // pred_check
        _
      $region10: #{custom-call.26} parent=5 // pred_check_branch
        %49 = sbr.rel (%p46) target = $region12
      $region11: #{custom-call.26} parent=5 // pred_region
        %s50 = ssub.s32 %s3, 1
      $region12: #{custom-call.26} parent=5 // pred_fallthru
        _
      %p51 = scmp.lt.s32.totalorder %s3, 4
      // Predicated region
      $region13: #{custom-call.26} parent=5 // pred_check
        %p52 = pneg %p51
      $region14: #{custom-call.26} parent=5 // pred_check_branch
        %54 = sbr.rel (%p52) target = $region16
      $region15: #{custom-call.26} parent=5 // pred_region
        %s55 = sand.u32 %s3, 1
        %s56 = sand.u32 %s3, 1
        %s57 = smul.addr %s56, 4
        %s58 = scalar_lea.vmem [#allocation1], %s57
        %s59 = sadd.s32 %s14, %s13
        %s60 = sadd.s32 %s59, %s12
        %s61 = sadd.s32 %s60, %s11
        %s62 = smul.addr %s10, 2
        %s63 = sadd.s32 %s61, %s62
        %s64 = smul.addr %s63, 4
        %s65 = scalar_lea.vmem %s0, %s64
        // Predicated region
        $region17: #{custom-call.26} parent=15 // pred_check
          _
        $region18: #{custom-call.26} parent=15 // pred_check_branch
          %67 = sbr.rel (0) target = $region20
        $region19: #{custom-call.26} parent=15 // pred_region
          // Predicated region
          $region21: #{custom-call.26} parent=19 // pred_check
            _
          $region22: #{custom-call.26} parent=19 // pred_check_branch
            %69 = sbr.rel target = $region24
          $region23: #{custom-call.26} parent=19 // pred_region
            // Predicated region
            $region36: #{custom-call.26} parent=23 // pred_check
              _
            $region37: #{custom-call.26} parent=23 // pred_check_branch
              %85 = sbr.rel (0) target = $region39
            $region38: #{custom-call.26} parent=23 // pred_region
              %s87 = ssub.s32 16, 1
              loop: start=0, step=1, limit=1
              $region40: #{custom-call.26} parent=38 // loop_pre_header
                _
              $region41: #{custom-call.26} parent=38 // loop_header
                %s89 = sphi 0, %s93
                %p90 = scmp.ge.s32.totalorder %s89, 1
                %s94 = sphi %s65, %s65
                %s95 = sphi %s58, %s58
              $region42: #{custom-call.26} parent=38 // loop_header_branch
                %92 = sbr.rel (%p90) target = $region46
              $region43: #{custom-call.26} parent=38 // loop_body
                %v96 = vld [vmem:[%s94] sm:%s87]
                %97 = vst [vmem:[%s95] sm:%s87] %v96
              $region44: #{custom-call.26} parent=38 // loop_footer
                %s93 = sadd.s32 1, %s89
              $region45: #{custom-call.26} parent=38 // loop_footer_branch
                %88 = sbr.rel target = $region41
              $region46: #{custom-call.26} parent=38 // loop_exit
                _
            $region39: #{custom-call.26} parent=23 // pred_fallthru
              _
          $region24: #{custom-call.26} parent=19 // pred_fallthru
            _
          // Predicated region
          $region25: #{custom-call.26} parent=19 // pred_check
            _
          $region26: #{custom-call.26} parent=19 // pred_check_branch
            %71 = sbr.rel (0) target = $region28
          $region27: #{custom-call.26} parent=19 // pred_region
            %s73 = ssub.s32 16, 1
            loop: start=0, step=1, limit=1
            $region29: #{custom-call.26} parent=27 // loop_pre_header
              _
            $region30: #{custom-call.26} parent=27 // loop_header
              %s75 = sphi 0, %s79
              %p76 = scmp.ge.s32.totalorder %s75, 1
              %s80 = sphi %s65, %s65
              %s81 = sphi %s58, %s58
            $region31: #{custom-call.26} parent=27 // loop_header_branch
              %78 = sbr.rel (%p76) target = $region35
            $region32: #{custom-call.26} parent=27 // loop_body
              %v82 = vld [vmem:[%s80] sm:%s73]
              %83 = vst [vmem:[%s81] sm:%s73] %v82
            $region33: #{custom-call.26} parent=27 // loop_footer
              %s79 = sadd.s32 1, %s75
            $region34: #{custom-call.26} parent=27 // loop_footer_branch
              %74 = sbr.rel target = $region30
            $region35: #{custom-call.26} parent=27 // loop_exit
              _
          $region28: #{custom-call.26} parent=19 // pred_fallthru
            _
        $region20: #{custom-call.26} parent=15 // pred_fallthru
          _
        %98 = vnop
      $region16: #{custom-call.26} parent=5 // pred_fallthru
        _
      %p99 = scmp.le.s32.totalorder 1, %s3
      %p100 = scmp.lt.s32.totalorder %s3, 5
      %p101 = pnand %p99, %p100
      %p102 = pneg %p101
      // Predicated region
      $region47: #{custom-call.26} parent=5 // pred_check
        _
      $region48: #{custom-call.26} parent=5 // pred_check_branch
        %104 = sbr.rel (%p101) target = $region50
      $region49: #{custom-call.26} parent=5 // pred_region
        #allocation4 [shape = 'f32[3,3]{1,0}', space=vmem, size = 0x1000, scoped, tag = 'rescaled input a']
        %s105 = ssub.s32 %s3, 1
        %s106 = sand.u32 %s8, 1
        %s107 = sand.u32 %s8, 1
        %s108 = smul.addr %s107, 4
        %s109 = scalar_lea.vmem [#allocation1], %s108
        %s110 = sand.u32 %s8, 1
        %s111 = sand.u32 %s8, 1
        %s112 = smul.addr %s111, 4
        %s113 = scalar_lea.vmem [#allocation1], %s112
        %s114 = sand.u32 %s8, 1
        %s115 = sand.u32 %s8, 1
        %s116 = smul.addr %s115, 4
        %s117 = scalar_lea.vmem [#allocation3], %s116
        %s119 = ssub.s32 16, 1
        %v120 = vld [vmem:[%s113] sm:%s119]
        %121 = vst [vmem:[#allocation0] sm:%s119] %v120
        %v122 = vlaneseq
        %v123 = vand.u32 %v122, 127
        %vm124 = vcmp.lt.s32.totalorder %v123, 3
        %v125 = vlaneseq
        %v126 = vshrl.u32 %v125, 7
        %vm128 = vcmp.eq.s32.totalorder %v126, %v123
        %v129 = vld [vmem:[#allocation0] sm:$0xff]
        %v130 = vsel %vm128, %v129, 0.0
        %131 = vadd.xlane.f32.xlu0 %v130
        %v132 = vpop.xlane.xlu0 %131
        %vm133 = vcmp.le.s32.totalorder %v126, %v123
        %vm134 = vmand %vm133, %vm124
        %v135 = vsel %vm134, %v129, 0.0
        %v136 = vrcp.pop %v132
        %v137 = vmul.f32 %v132, %v136
        %v138 = vsub.f32 1.0, %v137
        %v139 = vmul.f32 %v136, %v138
        %v140 = vadd.f32 %v136, %v139
        %vm141 = vweird.f32 %v132
        %vm142 = vweird.f32 %v136
        %vm143 = vmor %vm141, %vm142
        %v144 = vsel %vm143, %v136, %v140
        %v145 = vand.u32 2147483647, %v132
        %vm146 = vcmp.eq.f32.partialorder %v145, 8.507059e+37
        %v147 = vand.u32 %v132, 2147483648
        %v148 = vor.u32 1.1754944e-38, %v147
        %v149 = vsel %vm146, %v148, %v144
        %v150 = vmul.f32 %v135, %v149
        %151 = vst [vmem:[#allocation4] sm:$0xff] %v150
        %v152 = vlaneseq
        %v153 = vand.u32 %v152, 127
        %v154 = vlaneseq
        %v155 = vshrl.u32 %v154, 7
        %vm157 = vcmp.eq.s32.totalorder %v153, %v155
        %v158 = vlaneseq
        %v159 = vand.u32 %v158, 127
        %vm160 = vcmp.eq.s32.totalorder %v159, 2
        %v161 = vsel %vm160, 1.0, -1.0
        %v162 = vsel %vm157, %v161, 0.0
        %s163 = scalar_lea.vmem [#allocation4], 1
        %v164 = vld [vmem:[%s163] ss:$0 sm:$0xff]
        %v165 = vxor.u32 %v164, 2147483648
        %v166 = vlaneseq
        %v167 = vand.u32 %v166, 127
        %vm168 = vcmp.eq.s32.totalorder %v167, 1
        %v169 = vmul.f32 %v165, %v162
        %170 = vadd.xlane.f32.xlu0 %v169
        %v171 = vpop.xlane.xlu0 %170
        %v172 = vsel %vm168, %v171, %v162
        %v173 = vld [vmem:[#allocation4] ss:$0 sm:$0xff]
        %v174 = vxor.u32 %v173, 2147483648
        %v175 = vlaneseq
        %v176 = vand.u32 %v175, 127
        %vm177 = vcmp.eq.s32.totalorder %v176, 0
        %v178 = vmul.f32 %v174, %v172
        %179 = vadd.xlane.f32.xlu0 %v178
        %v180 = vpop.xlane.xlu0 %179
        %v181 = vsel %vm177, %v180, %v172
        %v182 = vrcp.pop %v132
        %v183 = vmul.f32 %v132, %v182
        %v184 = vsub.f32 1.0, %v183
        %v185 = vmul.f32 %v182, %v184
        %v186 = vadd.f32 %v182, %v185
        %vm187 = vweird.f32 %v132
        %vm188 = vweird.f32 %v182
        %vm189 = vmor %vm187, %vm188
        %v190 = vsel %vm189, %v182, %v186
        %v191 = vand.u32 2147483647, %v132
        %vm192 = vcmp.eq.f32.partialorder %v191, 8.507059e+37
        %v193 = vand.u32 %v132, 2147483648
        %v194 = vor.u32 1.1754944e-38, %v193
        %v195 = vsel %vm192, %v194, %v190
        %v196 = vmul.f32 %v181, %v195
        %vm197 = vweird.f32 %v132
        %v198 = vsel %vm197, %v181, %v196
        %199 = vst [vmem:[#allocation2] sm:$0xff] %v198
        %s201 = ssub.s32 16, 1
        %v202 = vld [vmem:[#allocation2] sm:%s201]
        %s204 = ssub.s32 16, 1
        %205 = vst [vmem:[%s117] sm:%s204] %v202
        %s206 = sand.u32 %s8, 1
        %s207 = sand.u32 %s8, 1
        %s208 = smul.addr %s207, 4
        %s209 = scalar_lea.vmem [#allocation3], %s208
        %s210 = sadd.s32 %s19, %s18
        %s211 = sadd.s32 %s210, %s17
        %s212 = sadd.s32 %s211, %s16
        %s213 = smul.addr %s15, 2
        %s214 = sadd.s32 %s212, %s213
        %s215 = smul.addr %s214, 4
        %s216 = scalar_lea.vmem %s1, %s215
        // Predicated region
        $region51: #{custom-call.26} parent=49 // pred_check
          _
        $region52: #{custom-call.26} parent=49 // pred_check_branch
          %218 = sbr.rel (0) target = $region54
        $region53: #{custom-call.26} parent=49 // pred_region
          // Predicated region
          $region55: #{custom-call.26} parent=53 // pred_check
            _
          $region56: #{custom-call.26} parent=53 // pred_check_branch
            %220 = sbr.rel target = $region58
          $region57: #{custom-call.26} parent=53 // pred_region
            // Predicated region
            $region70: #{custom-call.26} parent=57 // pred_check
              _
            $region71: #{custom-call.26} parent=57 // pred_check_branch
              %236 = sbr.rel (0) target = $region73
            $region72: #{custom-call.26} parent=57 // pred_region
              %s238 = ssub.s32 16, 1
              loop: start=0, step=1, limit=1
              $region74: #{custom-call.26} parent=72 // loop_pre_header
                _
              $region75: #{custom-call.26} parent=72 // loop_header
                %s240 = sphi 0, %s244
                %p241 = scmp.ge.s32.totalorder %s240, 1
                %s245 = sphi %s209, %s209
                %s246 = sphi %s216, %s216
              $region76: #{custom-call.26} parent=72 // loop_header_branch
                %243 = sbr.rel (%p241) target = $region80
              $region77: #{custom-call.26} parent=72 // loop_body
                %v247 = vld [vmem:[%s245] sm:%s238]
                %248 = vst [vmem:[%s246] sm:%s238] %v247
              $region78: #{custom-call.26} parent=72 // loop_footer
                %s244 = sadd.s32 1, %s240
              $region79: #{custom-call.26} parent=72 // loop_footer_branch
                %239 = sbr.rel target = $region75
              $region80: #{custom-call.26} parent=72 // loop_exit
                _
            $region73: #{custom-call.26} parent=57 // pred_fallthru
              _
          $region58: #{custom-call.26} parent=53 // pred_fallthru
            _
          // Predicated region
          $region59: #{custom-call.26} parent=53 // pred_check
            _
          $region60: #{custom-call.26} parent=53 // pred_check_branch
            %222 = sbr.rel (0) target = $region62
          $region61: #{custom-call.26} parent=53 // pred_region
            %s224 = ssub.s32 16, 1
            loop: start=0, step=1, limit=1
            $region63: #{custom-call.26} parent=61 // loop_pre_header
              _
            $region64: #{custom-call.26} parent=61 // loop_header
              %s226 = sphi 0, %s230
              %p227 = scmp.ge.s32.totalorder %s226, 1
              %s231 = sphi %s209, %s209
              %s232 = sphi %s216, %s216
            $region65: #{custom-call.26} parent=61 // loop_header_branch
              %229 = sbr.rel (%p227) target = $region69
            $region66: #{custom-call.26} parent=61 // loop_body
              %v233 = vld [vmem:[%s231] sm:%s224]
              %234 = vst [vmem:[%s232] sm:%s224] %v233
            $region67: #{custom-call.26} parent=61 // loop_footer
              %s230 = sadd.s32 1, %s226
            $region68: #{custom-call.26} parent=61 // loop_footer_branch
              %225 = sbr.rel target = $region64
            $region69: #{custom-call.26} parent=61 // loop_exit
              _
          $region62: #{custom-call.26} parent=53 // pred_fallthru
            _
        $region54: #{custom-call.26} parent=49 // pred_fallthru
          _
        %249 = vnop
      $region50: #{custom-call.26} parent=5 // pred_fallthru
        _
      %p250 = scmp.le.s32.totalorder 2, %s3
      // Predicated region
      $region81: #{custom-call.26} parent=5 // pred_check
        %p251 = pneg %p250
      $region82: #{custom-call.26} parent=5 // pred_check_branch
        %253 = sbr.rel (%p251) target = $region84
      $region83: #{custom-call.26} parent=5 // pred_region
        %s254 = ssub.s32 %s3, 2
        %s255 = sand.u32 %s9, 1
        %s256 = sand.u32 %s9, 1
        %s257 = smul.addr %s256, 4
        %s258 = scalar_lea.vmem [#allocation3], %s257
      $region84: #{custom-call.26} parent=5 // pred_fallthru
        _
    $region6: #{custom-call.26} parent=1 // loop_footer
      %s7 = sadd.s32 1, %s3
    $region7: #{custom-call.26} parent=1 // loop_footer_branch
      %2 = sbr.rel target = $region3
    $region8: #{custom-call.26} parent=1 // loop_exit
      _

// kernel: lss_bev_forward.1
$region0: #{lss_bev_forward.1}
  #allocation0 [shape = 'u32[]', space=smem, size = 0x4, offset = 0x4, fixed_abs, tag = 'smem constant byte address 0x4 - core index']
  #allocation1 [shape = 'u32[72,128]{1,0:T(1,128)}', space=vmem, size = 0x9000, scoped, tag = 'internal scratch']
  %s0 = inlined_call_operand.vmem [shape: bf16[64,192], index: 0, kind: input, shape index: {}]
  %s1 = inlined_call_operand.vmem [shape: bf16[192,64], index: 1, kind: input, shape index: {}]
  %s2 = inlined_call_operand.vmem [shape: f32[1,64], index: 2, kind: input, shape index: {}]
  %s3 = inlined_call_operand.vmem [shape: bf16[64,128], index: 3, kind: input, shape index: {}]
  %s4 = inlined_call_operand.vmem [shape: f32[1,128], index: 4, kind: input, shape index: {}]
  %s5 = inlined_call_operand.vmem [shape: s32[64,8], index: 5, kind: input, shape index: {}]
  %s6 = inlined_call_operand.vmem [shape: f32[2,64,256], index: 6, kind: output, shape index: {0}]
  %s7 = inlined_call_operand.hbm [shape: f32[64,64], index: 7, kind: output, shape index: {1}]
  %8 = xla_tuple %s6, %s7
  %s9 = sld [smem:[#allocation0]]
  $region42: #{lss_bev_forward.1} parent=0
    _
  %s11 = ssub.s32 1, %s9
  %s12 = scalar_select 0, %s11, %s9
  $region1: #{lss_bev_forward.1} parent=0
    #allocation2 [shape = 'u8[32768]{0}', space=vmem, size = 0x8000, scoped, tag = 'output window, operand 1, single buffered']
    #allocation3 [shape = 's32[1]{0}', space=sflag, size = 0x4, scoped, tag = 'scoped memory for lss_bev_forward.1']
    %13 = vsyncpa [#allocation3], 0
    // Predicated region
    $region2: #{lss_bev_forward.1} parent=1 // pred_check
      _
    $region3: #{lss_bev_forward.1} parent=1 // pred_check_branch
      %15 = sbr.rel (0) target = $region5
    $region4: #{lss_bev_forward.1} parent=1 // pred_region
      _
    $region5: #{lss_bev_forward.1} parent=1 // pred_fallthru
      _
    // Predicated region
    $region6: #{lss_bev_forward.1} parent=1 // pred_check
      _
    $region7: #{lss_bev_forward.1} parent=1 // pred_check_branch
      %17 = sbr.rel (0) target = $region9
    $region8: #{lss_bev_forward.1} parent=1 // pred_region
      _
    $region9: #{lss_bev_forward.1} parent=1 // pred_fallthru
      _
    // Predicated region
    $region10: #{lss_bev_forward.1} parent=1 // pred_check
      _
    $region11: #{lss_bev_forward.1} parent=1 // pred_check_branch
      %19 = sbr.rel (0) target = $region13
    $region12: #{lss_bev_forward.1} parent=1 // pred_region
      _
    $region13: #{lss_bev_forward.1} parent=1 // pred_fallthru
      _
    // Predicated region
    $region14: #{lss_bev_forward.1} parent=1 // pred_check
      _
    $region15: #{lss_bev_forward.1} parent=1 // pred_check_branch
      %21 = sbr.rel (0) target = $region17
    $region16: #{lss_bev_forward.1} parent=1 // pred_region
      _
    $region17: #{lss_bev_forward.1} parent=1 // pred_fallthru
      _
    // Predicated region
    $region18: #{lss_bev_forward.1} parent=1 // pred_check
      _
    $region19: #{lss_bev_forward.1} parent=1 // pred_check_branch
      %23 = sbr.rel (0) target = $region21
    $region20: #{lss_bev_forward.1} parent=1 // pred_region
      _
    $region21: #{lss_bev_forward.1} parent=1 // pred_fallthru
      _
    // Predicated region
    $region22: #{lss_bev_forward.1} parent=1 // pred_check
      _
    $region23: #{lss_bev_forward.1} parent=1 // pred_check_branch
      %25 = sbr.rel (0) target = $region25
    $region24: #{lss_bev_forward.1} parent=1 // pred_region
      _
    $region25: #{lss_bev_forward.1} parent=1 // pred_fallthru
      _
    %v27 = vld [vmem:[%s0] sm:$0xff]
    %v28 = vld [vmem:[%s0 + $0x8] sm:$0xff]
    %v29 = vld [vmem:[%s0 + $0x10] sm:$0xff]
    %v30 = vld [vmem:[%s0 + $0x18] sm:$0xff]
    %v31 = vld [vmem:[%s0 + $0x20] sm:$0xff]
    %v32 = vld [vmem:[%s0 + $0x28] sm:$0xff]
    %v33 = vld [vmem:[%s0 + $0x30] sm:$0xff]
    %v34 = vld [vmem:[%s0 + $0x38] sm:$0xff]
    %v35 = vld [vmem:[%s1] sm:$0xf]
    %v36 = vld [vmem:[%s1 + $0x4] sm:$0xf]
    %v37 = vld [vmem:[%s1 + $0x8] sm:$0xf]
    %v38 = vld [vmem:[%s1 + $0xc] sm:$0xf]
    %v39 = vld [vmem:[%s1 + $0x10] sm:$0xf]
    %v40 = vld [vmem:[%s1 + $0x14] sm:$0xf]
    %v41 = vld [vmem:[%s1 + $0x18] sm:$0xf]
    %v42 = vld [vmem:[%s1 + $0x1c] sm:$0xf]
    %v43 = vld [vmem:[%s1 + $0x20] sm:$0xf]
    %v44 = vld [vmem:[%s1 + $0x24] sm:$0xf]
    %v45 = vld [vmem:[%s1 + $0x28] sm:$0xf]
    %v46 = vld [vmem:[%s1 + $0x2c] sm:$0xf]
    %v47 = vld [vmem:[%s1 + $0x30] sm:$0xf]
    %v48 = vld [vmem:[%s1 + $0x34] sm:$0xf]
    %v49 = vld [vmem:[%s1 + $0x38] sm:$0xf]
    %v50 = vld [vmem:[%s1 + $0x3c] sm:$0xf]
    %v51 = vld [vmem:[%s1 + $0x40] sm:$0xf]
    %v52 = vld [vmem:[%s1 + $0x44] sm:$0xf]
    %v53 = vld [vmem:[%s1 + $0x48] sm:$0xf]
    %v54 = vld [vmem:[%s1 + $0x4c] sm:$0xf]
    %v55 = vld [vmem:[%s1 + $0x50] sm:$0xf]
    %v56 = vld [vmem:[%s1 + $0x54] sm:$0xf]
    %v57 = vld [vmem:[%s1 + $0x58] sm:$0xf]
    %v58 = vld [vmem:[%s1 + $0x5c] sm:$0xf]
    %v59 = vld [vmem:[%s2] sm:$0x1]
    %v61 = vperm.slane %v59, 0
    %v71 = vunpack.c.l.b16 %v27
    %v72 = vunpack.c.h.b16 %v27
    %v73 = vunpack.c.l.b16 %v28
    %v74 = vunpack.c.h.b16 %v28
    %v75 = vunpack.c.l.b16 %v29
    %v76 = vunpack.c.h.b16 %v29
    %v77 = vunpack.c.l.b16 %v30
    %v78 = vunpack.c.h.b16 %v30
    %v79 = vunpack.c.l.b16 %v31
    %v80 = vunpack.c.h.b16 %v31
    %v81 = vunpack.c.l.b16 %v32
    %v82 = vunpack.c.h.b16 %v32
    %v83 = vunpack.c.l.b16 %v33
    %v84 = vunpack.c.h.b16 %v33
    %v85 = vunpack.c.l.b16 %v34
    %v86 = vunpack.c.h.b16 %v34
    %v87 = vpack.c.b16 %v73, %v71
    %v88 = vpack.c.b16 %v74, %v72
    %v89 = vpack.c.b16 %v77, %v75
    %v90 = vpack.c.b16 %v78, %v76
    %v91 = vpack.c.b16 %v81, %v79
    %v92 = vpack.c.b16 %v82, %v80
    %v93 = vpack.c.b16 %v85, %v83
    %v94 = vpack.c.b16 %v86, %v84
    %v123 = vunpack.c.l.b16 %v35
    %v124 = vunpack.c.l.b16 %v36
    %v125 = vunpack.c.l.b16 %v37
    %v126 = vunpack.c.l.b16 %v38
    %v127 = vunpack.c.l.b16 %v39
    %v128 = vunpack.c.l.b16 %v40
    %v129 = vunpack.c.l.b16 %v41
    %v130 = vunpack.c.l.b16 %v42
    %v131 = vunpack.c.l.b16 %v43
    %v132 = vunpack.c.l.b16 %v44
    %v133 = vunpack.c.l.b16 %v45
    %v134 = vunpack.c.l.b16 %v46
    %v135 = vunpack.c.l.b16 %v47
    %v136 = vunpack.c.l.b16 %v48
    %v137 = vunpack.c.l.b16 %v49
    %v138 = vunpack.c.l.b16 %v50
    %v139 = vunpack.c.l.b16 %v51
    %v140 = vunpack.c.l.b16 %v52
    %v141 = vunpack.c.l.b16 %v53
    %v142 = vunpack.c.l.b16 %v54
    %v143 = vunpack.c.l.b16 %v55
    %v144 = vunpack.c.l.b16 %v56
    %v145 = vunpack.c.l.b16 %v57
    %v146 = vunpack.c.l.b16 %v58
    %v147 = vpack.c.b16 %v124, %v123
    %v148 = vpack.c.b16 %v126, %v125
    %v149 = vpack.c.b16 %v128, %v127
    %v150 = vpack.c.b16 %v130, %v129
    %v151 = vpack.c.b16 %v132, %v131
    %v152 = vpack.c.b16 %v134, %v133
    %v153 = vpack.c.b16 %v136, %v135
    %v154 = vpack.c.b16 %v138, %v137
    %v155 = vpack.c.b16 %v140, %v139
    %v156 = vpack.c.b16 %v142, %v141
    %v157 = vpack.c.b16 %v144, %v143
    %v158 = vpack.c.b16 %v146, %v145
    %vm171 = vcmask 523264
    %v173 = vsel %vm171, %v88, 0
    %v176 = vsel %vm171, %v90, 0
    %v179 = vsel %vm171, %v92, 0
    %v182 = vsel %vm171, %v94, 0
    %184 = vmatpush.bf16.msra.mxu0 %v154
    %185 = vmatpush.bf16.msra.mxu0 %v153
    %186 = vmatpush.bf16.msra.mxu0 %v152
    %187 = vmatpush.bf16.msra.mxu0 %v151
    %188 = vmatpush.bf16.msra.mxu0 %v150
    %189 = vmatpush.bf16.msra.mxu0 %v149
    %190 = vmatpush.bf16.msra.mxu0 %v148
    %191 = vmatpush.bf16.msra.mxu0 %v147
    %192 = vmatmul.bf16.gmra.mxu0 %v87
    %v193 = vpop.f32.mrf.mxu0
    %v194 = vadd.f32 %v61, %v193
    %v195 = vpop.f32.mrf.mxu0
    %v196 = vadd.f32 %v61, %v195
    %197 = vmatmul.bf16.gmra.mxu0 %v89
    %v198 = vpop.f32.mrf.mxu0
    %v199 = vadd.f32 %v61, %v198
    %v200 = vpop.f32.mrf.mxu0
    %v201 = vadd.f32 %v61, %v200
    %202 = vmatmul.bf16.gmra.mxu0 %v91
    %v203 = vpop.f32.mrf.mxu0
    %v204 = vadd.f32 %v61, %v203
    %v205 = vpop.f32.mrf.mxu0
    %v206 = vadd.f32 %v61, %v205
    %207 = vmatmul.bf16.gmra.mxu0 %v93
    %v208 = vpop.f32.mrf.mxu0
    %v209 = vadd.f32 %v61, %v208
    %v210 = vpop.f32.mrf.mxu0
    %v211 = vadd.f32 %v61, %v210
    %212 = vdwg.mxu0
    %213 = vmatpush.bf16.msra.mxu0 0
    %214 = vmatpush.bf16.msra.mxu0 0
    %215 = vmatpush.bf16.msra.mxu0 0
    %216 = vmatpush.bf16.msra.mxu0 0
    %217 = vmatpush.bf16.msra.mxu0 %v158
    %218 = vmatpush.bf16.msra.mxu0 %v157
    %219 = vmatpush.bf16.msra.mxu0 %v156
    %220 = vmatpush.bf16.msra.mxu0 %v155
    %221 = vmatmul.bf16.gmra.mxu0 %v173
    %v222 = vpop.f32.mrf.mxu0
    %v223 = vadd.f32 %v194, %v222
    %v224 = vpop.f32.mrf.mxu0
    %v225 = vadd.f32 %v196, %v224
    %226 = vmatmul.bf16.gmra.mxu0 %v176
    %v227 = vpop.f32.mrf.mxu0
    %v228 = vadd.f32 %v199, %v227
    %v229 = vpop.f32.mrf.mxu0
    %v230 = vadd.f32 %v201, %v229
    %231 = vmatmul.bf16.gmra.mxu0 %v179
    %v232 = vpop.f32.mrf.mxu0
    %v233 = vadd.f32 %v204, %v232
    %v234 = vpop.f32.mrf.mxu0
    %v235 = vadd.f32 %v206, %v234
    %236 = vmatmul.bf16.gmra.mxu0 %v182
    %v237 = vpop.f32.mrf.mxu0
    %v238 = vadd.f32 %v209, %v237
    %v239 = vpop.f32.mrf.mxu0
    %v240 = vadd.f32 %v211, %v239
    %241 = vdwg.mxu0
    %v242 = vmax.f32 %v223, 0.0
    %v243 = vmax.f32 %v225, 0.0
    %v244 = vmax.f32 %v228, 0.0
    %v245 = vmax.f32 %v230, 0.0
    %v246 = vmax.f32 %v233, 0.0
    %v247 = vmax.f32 %v235, 0.0
    %v248 = vmax.f32 %v238, 0.0
    %v249 = vmax.f32 %v240, 0.0
    %v250 = vpack.c.bf16 %v243, %v242
    %v251 = vpack.c.bf16 %v245, %v244
    %v252 = vpack.c.bf16 %v247, %v246
    %v253 = vpack.c.bf16 %v249, %v248
    %v254 = vld [vmem:[%s3] sm:$0xf]
    %v255 = vld [vmem:[%s3 + $0x4] sm:$0xf]
    %v256 = vld [vmem:[%s3 + $0x8] sm:$0xf]
    %v257 = vld [vmem:[%s3 + $0xc] sm:$0xf]
    %v258 = vld [vmem:[%s3 + $0x10] sm:$0xf]
    %v259 = vld [vmem:[%s3 + $0x14] sm:$0xf]
    %v260 = vld [vmem:[%s3 + $0x18] sm:$0xf]
    %v261 = vld [vmem:[%s3 + $0x1c] sm:$0xf]
    %v262 = vld [vmem:[%s4] sm:$0x1]
    %v264 = vperm.slane %v262, 0
    %v274 = vunpack.c.l.b16 %v254
    %v275 = vunpack.c.l.b16 %v255
    %v276 = vunpack.c.l.b16 %v256
    %v277 = vunpack.c.l.b16 %v257
    %v278 = vunpack.c.l.b16 %v258
    %v279 = vunpack.c.l.b16 %v259
    %v280 = vunpack.c.l.b16 %v260
    %v281 = vunpack.c.l.b16 %v261
    %v282 = vpack.c.b16 %v275, %v274
    %v283 = vpack.c.b16 %v277, %v276
    %v284 = vpack.c.b16 %v279, %v278
    %v285 = vpack.c.b16 %v281, %v280
    %v291 = vsel %vm171, %v250, 0
    %v294 = vsel %vm171, %v251, 0
    %v297 = vsel %vm171, %v252, 0
    %v300 = vsel %vm171, %v253, 0
    %302 = vmatpush.bf16.msra.mxu0 0
    %303 = vmatpush.bf16.msra.mxu0 0
    %304 = vmatpush.bf16.msra.mxu0 0
    %305 = vmatpush.bf16.msra.mxu0 0
    %306 = vmatpush.bf16.msra.mxu0 %v285
    %307 = vmatpush.bf16.msra.mxu0 %v284
    %308 = vmatpush.bf16.msra.mxu0 %v283
    %309 = vmatpush.bf16.msra.mxu0 %v282
    %310 = vmatmul.bf16.gmra.mxu0 %v291
    %v311 = vpop.f32.mrf.mxu0
    %v312 = vadd.f32 %v264, %v311
    %v313 = vpop.f32.mrf.mxu0
    %v314 = vadd.f32 %v264, %v313
    %315 = vmatmul.bf16.gmra.mxu0 %v294
    %v316 = vpop.f32.mrf.mxu0
    %v317 = vadd.f32 %v264, %v316
    %v318 = vpop.f32.mrf.mxu0
    %v319 = vadd.f32 %v264, %v318
    %320 = vmatmul.bf16.gmra.mxu0 %v297
    %v321 = vpop.f32.mrf.mxu0
    %v322 = vadd.f32 %v264, %v321
    %v323 = vpop.f32.mrf.mxu0
    %v324 = vadd.f32 %v264, %v323
    %325 = vmatmul.bf16.gmra.mxu0 %v300
    %v326 = vpop.f32.mrf.mxu0
    %v327 = vadd.f32 %v264, %v326
    %v328 = vpop.f32.mrf.mxu0
    %v329 = vadd.f32 %v264, %v328
    %330 = vdwg.mxu0
    %v331 = vpack.c.bf16 %v312, %v312
    %v332 = vpack.c.bf16 %v314, %v314
    %v333 = vpack.c.bf16 %v317, %v317
    %v334 = vpack.c.bf16 %v319, %v319
    %v335 = vpack.c.bf16 %v322, %v322
    %v336 = vpack.c.bf16 %v324, %v324
    %v337 = vpack.c.bf16 %v327, %v327
    %v338 = vpack.c.bf16 %v329, %v329
    %vm339 = vcmask 1048064
    %v340 = vsel %vm339, %v312, -inf
    %341 = vmax.xlane.f32.xlu0 %v340
    %v342 = vpop.xlane.xlu0 %341
    %v343 = vsel %vm339, %v314, -inf
    %344 = vmax.xlane.f32.xlu0 %v343
    %v345 = vpop.xlane.xlu0 %344
    %v346 = vsel %vm339, %v317, -inf
    %347 = vmax.xlane.f32.xlu0 %v346
    %v348 = vpop.xlane.xlu0 %347
    %v349 = vsel %vm339, %v319, -inf
    %350 = vmax.xlane.f32.xlu0 %v349
    %v351 = vpop.xlane.xlu0 %350
    %v352 = vsel %vm339, %v322, -inf
    %353 = vmax.xlane.f32.xlu0 %v352
    %v354 = vpop.xlane.xlu0 %353
    %v355 = vsel %vm339, %v324, -inf
    %356 = vmax.xlane.f32.xlu0 %v355
    %v357 = vpop.xlane.xlu0 %356
    %v358 = vsel %vm339, %v327, -inf
    %359 = vmax.xlane.f32.xlu0 %v358
    %v360 = vpop.xlane.xlu0 %359
    %v361 = vsel %vm339, %v329, -inf
    %362 = vmax.xlane.f32.xlu0 %v361
    %v363 = vpop.xlane.xlu0 %362
    %v364 = vsub.f32 %v312, %v342
    %v365 = vsub.f32 %v314, %v345
    %v366 = vsub.f32 %v317, %v348
    %v367 = vsub.f32 %v319, %v351
    %v368 = vsub.f32 %v322, %v354
    %v369 = vsub.f32 %v324, %v357
    %v370 = vsub.f32 %v327, %v360
    %v371 = vsub.f32 %v329, %v363
    %v372 = vmul.f32 %v364, 1.442695
    %v373 = vpow.pop %v372
    %v374 = vmul.f32 %v365, 1.442695
    %v375 = vpow.pop %v374
    %v376 = vmul.f32 %v366, 1.442695
    %v377 = vpow.pop %v376
    %v378 = vmul.f32 %v367, 1.442695
    %v379 = vpow.pop %v378
    %v380 = vmul.f32 %v368, 1.442695
    %v381 = vpow.pop %v380
    %v382 = vmul.f32 %v369, 1.442695
    %v383 = vpow.pop %v382
    %v384 = vmul.f32 %v370, 1.442695
    %v385 = vpow.pop %v384
    %v386 = vmul.f32 %v371, 1.442695
    %v387 = vpow.pop %v386
    %396 = vrot.lane.b32.xlu0 %v373, 64
    %v397 = vpop.permute.xlu0 %396
    %398 = vrot.lane.b32.xlu0 %v375, 64
    %v399 = vpop.permute.xlu0 %398
    %400 = vrot.lane.b32.xlu0 %v377, 64
    %v401 = vpop.permute.xlu0 %400
    %402 = vrot.lane.b32.xlu0 %v379, 64
    %v403 = vpop.permute.xlu0 %402
    %404 = vrot.lane.b32.xlu0 %v381, 64
    %v405 = vpop.permute.xlu0 %404
    %406 = vrot.lane.b32.xlu0 %v383, 64
    %v407 = vpop.permute.xlu0 %406
    %408 = vrot.lane.b32.xlu0 %v385, 64
    %v409 = vpop.permute.xlu0 %408
    %410 = vrot.lane.b32.xlu0 %v387, 64
    %v411 = vpop.permute.xlu0 %410
    %v420 = vsel %vm171, %v397, 0.0
    %421 = vadd.xlane.f32.xlu0 %v420
    %v422 = vpop.xlane.xlu0 %421
    %v423 = vsel %vm171, %v399, 0.0
    %424 = vadd.xlane.f32.xlu0 %v423
    %v425 = vpop.xlane.xlu0 %424
    %v426 = vsel %vm171, %v401, 0.0
    %427 = vadd.xlane.f32.xlu0 %v426
    %v428 = vpop.xlane.xlu0 %427
    %v429 = vsel %vm171, %v403, 0.0
    %430 = vadd.xlane.f32.xlu0 %v429
    %v431 = vpop.xlane.xlu0 %430
    %v432 = vsel %vm171, %v405, 0.0
    %433 = vadd.xlane.f32.xlu0 %v432
    %v434 = vpop.xlane.xlu0 %433
    %v435 = vsel %vm171, %v407, 0.0
    %436 = vadd.xlane.f32.xlu0 %v435
    %v437 = vpop.xlane.xlu0 %436
    %v438 = vsel %vm171, %v409, 0.0
    %439 = vadd.xlane.f32.xlu0 %v438
    %v440 = vpop.xlane.xlu0 %439
    %v441 = vsel %vm171, %v411, 0.0
    %442 = vadd.xlane.f32.xlu0 %v441
    %v443 = vpop.xlane.xlu0 %442
    %v444 = vrcp.pop %v422
    %v445 = vrcp.pop %v425
    %v446 = vrcp.pop %v428
    %v447 = vrcp.pop %v431
    %v448 = vrcp.pop %v434
    %v449 = vrcp.pop %v437
    %v450 = vrcp.pop %v440
    %v451 = vrcp.pop %v443
    %v452 = vmul.f32 %v373, %v444
    %v453 = vmul.f32 %v375, %v445
    %v454 = vmul.f32 %v377, %v446
    %v455 = vmul.f32 %v379, %v447
    %v456 = vmul.f32 %v381, %v448
    %v457 = vmul.f32 %v383, %v449
    %v458 = vmul.f32 %v385, %v450
    %v459 = vmul.f32 %v387, %v451
    %468 = vrot.lane.b32.xlu0 %v452, 64
    %v469 = vpop.permute.xlu0 %468
    %470 = vrot.lane.b32.xlu0 %v453, 64
    %v471 = vpop.permute.xlu0 %470
    %472 = vrot.lane.b32.xlu0 %v454, 64
    %v473 = vpop.permute.xlu0 %472
    %474 = vrot.lane.b32.xlu0 %v455, 64
    %v475 = vpop.permute.xlu0 %474
    %476 = vrot.lane.b32.xlu0 %v456, 64
    %v477 = vpop.permute.xlu0 %476
    %478 = vrot.lane.b32.xlu0 %v457, 64
    %v479 = vpop.permute.xlu0 %478
    %480 = vrot.lane.b32.xlu0 %v458, 64
    %v481 = vpop.permute.xlu0 %480
    %482 = vrot.lane.b32.xlu0 %v459, 64
    %v483 = vpop.permute.xlu0 %482
    %492 = vst.msk [vmem:[#allocation2] sm:$0xff] %vm171, %v469
    %493 = vst.msk [vmem:[#allocation2 + $0x8] sm:$0xff] %vm171, %v471
    %494 = vst.msk [vmem:[#allocation2 + $0x10] sm:$0xff] %vm171, %v473
    %495 = vst.msk [vmem:[#allocation2 + $0x18] sm:$0xff] %vm171, %v475
    %496 = vst.msk [vmem:[#allocation2 + $0x20] sm:$0xff] %vm171, %v477
    %497 = vst.msk [vmem:[#allocation2 + $0x28] sm:$0xff] %vm171, %v479
    %498 = vst.msk [vmem:[#allocation2 + $0x30] sm:$0xff] %vm171, %v481
    %499 = vst.msk [vmem:[#allocation2 + $0x38] sm:$0xff] %vm171, %v483
    %v500 = vlaneseq
    %v501 = vand.u32 %v500, 127
    %v502 = vadd.s32 %v501, 128
    %v503 = vld [vmem:[%s5] sm:$0xff]
    %v504 = vld [vmem:[%s5 + $0x8] sm:$0xff]
    %v505 = vld [vmem:[%s5 + $0x10] sm:$0xff]
    %v506 = vld [vmem:[%s5 + $0x18] sm:$0xff]
    %v507 = vld [vmem:[%s5 + $0x20] sm:$0xff]
    %v508 = vld [vmem:[%s5 + $0x28] sm:$0xff]
    %v509 = vld [vmem:[%s5 + $0x30] sm:$0xff]
    %v510 = vld [vmem:[%s5 + $0x38] sm:$0xff]
    %511 = vset.pattern.permute.xlu0 0
    %512 = vperm.xlu0 %511, %v503
    %v513 = vpop.permute.xlu0 %512
    %514 = vset.pattern.permute.xlu0 0
    %515 = vperm.xlu0 %514, %v504
    %v516 = vpop.permute.xlu0 %515
    %517 = vset.pattern.permute.xlu0 0
    %518 = vperm.xlu0 %517, %v505
    %v519 = vpop.permute.xlu0 %518
    %520 = vset.pattern.permute.xlu0 0
    %521 = vperm.xlu0 %520, %v506
    %v522 = vpop.permute.xlu0 %521
    %vm523 = vcmp.eq.s32.totalorder %v501, %v513
    %vm524 = vcmp.eq.s32.totalorder %v502, %v513
    %vm525 = vcmp.eq.s32.totalorder %v501, %v516
    %vm526 = vcmp.eq.s32.totalorder %v502, %v516
    %vm527 = vcmp.eq.s32.totalorder %v501, %v519
    %vm528 = vcmp.eq.s32.totalorder %v502, %v519
    %vm529 = vcmp.eq.s32.totalorder %v501, %v522
    %vm530 = vcmp.eq.s32.totalorder %v502, %v522
    %531 = vset.pattern.permute.xlu0 64
    %532 = vperm.xlu0 %531, %v452
    %v533 = vpop.permute.xlu0 %532
    %535 = vset.pattern.permute.xlu0 64
    %536 = vperm.xlu0 %535, %v453
    %v537 = vpop.permute.xlu0 %536
    %539 = vset.pattern.permute.xlu0 64
    %540 = vperm.xlu0 %539, %v454
    %v541 = vpop.permute.xlu0 %540
    %543 = vset.pattern.permute.xlu0 64
    %544 = vperm.xlu0 %543, %v455
    %v545 = vpop.permute.xlu0 %544
    %v547 = vsel %vm523, %v533, 0.0
    %v548 = vsel %vm524, %v533, 0.0
    %v549 = vsel %vm525, %v537, 0.0
    %v550 = vsel %vm526, %v537, 0.0
    %v551 = vsel %vm527, %v541, 0.0
    %v552 = vsel %vm528, %v541, 0.0
    %v553 = vsel %vm529, %v545, 0.0
    %v554 = vsel %vm530, %v545, 0.0
    %v555 = vadd.f32 %v547, 0.0
    %v556 = vadd.f32 %v548, 0.0
    %v557 = vadd.f32 %v549, 0.0
    %v558 = vadd.f32 %v550, 0.0
    %v559 = vadd.f32 %v551, 0.0
    %v560 = vadd.f32 %v552, 0.0
    %v561 = vadd.f32 %v553, 0.0
    %v562 = vadd.f32 %v554, 0.0
    %563 = vset.pattern.permute.xlu0 1
    %564 = vperm.xlu0 %563, %v503
    %v565 = vpop.permute.xlu0 %564
    %566 = vset.pattern.permute.xlu0 1
    %567 = vperm.xlu0 %566, %v504
    %v568 = vpop.permute.xlu0 %567
    %569 = vset.pattern.permute.xlu0 1
    %570 = vperm.xlu0 %569, %v505
    %v571 = vpop.permute.xlu0 %570
    %572 = vset.pattern.permute.xlu0 1
    %573 = vperm.xlu0 %572, %v506
    %v574 = vpop.permute.xlu0 %573
    %vm575 = vcmp.eq.s32.totalorder %v501, %v565
    %vm576 = vcmp.eq.s32.totalorder %v502, %v565
    %vm577 = vcmp.eq.s32.totalorder %v501, %v568
    %vm578 = vcmp.eq.s32.totalorder %v502, %v568
    %vm579 = vcmp.eq.s32.totalorder %v501, %v571
    %vm580 = vcmp.eq.s32.totalorder %v502, %v571
    %vm581 = vcmp.eq.s32.totalorder %v501, %v574
    %vm582 = vcmp.eq.s32.totalorder %v502, %v574
    %583 = vset.pattern.permute.xlu0 65
    %584 = vperm.xlu0 %583, %v452
    %v585 = vpop.permute.xlu0 %584
    %587 = vset.pattern.permute.xlu0 65
    %588 = vperm.xlu0 %587, %v453
    %v589 = vpop.permute.xlu0 %588
    %591 = vset.pattern.permute.xlu0 65
    %592 = vperm.xlu0 %591, %v454
    %v593 = vpop.permute.xlu0 %592
    %595 = vset.pattern.permute.xlu0 65
    %596 = vperm.xlu0 %595, %v455
    %v597 = vpop.permute.xlu0 %596
    %v599 = vsel %vm575, %v585, 0.0
    %v600 = vsel %vm576, %v585, 0.0
    %v601 = vsel %vm577, %v589, 0.0
    %v602 = vsel %vm578, %v589, 0.0
    %v603 = vsel %vm579, %v593, 0.0
    %v604 = vsel %vm580, %v593, 0.0
    %v605 = vsel %vm581, %v597, 0.0
    %v606 = vsel %vm582, %v597, 0.0
    %v607 = vadd.f32 %v555, %v599
    %v608 = vadd.f32 %v556, %v600
    %v609 = vadd.f32 %v557, %v601
    %v610 = vadd.f32 %v558, %v602
    %v611 = vadd.f32 %v559, %v603
    %v612 = vadd.f32 %v560, %v604
    %v613 = vadd.f32 %v561, %v605
    %v614 = vadd.f32 %v562, %v606
    %615 = vset.pattern.permute.xlu0 2
    %616 = vperm.xlu0 %615, %v503
    %v617 = vpop.permute.xlu0 %616
    %618 = vset.pattern.permute.xlu0 2
    %619 = vperm.xlu0 %618, %v504
    %v620 = vpop.permute.xlu0 %619
    %621 = vset.pattern.permute.xlu0 2
    %622 = vperm.xlu0 %621, %v505
    %v623 = vpop.permute.xlu0 %622
    %624 = vset.pattern.permute.xlu0 2
    %625 = vperm.xlu0 %624, %v506
    %v626 = vpop.permute.xlu0 %625
    %vm627 = vcmp.eq.s32.totalorder %v501, %v617
    %vm628 = vcmp.eq.s32.totalorder %v502, %v617
    %vm629 = vcmp.eq.s32.totalorder %v501, %v620
    %vm630 = vcmp.eq.s32.totalorder %v502, %v620
    %vm631 = vcmp.eq.s32.totalorder %v501, %v623
    %vm632 = vcmp.eq.s32.totalorder %v502, %v623
    %vm633 = vcmp.eq.s32.totalorder %v501, %v626
    %vm634 = vcmp.eq.s32.totalorder %v502, %v626
    %635 = vset.pattern.permute.xlu0 66
    %636 = vperm.xlu0 %635, %v452
    %v637 = vpop.permute.xlu0 %636
    %639 = vset.pattern.permute.xlu0 66
    %640 = vperm.xlu0 %639, %v453
    %v641 = vpop.permute.xlu0 %640
    %643 = vset.pattern.permute.xlu0 66
    %644 = vperm.xlu0 %643, %v454
    %v645 = vpop.permute.xlu0 %644
    %647 = vset.pattern.permute.xlu0 66
    %648 = vperm.xlu0 %647, %v455
    %v649 = vpop.permute.xlu0 %648
    %v651 = vsel %vm627, %v637, 0.0
    %v652 = vsel %vm628, %v637, 0.0
    %v653 = vsel %vm629, %v641, 0.0
    %v654 = vsel %vm630, %v641, 0.0
    %v655 = vsel %vm631, %v645, 0.0
    %v656 = vsel %vm632, %v645, 0.0
    %v657 = vsel %vm633, %v649, 0.0
    %v658 = vsel %vm634, %v649, 0.0
    %v659 = vadd.f32 %v607, %v651
    %v660 = vadd.f32 %v608, %v652
    %v661 = vadd.f32 %v609, %v653
    %v662 = vadd.f32 %v610, %v654
    %v663 = vadd.f32 %v611, %v655
    %v664 = vadd.f32 %v612, %v656
    %v665 = vadd.f32 %v613, %v657
    %v666 = vadd.f32 %v614, %v658
    %667 = vset.pattern.permute.xlu0 3
    %668 = vperm.xlu0 %667, %v503
    %v669 = vpop.permute.xlu0 %668
    %670 = vset.pattern.permute.xlu0 3
    %671 = vperm.xlu0 %670, %v504
    %v672 = vpop.permute.xlu0 %671
    %673 = vset.pattern.permute.xlu0 3
    %674 = vperm.xlu0 %673, %v505
    %v675 = vpop.permute.xlu0 %674
    %676 = vset.pattern.permute.xlu0 3
    %677 = vperm.xlu0 %676, %v506
    %v678 = vpop.permute.xlu0 %677
    %vm679 = vcmp.eq.s32.totalorder %v501, %v669
    %vm680 = vcmp.eq.s32.totalorder %v502, %v669
    %vm681 = vcmp.eq.s32.totalorder %v501, %v672
    %vm682 = vcmp.eq.s32.totalorder %v502, %v672
    %vm683 = vcmp.eq.s32.totalorder %v501, %v675
    %vm684 = vcmp.eq.s32.totalorder %v502, %v675
    %vm685 = vcmp.eq.s32.totalorder %v501, %v678
    %vm686 = vcmp.eq.s32.totalorder %v502, %v678
    %687 = vset.pattern.permute.xlu0 67
    %688 = vperm.xlu0 %687, %v452
    %v689 = vpop.permute.xlu0 %688
    %691 = vset.pattern.permute.xlu0 67
    %692 = vperm.xlu0 %691, %v453
    %v693 = vpop.permute.xlu0 %692
    %695 = vset.pattern.permute.xlu0 67
    %696 = vperm.xlu0 %695, %v454
    %v697 = vpop.permute.xlu0 %696
    %699 = vset.pattern.permute.xlu0 67
    %700 = vperm.xlu0 %699, %v455
    %v701 = vpop.permute.xlu0 %700
    %v703 = vsel %vm679, %v689, 0.0
    %v704 = vsel %vm680, %v689, 0.0
    %v705 = vsel %vm681, %v693, 0.0
    %v706 = vsel %vm682, %v693, 0.0
    %v707 = vsel %vm683, %v697, 0.0
    %v708 = vsel %vm684, %v697, 0.0
    %v709 = vsel %vm685, %v701, 0.0
    %v710 = vsel %vm686, %v701, 0.0
    %v711 = vadd.f32 %v659, %v703
    %v712 = vadd.f32 %v660, %v704
    %v713 = vadd.f32 %v661, %v705
    %v714 = vadd.f32 %v662, %v706
    %v715 = vadd.f32 %v663, %v707
    %v716 = vadd.f32 %v664, %v708
    %v717 = vadd.f32 %v665, %v709
    %v718 = vadd.f32 %v666, %v710
    %719 = vset.pattern.permute.xlu0 4
    %720 = vperm.xlu0 %719, %v503
    %v721 = vpop.permute.xlu0 %720
    %722 = vset.pattern.permute.xlu0 4
    %723 = vperm.xlu0 %722, %v504
    %v724 = vpop.permute.xlu0 %723
    %725 = vset.pattern.permute.xlu0 4
    %726 = vperm.xlu0 %725, %v505
    %v727 = vpop.permute.xlu0 %726
    %728 = vset.pattern.permute.xlu0 4
    %729 = vperm.xlu0 %728, %v506
    %v730 = vpop.permute.xlu0 %729
    %vm731 = vcmp.eq.s32.totalorder %v501, %v721
    %vm732 = vcmp.eq.s32.totalorder %v502, %v721
    %vm733 = vcmp.eq.s32.totalorder %v501, %v724
    %vm734 = vcmp.eq.s32.totalorder %v502, %v724
    %vm735 = vcmp.eq.s32.totalorder %v501, %v727
    %vm736 = vcmp.eq.s32.totalorder %v502, %v727
    %vm737 = vcmp.eq.s32.totalorder %v501, %v730
    %vm738 = vcmp.eq.s32.totalorder %v502, %v730
    %739 = vset.pattern.permute.xlu0 68
    %740 = vperm.xlu0 %739, %v452
    %v741 = vpop.permute.xlu0 %740
    %743 = vset.pattern.permute.xlu0 68
    %744 = vperm.xlu0 %743, %v453
    %v745 = vpop.permute.xlu0 %744
    %747 = vset.pattern.permute.xlu0 68
    %748 = vperm.xlu0 %747, %v454
    %v749 = vpop.permute.xlu0 %748
    %751 = vset.pattern.permute.xlu0 68
    %752 = vperm.xlu0 %751, %v455
    %v753 = vpop.permute.xlu0 %752
    %v755 = vsel %vm731, %v741, 0.0
    %v756 = vsel %vm732, %v741, 0.0
    %v757 = vsel %vm733, %v745, 0.0
    %v758 = vsel %vm734, %v745, 0.0
    %v759 = vsel %vm735, %v749, 0.0
    %v760 = vsel %vm736, %v749, 0.0
    %v761 = vsel %vm737, %v753, 0.0
    %v762 = vsel %vm738, %v753, 0.0
    %v763 = vadd.f32 %v711, %v755
    %v764 = vadd.f32 %v712, %v756
    %v765 = vadd.f32 %v713, %v757
    %v766 = vadd.f32 %v714, %v758
    %v767 = vadd.f32 %v715, %v759
    %v768 = vadd.f32 %v716, %v760
    %v769 = vadd.f32 %v717, %v761
    %v770 = vadd.f32 %v718, %v762
    %771 = vset.pattern.permute.xlu0 5
    %772 = vperm.xlu0 %771, %v503
    %v773 = vpop.permute.xlu0 %772
    %774 = vset.pattern.permute.xlu0 5
    %775 = vperm.xlu0 %774, %v504
    %v776 = vpop.permute.xlu0 %775
    %777 = vset.pattern.permute.xlu0 5
    %778 = vperm.xlu0 %777, %v505
    %v779 = vpop.permute.xlu0 %778
    %780 = vset.pattern.permute.xlu0 5
    %781 = vperm.xlu0 %780, %v506
    %v782 = vpop.permute.xlu0 %781
    %vm783 = vcmp.eq.s32.totalorder %v501, %v773
    %vm784 = vcmp.eq.s32.totalorder %v502, %v773
    %vm785 = vcmp.eq.s32.totalorder %v501, %v776
    %vm786 = vcmp.eq.s32.totalorder %v502, %v776
    %vm787 = vcmp.eq.s32.totalorder %v501, %v779
    %vm788 = vcmp.eq.s32.totalorder %v502, %v779
    %vm789 = vcmp.eq.s32.totalorder %v501, %v782
    %vm790 = vcmp.eq.s32.totalorder %v502, %v782
    %791 = vset.pattern.permute.xlu0 69
    %792 = vperm.xlu0 %791, %v452
    %v793 = vpop.permute.xlu0 %792
    %795 = vset.pattern.permute.xlu0 69
    %796 = vperm.xlu0 %795, %v453
    %v797 = vpop.permute.xlu0 %796
    %799 = vset.pattern.permute.xlu0 69
    %800 = vperm.xlu0 %799, %v454
    %v801 = vpop.permute.xlu0 %800
    %803 = vset.pattern.permute.xlu0 69
    %804 = vperm.xlu0 %803, %v455
    %v805 = vpop.permute.xlu0 %804
    %v807 = vsel %vm783, %v793, 0.0
    %v808 = vsel %vm784, %v793, 0.0
    %v809 = vsel %vm785, %v797, 0.0
    %v810 = vsel %vm786, %v797, 0.0
    %v811 = vsel %vm787, %v801, 0.0
    %v812 = vsel %vm788, %v801, 0.0
    %v813 = vsel %vm789, %v805, 0.0
    %v814 = vsel %vm790, %v805, 0.0
    %v815 = vadd.f32 %v763, %v807
    %v816 = vadd.f32 %v764, %v808
    %v817 = vadd.f32 %v765, %v809
    %v818 = vadd.f32 %v766, %v810
    %v819 = vadd.f32 %v767, %v811
    %v820 = vadd.f32 %v768, %v812
    %v821 = vadd.f32 %v769, %v813
    %v822 = vadd.f32 %v770, %v814
    %823 = vset.pattern.permute.xlu0 6
    %824 = vperm.xlu0 %823, %v503
    %v825 = vpop.permute.xlu0 %824
    %826 = vset.pattern.permute.xlu0 6
    %827 = vperm.xlu0 %826, %v504
    %v828 = vpop.permute.xlu0 %827
    %829 = vset.pattern.permute.xlu0 6
    %830 = vperm.xlu0 %829, %v505
    %v831 = vpop.permute.xlu0 %830
    %832 = vset.pattern.permute.xlu0 6
    %833 = vperm.xlu0 %832, %v506
    %v834 = vpop.permute.xlu0 %833
    %vm835 = vcmp.eq.s32.totalorder %v501, %v825
    %vm836 = vcmp.eq.s32.totalorder %v502, %v825
    %vm837 = vcmp.eq.s32.totalorder %v501, %v828
    %vm838 = vcmp.eq.s32.totalorder %v502, %v828
    %vm839 = vcmp.eq.s32.totalorder %v501, %v831
    %vm840 = vcmp.eq.s32.totalorder %v502, %v831
    %vm841 = vcmp.eq.s32.totalorder %v501, %v834
    %vm842 = vcmp.eq.s32.totalorder %v502, %v834
    %843 = vset.pattern.permute.xlu0 70
    %844 = vperm.xlu0 %843, %v452
    %v845 = vpop.permute.xlu0 %844
    %847 = vset.pattern.permute.xlu0 70
    %848 = vperm.xlu0 %847, %v453
    %v849 = vpop.permute.xlu0 %848
    %851 = vset.pattern.permute.xlu0 70
    %852 = vperm.xlu0 %851, %v454
    %v853 = vpop.permute.xlu0 %852
    %855 = vset.pattern.permute.xlu0 70
    %856 = vperm.xlu0 %855, %v455
    %v857 = vpop.permute.xlu0 %856
    %v859 = vsel %vm835, %v845, 0.0
    %v860 = vsel %vm836, %v845, 0.0
    %v861 = vsel %vm837, %v849, 0.0
    %v862 = vsel %vm838, %v849, 0.0
    %v863 = vsel %vm839, %v853, 0.0
    %v864 = vsel %vm840, %v853, 0.0
    %v865 = vsel %vm841, %v857, 0.0
    %v866 = vsel %vm842, %v857, 0.0
    %v867 = vadd.f32 %v815, %v859
    %v868 = vadd.f32 %v816, %v860
    %v869 = vadd.f32 %v817, %v861
    %v870 = vadd.f32 %v818, %v862
    %v871 = vadd.f32 %v819, %v863
    %v872 = vadd.f32 %v820, %v864
    %v873 = vadd.f32 %v821, %v865
    %v874 = vadd.f32 %v822, %v866
    %875 = vset.pattern.permute.xlu0 7
    %876 = vperm.xlu0 %875, %v503
    %v877 = vpop.permute.xlu0 %876
    %878 = vset.pattern.permute.xlu0 7
    %879 = vperm.xlu0 %878, %v504
    %v880 = vpop.permute.xlu0 %879
    %881 = vset.pattern.permute.xlu0 7
    %882 = vperm.xlu0 %881, %v505
    %v883 = vpop.permute.xlu0 %882
    %884 = vset.pattern.permute.xlu0 7
    %885 = vperm.xlu0 %884, %v506
    %v886 = vpop.permute.xlu0 %885
    %vm887 = vcmp.eq.s32.totalorder %v501, %v877
    %vm888 = vcmp.eq.s32.totalorder %v502, %v877
    %vm889 = vcmp.eq.s32.totalorder %v501, %v880
    %vm890 = vcmp.eq.s32.totalorder %v502, %v880
    %vm891 = vcmp.eq.s32.totalorder %v501, %v883
    %vm892 = vcmp.eq.s32.totalorder %v502, %v883
    %vm893 = vcmp.eq.s32.totalorder %v501, %v886
    %vm894 = vcmp.eq.s32.totalorder %v502, %v886
    %895 = vset.pattern.permute.xlu0 71
    %896 = vperm.xlu0 %895, %v452
    %v897 = vpop.permute.xlu0 %896
    %899 = vset.pattern.permute.xlu0 71
    %900 = vperm.xlu0 %899, %v453
    %v901 = vpop.permute.xlu0 %900
    %903 = vset.pattern.permute.xlu0 71
    %904 = vperm.xlu0 %903, %v454
    %v905 = vpop.permute.xlu0 %904
    %907 = vset.pattern.permute.xlu0 71
    %908 = vperm.xlu0 %907, %v455
    %v909 = vpop.permute.xlu0 %908
    %v911 = vsel %vm887, %v897, 0.0
    %v912 = vsel %vm888, %v897, 0.0
    %v913 = vsel %vm889, %v901, 0.0
    %v914 = vsel %vm890, %v901, 0.0
    %v915 = vsel %vm891, %v905, 0.0
    %v916 = vsel %vm892, %v905, 0.0
    %v917 = vsel %vm893, %v909, 0.0
    %v918 = vsel %vm894, %v909, 0.0
    %v919 = vadd.f32 %v867, %v911
    %v920 = vadd.f32 %v868, %v912
    %v921 = vadd.f32 %v869, %v913
    %v922 = vadd.f32 %v870, %v914
    %v923 = vadd.f32 %v871, %v915
    %v924 = vadd.f32 %v872, %v916
    %v925 = vadd.f32 %v873, %v917
    %v926 = vadd.f32 %v874, %v918
    %v927 = vpack.c.bf16 %v921, %v919
    %v928 = vpack.c.bf16 %v922, %v920
    %v929 = vpack.c.bf16 %v925, %v923
    %v930 = vpack.c.bf16 %v926, %v924
    %v935 = vunpack.c.l.b16 %v331
    %v936 = vunpack.c.l.b16 %v332
    %v937 = vunpack.c.l.b16 %v333
    %v938 = vunpack.c.l.b16 %v334
    %v939 = vpack.c.b16 %v936, %v935
    %v940 = vpack.c.b16 %v938, %v937
    %943 = vxpose.xlu0.c.b16.start [1/8] %v939, 128
    %944 = vxpose.xlu0.c.b16.cont [2/8] %v940, 128
    %945 = vxpose.xlu0.c.b16.cont [3/8] 0, 128
    %946 = vxpose.xlu0.c.b16.cont [4/8] 0, 128
    %947 = vxpose.xlu0.c.b16.cont [5/8] 0, 128
    %948 = vxpose.xlu0.c.b16.cont [6/8] 0, 128
    %949 = vxpose.xlu0.c.b16.cont [7/8] 0, 128
    %950 = vxpose.xlu0.c.b16.end [8/8] 0, 128
    %v951 = vpop.trf.xlu0
    %v952 = vpop.trf.xlu0
    %v953 = vpop.trf.xlu0
    %v954 = vpop.trf.xlu0
    %v955 = vpop.trf.xlu0
    %v956 = vpop.trf.xlu0
    %v957 = vpop.trf.xlu0
    %v958 = vpop.trf.xlu0
    %vm959 = vcmask 261120
    %v961 = vsel %vm959, %v951, 0
    %v964 = vsel %vm959, %v952, 0
    %v967 = vsel %vm959, %v953, 0
    %v970 = vsel %vm959, %v954, 0
    %972 = vmatpush.bf16.msra.mxu0 0
    %973 = vmatpush.bf16.msra.mxu0 0
    %974 = vmatpush.bf16.msra.mxu0 0
    %975 = vmatpush.bf16.msra.mxu0 0
    %976 = vmatpush.bf16.msra.mxu0 0
    %977 = vmatpush.bf16.msra.mxu0 0
    %978 = vmatpush.bf16.msra.mxu0 %v929
    %979 = vmatpush.bf16.msra.mxu0 %v927
    %980 = vmatmul.bf16.gmra.mxu0 %v961
    %v981 = vpop.f32.mrf.mxu0
    %v982 = vadd.f32 0.0, %v981
    %v983 = vpop.f32.mrf.mxu0
    %v984 = vadd.f32 0.0, %v983
    %985 = vmatmul.bf16.gmra.mxu0 %v964
    %v986 = vpop.f32.mrf.mxu0
    %v987 = vadd.f32 0.0, %v986
    %v988 = vpop.f32.mrf.mxu0
    %v989 = vadd.f32 0.0, %v988
    %990 = vmatmul.bf16.gmra.mxu0 %v967
    %v991 = vpop.f32.mrf.mxu0
    %v992 = vadd.f32 0.0, %v991
    %v993 = vpop.f32.mrf.mxu0
    %v994 = vadd.f32 0.0, %v993
    %995 = vmatmul.bf16.gmra.mxu0 %v970
    %v996 = vpop.f32.mrf.mxu0
    %v997 = vadd.f32 0.0, %v996
    %v998 = vpop.f32.mrf.mxu0
    %v999 = vadd.f32 0.0, %v998
    %1000 = vdwg.mxu0
    %1001 = vmatpush.bf16.msra.mxu0 0
    %1002 = vmatpush.bf16.msra.mxu0 0
    %1003 = vmatpush.bf16.msra.mxu0 0
    %1004 = vmatpush.bf16.msra.mxu0 0
    %1005 = vmatpush.bf16.msra.mxu0 0
    %1006 = vmatpush.bf16.msra.mxu0 0
    %1007 = vmatpush.bf16.msra.mxu0 %v930
    %1008 = vmatpush.bf16.msra.mxu0 %v928
    %1009 = vmatmul.bf16.gmra.mxu0 %v961
    %v1010 = vpop.f32.mrf.mxu0
    %v1011 = vadd.f32 0.0, %v1010
    %v1012 = vpop.f32.mrf.mxu0
    %v1013 = vadd.f32 0.0, %v1012
    %1014 = vmatmul.bf16.gmra.mxu0 %v964
    %v1015 = vpop.f32.mrf.mxu0
    %v1016 = vadd.f32 0.0, %v1015
    %v1017 = vpop.f32.mrf.mxu0
    %v1018 = vadd.f32 0.0, %v1017
    %1019 = vmatmul.bf16.gmra.mxu0 %v967
    %v1020 = vpop.f32.mrf.mxu0
    %v1021 = vadd.f32 0.0, %v1020
    %v1022 = vpop.f32.mrf.mxu0
    %v1023 = vadd.f32 0.0, %v1022
    %1024 = vmatmul.bf16.gmra.mxu0 %v970
    %v1025 = vpop.f32.mrf.mxu0
    %v1026 = vadd.f32 0.0, %v1025
    %v1027 = vpop.f32.mrf.mxu0
    %v1028 = vadd.f32 0.0, %v1027
    %1029 = vdwg.mxu0
    %1030 = vst [vmem:[%s6] sm:$0xff] %v982
    %1031 = vst [vmem:[%s6 + $0x8] sm:$0xff] %v1011
    %1032 = vst [vmem:[%s6 + $0x10] sm:$0xff] %v984
    %1033 = vst [vmem:[%s6 + $0x18] sm:$0xff] %v1013
    %1034 = vst [vmem:[%s6 + $0x20] sm:$0xff] %v987
    %1035 = vst [vmem:[%s6 + $0x28] sm:$0xff] %v1016
    %1036 = vst [vmem:[%s6 + $0x30] sm:$0xff] %v989
    %1037 = vst [vmem:[%s6 + $0x38] sm:$0xff] %v1018
    %1038 = vst [vmem:[%s6 + $0x40] sm:$0xff] %v992
    %1039 = vst [vmem:[%s6 + $0x48] sm:$0xff] %v1021
    %1040 = vst [vmem:[%s6 + $0x50] sm:$0xff] %v994
    %1041 = vst [vmem:[%s6 + $0x58] sm:$0xff] %v1023
    %1042 = vst [vmem:[%s6 + $0x60] sm:$0xff] %v997
    %1043 = vst [vmem:[%s6 + $0x68] sm:$0xff] %v1026
    %1044 = vst [vmem:[%s6 + $0x70] sm:$0xff] %v999
    %1045 = vst [vmem:[%s6 + $0x78] sm:$0xff] %v1028
    %1046 = vset.pattern.permute.xlu0 0
    %1047 = vperm.xlu0 %1046, %v507
    %v1048 = vpop.permute.xlu0 %1047
    %1049 = vset.pattern.permute.xlu0 0
    %1050 = vperm.xlu0 %1049, %v508
    %v1051 = vpop.permute.xlu0 %1050
    %1052 = vset.pattern.permute.xlu0 0
    %1053 = vperm.xlu0 %1052, %v509
    %v1054 = vpop.permute.xlu0 %1053
    %1055 = vset.pattern.permute.xlu0 0
    %1056 = vperm.xlu0 %1055, %v510
    %v1057 = vpop.permute.xlu0 %1056
    %vm1058 = vcmp.eq.s32.totalorder %v501, %v1048
    %vm1059 = vcmp.eq.s32.totalorder %v502, %v1048
    %vm1060 = vcmp.eq.s32.totalorder %v501, %v1051
    %vm1061 = vcmp.eq.s32.totalorder %v502, %v1051
    %vm1062 = vcmp.eq.s32.totalorder %v501, %v1054
    %vm1063 = vcmp.eq.s32.totalorder %v502, %v1054
    %vm1064 = vcmp.eq.s32.totalorder %v501, %v1057
    %vm1065 = vcmp.eq.s32.totalorder %v502, %v1057
    %1066 = vset.pattern.permute.xlu0 64
    %1067 = vperm.xlu0 %1066, %v456
    %v1068 = vpop.permute.xlu0 %1067
    %1070 = vset.pattern.permute.xlu0 64
    %1071 = vperm.xlu0 %1070, %v457
    %v1072 = vpop.permute.xlu0 %1071
    %1074 = vset.pattern.permute.xlu0 64
    %1075 = vperm.xlu0 %1074, %v458
    %v1076 = vpop.permute.xlu0 %1075
    %1078 = vset.pattern.permute.xlu0 64
    %1079 = vperm.xlu0 %1078, %v459
    %v1080 = vpop.permute.xlu0 %1079
    %v1082 = vsel %vm1058, %v1068, 0.0
    %v1083 = vsel %vm1059, %v1068, 0.0
    %v1084 = vsel %vm1060, %v1072, 0.0
    %v1085 = vsel %vm1061, %v1072, 0.0
    %v1086 = vsel %vm1062, %v1076, 0.0
    %v1087 = vsel %vm1063, %v1076, 0.0
    %v1088 = vsel %vm1064, %v1080, 0.0
    %v1089 = vsel %vm1065, %v1080, 0.0
    %v1090 = vadd.f32 %v1082, 0.0
    %v1091 = vadd.f32 %v1083, 0.0
    %v1092 = vadd.f32 %v1084, 0.0
    %v1093 = vadd.f32 %v1085, 0.0
    %v1094 = vadd.f32 %v1086, 0.0
    %v1095 = vadd.f32 %v1087, 0.0
    %v1096 = vadd.f32 %v1088, 0.0
    %v1097 = vadd.f32 %v1089, 0.0
    %1098 = vset.pattern.permute.xlu0 1
    %1099 = vperm.xlu0 %1098, %v507
    %v1100 = vpop.permute.xlu0 %1099
    %1101 = vset.pattern.permute.xlu0 1
    %1102 = vperm.xlu0 %1101, %v508
    %v1103 = vpop.permute.xlu0 %1102
    %1104 = vset.pattern.permute.xlu0 1
    %1105 = vperm.xlu0 %1104, %v509
    %v1106 = vpop.permute.xlu0 %1105
    %1107 = vset.pattern.permute.xlu0 1
    %1108 = vperm.xlu0 %1107, %v510
    %v1109 = vpop.permute.xlu0 %1108
    %vm1110 = vcmp.eq.s32.totalorder %v501, %v1100
    %vm1111 = vcmp.eq.s32.totalorder %v502, %v1100
    %vm1112 = vcmp.eq.s32.totalorder %v501, %v1103
    %vm1113 = vcmp.eq.s32.totalorder %v502, %v1103
    %vm1114 = vcmp.eq.s32.totalorder %v501, %v1106
    %vm1115 = vcmp.eq.s32.totalorder %v502, %v1106
    %vm1116 = vcmp.eq.s32.totalorder %v501, %v1109
    %vm1117 = vcmp.eq.s32.totalorder %v502, %v1109
    %1118 = vset.pattern.permute.xlu0 65
    %1119 = vperm.xlu0 %1118, %v456
    %v1120 = vpop.permute.xlu0 %1119
    %1122 = vset.pattern.permute.xlu0 65
    %1123 = vperm.xlu0 %1122, %v457
    %v1124 = vpop.permute.xlu0 %1123
    %1126 = vset.pattern.permute.xlu0 65
    %1127 = vperm.xlu0 %1126, %v458
    %v1128 = vpop.permute.xlu0 %1127
    %1130 = vset.pattern.permute.xlu0 65
    %1131 = vperm.xlu0 %1130, %v459
    %v1132 = vpop.permute.xlu0 %1131
    %v1134 = vsel %vm1110, %v1120, 0.0
    %v1135 = vsel %vm1111, %v1120, 0.0
    %v1136 = vsel %vm1112, %v1124, 0.0
    %v1137 = vsel %vm1113, %v1124, 0.0
    %v1138 = vsel %vm1114, %v1128, 0.0
    %v1139 = vsel %vm1115, %v1128, 0.0
    %v1140 = vsel %vm1116, %v1132, 0.0
    %v1141 = vsel %vm1117, %v1132, 0.0
    %v1142 = vadd.f32 %v1090, %v1134
    %v1143 = vadd.f32 %v1091, %v1135
    %v1144 = vadd.f32 %v1092, %v1136
    %v1145 = vadd.f32 %v1093, %v1137
    %v1146 = vadd.f32 %v1094, %v1138
    %v1147 = vadd.f32 %v1095, %v1139
    %v1148 = vadd.f32 %v1096, %v1140
    %v1149 = vadd.f32 %v1097, %v1141
    %1150 = vset.pattern.permute.xlu0 2
    %1151 = vperm.xlu0 %1150, %v507
    %v1152 = vpop.permute.xlu0 %1151
    %1153 = vset.pattern.permute.xlu0 2
    %1154 = vperm.xlu0 %1153, %v508
    %v1155 = vpop.permute.xlu0 %1154
    %1156 = vset.pattern.permute.xlu0 2
    %1157 = vperm.xlu0 %1156, %v509
    %v1158 = vpop.permute.xlu0 %1157
    %1159 = vset.pattern.permute.xlu0 2
    %1160 = vperm.xlu0 %1159, %v510
    %v1161 = vpop.permute.xlu0 %1160
    %vm1162 = vcmp.eq.s32.totalorder %v501, %v1152
    %vm1163 = vcmp.eq.s32.totalorder %v502, %v1152
    %vm1164 = vcmp.eq.s32.totalorder %v501, %v1155
    %vm1165 = vcmp.eq.s32.totalorder %v502, %v1155
    %vm1166 = vcmp.eq.s32.totalorder %v501, %v1158
    %vm1167 = vcmp.eq.s32.totalorder %v502, %v1158
    %vm1168 = vcmp.eq.s32.totalorder %v501, %v1161
    %vm1169 = vcmp.eq.s32.totalorder %v502, %v1161
    %1170 = vset.pattern.permute.xlu0 66
    %1171 = vperm.xlu0 %1170, %v456
    %v1172 = vpop.permute.xlu0 %1171
    %1174 = vset.pattern.permute.xlu0 66
    %1175 = vperm.xlu0 %1174, %v457
    %v1176 = vpop.permute.xlu0 %1175
    %1178 = vset.pattern.permute.xlu0 66
    %1179 = vperm.xlu0 %1178, %v458
    %v1180 = vpop.permute.xlu0 %1179
    %1182 = vset.pattern.permute.xlu0 66
    %1183 = vperm.xlu0 %1182, %v459
    %v1184 = vpop.permute.xlu0 %1183
    %v1186 = vsel %vm1162, %v1172, 0.0
    %v1187 = vsel %vm1163, %v1172, 0.0
    %v1188 = vsel %vm1164, %v1176, 0.0
    %v1189 = vsel %vm1165, %v1176, 0.0
    %v1190 = vsel %vm1166, %v1180, 0.0
    %v1191 = vsel %vm1167, %v1180, 0.0
    %v1192 = vsel %vm1168, %v1184, 0.0
    %v1193 = vsel %vm1169, %v1184, 0.0
    %v1194 = vadd.f32 %v1142, %v1186
    %v1195 = vadd.f32 %v1143, %v1187
    %v1196 = vadd.f32 %v1144, %v1188
    %v1197 = vadd.f32 %v1145, %v1189
    %v1198 = vadd.f32 %v1146, %v1190
    %v1199 = vadd.f32 %v1147, %v1191
    %v1200 = vadd.f32 %v1148, %v1192
    %v1201 = vadd.f32 %v1149, %v1193
    %1202 = vset.pattern.permute.xlu0 3
    %1203 = vperm.xlu0 %1202, %v507
    %v1204 = vpop.permute.xlu0 %1203
    %1205 = vset.pattern.permute.xlu0 3
    %1206 = vperm.xlu0 %1205, %v508
    %v1207 = vpop.permute.xlu0 %1206
    %1208 = vset.pattern.permute.xlu0 3
    %1209 = vperm.xlu0 %1208, %v509
    %v1210 = vpop.permute.xlu0 %1209
    %1211 = vset.pattern.permute.xlu0 3
    %1212 = vperm.xlu0 %1211, %v510
    %v1213 = vpop.permute.xlu0 %1212
    %vm1214 = vcmp.eq.s32.totalorder %v501, %v1204
    %vm1215 = vcmp.eq.s32.totalorder %v502, %v1204
    %vm1216 = vcmp.eq.s32.totalorder %v501, %v1207
    %vm1217 = vcmp.eq.s32.totalorder %v502, %v1207
    %vm1218 = vcmp.eq.s32.totalorder %v501, %v1210
    %vm1219 = vcmp.eq.s32.totalorder %v502, %v1210
    %vm1220 = vcmp.eq.s32.totalorder %v501, %v1213
    %vm1221 = vcmp.eq.s32.totalorder %v502, %v1213
    %1222 = vset.pattern.permute.xlu0 67
    %1223 = vperm.xlu0 %1222, %v456
    %v1224 = vpop.permute.xlu0 %1223
    %1226 = vset.pattern.permute.xlu0 67
    %1227 = vperm.xlu0 %1226, %v457
    %v1228 = vpop.permute.xlu0 %1227
    %1230 = vset.pattern.permute.xlu0 67
    %1231 = vperm.xlu0 %1230, %v458
    %v1232 = vpop.permute.xlu0 %1231
    %1234 = vset.pattern.permute.xlu0 67
    %1235 = vperm.xlu0 %1234, %v459
    %v1236 = vpop.permute.xlu0 %1235
    %v1238 = vsel %vm1214, %v1224, 0.0
    %v1239 = vsel %vm1215, %v1224, 0.0
    %v1240 = vsel %vm1216, %v1228, 0.0
    %v1241 = vsel %vm1217, %v1228, 0.0
    %v1242 = vsel %vm1218, %v1232, 0.0
    %v1243 = vsel %vm1219, %v1232, 0.0
    %v1244 = vsel %vm1220, %v1236, 0.0
    %v1245 = vsel %vm1221, %v1236, 0.0
    %v1246 = vadd.f32 %v1194, %v1238
    %v1247 = vadd.f32 %v1195, %v1239
    %v1248 = vadd.f32 %v1196, %v1240
    %v1249 = vadd.f32 %v1197, %v1241
    %v1250 = vadd.f32 %v1198, %v1242
    %v1251 = vadd.f32 %v1199, %v1243
    %v1252 = vadd.f32 %v1200, %v1244
    %v1253 = vadd.f32 %v1201, %v1245
    %1254 = vset.pattern.permute.xlu0 4
    %1255 = vperm.xlu0 %1254, %v507
    %v1256 = vpop.permute.xlu0 %1255
    %1257 = vset.pattern.permute.xlu0 4
    %1258 = vperm.xlu0 %1257, %v508
    %v1259 = vpop.permute.xlu0 %1258
    %1260 = vset.pattern.permute.xlu0 4
    %1261 = vperm.xlu0 %1260, %v509
    %v1262 = vpop.permute.xlu0 %1261
    %1263 = vset.pattern.permute.xlu0 4
    %1264 = vperm.xlu0 %1263, %v510
    %v1265 = vpop.permute.xlu0 %1264
    %vm1266 = vcmp.eq.s32.totalorder %v501, %v1256
    %vm1267 = vcmp.eq.s32.totalorder %v502, %v1256
    %vm1268 = vcmp.eq.s32.totalorder %v501, %v1259
    %vm1269 = vcmp.eq.s32.totalorder %v502, %v1259
    %vm1270 = vcmp.eq.s32.totalorder %v501, %v1262
    %vm1271 = vcmp.eq.s32.totalorder %v502, %v1262
    %vm1272 = vcmp.eq.s32.totalorder %v501, %v1265
    %vm1273 = vcmp.eq.s32.totalorder %v502, %v1265
    %1274 = vset.pattern.permute.xlu0 68
    %1275 = vperm.xlu0 %1274, %v456
    %v1276 = vpop.permute.xlu0 %1275
    %1278 = vset.pattern.permute.xlu0 68
    %1279 = vperm.xlu0 %1278, %v457
    %v1280 = vpop.permute.xlu0 %1279
    %1282 = vset.pattern.permute.xlu0 68
    %1283 = vperm.xlu0 %1282, %v458
    %v1284 = vpop.permute.xlu0 %1283
    %1286 = vset.pattern.permute.xlu0 68
    %1287 = vperm.xlu0 %1286, %v459
    %v1288 = vpop.permute.xlu0 %1287
    %v1290 = vsel %vm1266, %v1276, 0.0
    %v1291 = vsel %vm1267, %v1276, 0.0
    %v1292 = vsel %vm1268, %v1280, 0.0
    %v1293 = vsel %vm1269, %v1280, 0.0
    %v1294 = vsel %vm1270, %v1284, 0.0
    %v1295 = vsel %vm1271, %v1284, 0.0
    %v1296 = vsel %vm1272, %v1288, 0.0
    %v1297 = vsel %vm1273, %v1288, 0.0
    %v1298 = vadd.f32 %v1246, %v1290
    %v1299 = vadd.f32 %v1247, %v1291
    %v1300 = vadd.f32 %v1248, %v1292
    %v1301 = vadd.f32 %v1249, %v1293
    %v1302 = vadd.f32 %v1250, %v1294
    %v1303 = vadd.f32 %v1251, %v1295
    %v1304 = vadd.f32 %v1252, %v1296
    %v1305 = vadd.f32 %v1253, %v1297
    %1306 = vset.pattern.permute.xlu0 5
    %1307 = vperm.xlu0 %1306, %v507
    %v1308 = vpop.permute.xlu0 %1307
    %1309 = vset.pattern.permute.xlu0 5
    %1310 = vperm.xlu0 %1309, %v508
    %v1311 = vpop.permute.xlu0 %1310
    %1312 = vset.pattern.permute.xlu0 5
    %1313 = vperm.xlu0 %1312, %v509
    %v1314 = vpop.permute.xlu0 %1313
    %1315 = vset.pattern.permute.xlu0 5
    %1316 = vperm.xlu0 %1315, %v510
    %v1317 = vpop.permute.xlu0 %1316
    %vm1318 = vcmp.eq.s32.totalorder %v501, %v1308
    %vm1319 = vcmp.eq.s32.totalorder %v502, %v1308
    %vm1320 = vcmp.eq.s32.totalorder %v501, %v1311
    %vm1321 = vcmp.eq.s32.totalorder %v502, %v1311
    %vm1322 = vcmp.eq.s32.totalorder %v501, %v1314
    %vm1323 = vcmp.eq.s32.totalorder %v502, %v1314
    %vm1324 = vcmp.eq.s32.totalorder %v501, %v1317
    %vm1325 = vcmp.eq.s32.totalorder %v502, %v1317
    %1326 = vset.pattern.permute.xlu0 69
    %1327 = vperm.xlu0 %1326, %v456
    %v1328 = vpop.permute.xlu0 %1327
    %1330 = vset.pattern.permute.xlu0 69
    %1331 = vperm.xlu0 %1330, %v457
    %v1332 = vpop.permute.xlu0 %1331
    %1334 = vset.pattern.permute.xlu0 69
    %1335 = vperm.xlu0 %1334, %v458
    %v1336 = vpop.permute.xlu0 %1335
    %1338 = vset.pattern.permute.xlu0 69
    %1339 = vperm.xlu0 %1338, %v459
    %v1340 = vpop.permute.xlu0 %1339
    %v1342 = vsel %vm1318, %v1328, 0.0
    %v1343 = vsel %vm1319, %v1328, 0.0
    %v1344 = vsel %vm1320, %v1332, 0.0
    %v1345 = vsel %vm1321, %v1332, 0.0
    %v1346 = vsel %vm1322, %v1336, 0.0
    %v1347 = vsel %vm1323, %v1336, 0.0
    %v1348 = vsel %vm1324, %v1340, 0.0
    %v1349 = vsel %vm1325, %v1340, 0.0
    %v1350 = vadd.f32 %v1298, %v1342
    %v1351 = vadd.f32 %v1299, %v1343
    %v1352 = vadd.f32 %v1300, %v1344
    %v1353 = vadd.f32 %v1301, %v1345
    %v1354 = vadd.f32 %v1302, %v1346
    %v1355 = vadd.f32 %v1303, %v1347
    %v1356 = vadd.f32 %v1304, %v1348
    %v1357 = vadd.f32 %v1305, %v1349
    %1358 = vset.pattern.permute.xlu0 6
    %1359 = vperm.xlu0 %1358, %v507
    %v1360 = vpop.permute.xlu0 %1359
    %1361 = vset.pattern.permute.xlu0 6
    %1362 = vperm.xlu0 %1361, %v508
    %v1363 = vpop.permute.xlu0 %1362
    %1364 = vset.pattern.permute.xlu0 6
    %1365 = vperm.xlu0 %1364, %v509
    %v1366 = vpop.permute.xlu0 %1365
    %1367 = vset.pattern.permute.xlu0 6
    %1368 = vperm.xlu0 %1367, %v510
    %v1369 = vpop.permute.xlu0 %1368
    %vm1370 = vcmp.eq.s32.totalorder %v501, %v1360
    %vm1371 = vcmp.eq.s32.totalorder %v502, %v1360
    %vm1372 = vcmp.eq.s32.totalorder %v501, %v1363
    %vm1373 = vcmp.eq.s32.totalorder %v502, %v1363
    %vm1374 = vcmp.eq.s32.totalorder %v501, %v1366
    %vm1375 = vcmp.eq.s32.totalorder %v502, %v1366
    %vm1376 = vcmp.eq.s32.totalorder %v501, %v1369
    %vm1377 = vcmp.eq.s32.totalorder %v502, %v1369
    %1378 = vset.pattern.permute.xlu0 70
    %1379 = vperm.xlu0 %1378, %v456
    %v1380 = vpop.permute.xlu0 %1379
    %1382 = vset.pattern.permute.xlu0 70
    %1383 = vperm.xlu0 %1382, %v457
    %v1384 = vpop.permute.xlu0 %1383
    %1386 = vset.pattern.permute.xlu0 70
    %1387 = vperm.xlu0 %1386, %v458
    %v1388 = vpop.permute.xlu0 %1387
    %1390 = vset.pattern.permute.xlu0 70
    %1391 = vperm.xlu0 %1390, %v459
    %v1392 = vpop.permute.xlu0 %1391
    %v1394 = vsel %vm1370, %v1380, 0.0
    %v1395 = vsel %vm1371, %v1380, 0.0
    %v1396 = vsel %vm1372, %v1384, 0.0
    %v1397 = vsel %vm1373, %v1384, 0.0
    %v1398 = vsel %vm1374, %v1388, 0.0
    %v1399 = vsel %vm1375, %v1388, 0.0
    %v1400 = vsel %vm1376, %v1392, 0.0
    %v1401 = vsel %vm1377, %v1392, 0.0
    %v1402 = vadd.f32 %v1350, %v1394
    %v1403 = vadd.f32 %v1351, %v1395
    %v1404 = vadd.f32 %v1352, %v1396
    %v1405 = vadd.f32 %v1353, %v1397
    %v1406 = vadd.f32 %v1354, %v1398
    %v1407 = vadd.f32 %v1355, %v1399
    %v1408 = vadd.f32 %v1356, %v1400
    %v1409 = vadd.f32 %v1357, %v1401
    %1410 = vset.pattern.permute.xlu0 7
    %1411 = vperm.xlu0 %1410, %v507
    %v1412 = vpop.permute.xlu0 %1411
    %1413 = vset.pattern.permute.xlu0 7
    %1414 = vperm.xlu0 %1413, %v508
    %v1415 = vpop.permute.xlu0 %1414
    %1416 = vset.pattern.permute.xlu0 7
    %1417 = vperm.xlu0 %1416, %v509
    %v1418 = vpop.permute.xlu0 %1417
    %1419 = vset.pattern.permute.xlu0 7
    %1420 = vperm.xlu0 %1419, %v510
    %v1421 = vpop.permute.xlu0 %1420
    %vm1422 = vcmp.eq.s32.totalorder %v501, %v1412
    %vm1423 = vcmp.eq.s32.totalorder %v502, %v1412
    %vm1424 = vcmp.eq.s32.totalorder %v501, %v1415
    %vm1425 = vcmp.eq.s32.totalorder %v502, %v1415
    %vm1426 = vcmp.eq.s32.totalorder %v501, %v1418
    %vm1427 = vcmp.eq.s32.totalorder %v502, %v1418
    %vm1428 = vcmp.eq.s32.totalorder %v501, %v1421
    %vm1429 = vcmp.eq.s32.totalorder %v502, %v1421
    %1430 = vset.pattern.permute.xlu0 71
    %1431 = vperm.xlu0 %1430, %v456
    %v1432 = vpop.permute.xlu0 %1431
    %1434 = vset.pattern.permute.xlu0 71
    %1435 = vperm.xlu0 %1434, %v457
    %v1436 = vpop.permute.xlu0 %1435
    %1438 = vset.pattern.permute.xlu0 71
    %1439 = vperm.xlu0 %1438, %v458
    %v1440 = vpop.permute.xlu0 %1439
    %1442 = vset.pattern.permute.xlu0 71
    %1443 = vperm.xlu0 %1442, %v459
    %v1444 = vpop.permute.xlu0 %1443
    %v1446 = vsel %vm1422, %v1432, 0.0
    %v1447 = vsel %vm1423, %v1432, 0.0
    %v1448 = vsel %vm1424, %v1436, 0.0
    %v1449 = vsel %vm1425, %v1436, 0.0
    %v1450 = vsel %vm1426, %v1440, 0.0
    %v1451 = vsel %vm1427, %v1440, 0.0
    %v1452 = vsel %vm1428, %v1444, 0.0
    %v1453 = vsel %vm1429, %v1444, 0.0
    %v1454 = vadd.f32 %v1402, %v1446
    %v1455 = vadd.f32 %v1403, %v1447
    %v1456 = vadd.f32 %v1404, %v1448
    %v1457 = vadd.f32 %v1405, %v1449
    %v1458 = vadd.f32 %v1406, %v1450
    %v1459 = vadd.f32 %v1407, %v1451
    %v1460 = vadd.f32 %v1408, %v1452
    %v1461 = vadd.f32 %v1409, %v1453
    %v1462 = vpack.c.bf16 %v1456, %v1454
    %v1463 = vpack.c.bf16 %v1457, %v1455
    %v1464 = vpack.c.bf16 %v1460, %v1458
    %v1465 = vpack.c.bf16 %v1461, %v1459
    %v1470 = vunpack.c.l.b16 %v335
    %v1471 = vunpack.c.l.b16 %v336
    %v1472 = vunpack.c.l.b16 %v337
    %v1473 = vunpack.c.l.b16 %v338
    %v1474 = vpack.c.b16 %v1471, %v1470
    %v1475 = vpack.c.b16 %v1473, %v1472
    %1478 = vxpose.xlu0.c.b16.start [1/8] %v1474, 128
    %1479 = vxpose.xlu0.c.b16.cont [2/8] %v1475, 128
    %1480 = vxpose.xlu0.c.b16.cont [3/8] 0, 128
    %1481 = vxpose.xlu0.c.b16.cont [4/8] 0, 128
    %1482 = vxpose.xlu0.c.b16.cont [5/8] 0, 128
    %1483 = vxpose.xlu0.c.b16.cont [6/8] 0, 128
    %1484 = vxpose.xlu0.c.b16.cont [7/8] 0, 128
    %1485 = vxpose.xlu0.c.b16.end [8/8] 0, 128
    %v1486 = vpop.trf.xlu0
    %v1487 = vpop.trf.xlu0
    %v1488 = vpop.trf.xlu0
    %v1489 = vpop.trf.xlu0
    %v1490 = vpop.trf.xlu0
    %v1491 = vpop.trf.xlu0
    %v1492 = vpop.trf.xlu0
    %v1493 = vpop.trf.xlu0
    %v1495 = vsel %vm959, %v1486, 0
    %v1498 = vsel %vm959, %v1487, 0
    %v1501 = vsel %vm959, %v1488, 0
    %v1504 = vsel %vm959, %v1489, 0
    %1506 = vmatpush.bf16.msra.mxu0 0
    %1507 = vmatpush.bf16.msra.mxu0 0
    %1508 = vmatpush.bf16.msra.mxu0 0
    %1509 = vmatpush.bf16.msra.mxu0 0
    %1510 = vmatpush.bf16.msra.mxu0 0
    %1511 = vmatpush.bf16.msra.mxu0 0
    %1512 = vmatpush.bf16.msra.mxu0 %v1464
    %1513 = vmatpush.bf16.msra.mxu0 %v1462
    %1514 = vmatmul.bf16.gmra.mxu0 %v1495
    %v1515 = vpop.f32.mrf.mxu0
    %v1516 = vadd.f32 0.0, %v1515
    %v1517 = vpop.f32.mrf.mxu0
    %v1518 = vadd.f32 0.0, %v1517
    %1519 = vmatmul.bf16.gmra.mxu0 %v1498
    %v1520 = vpop.f32.mrf.mxu0
    %v1521 = vadd.f32 0.0, %v1520
    %v1522 = vpop.f32.mrf.mxu0
    %v1523 = vadd.f32 0.0, %v1522
    %1524 = vmatmul.bf16.gmra.mxu0 %v1501
    %v1525 = vpop.f32.mrf.mxu0
    %v1526 = vadd.f32 0.0, %v1525
    %v1527 = vpop.f32.mrf.mxu0
    %v1528 = vadd.f32 0.0, %v1527
    %1529 = vmatmul.bf16.gmra.mxu0 %v1504
    %v1530 = vpop.f32.mrf.mxu0
    %v1531 = vadd.f32 0.0, %v1530
    %v1532 = vpop.f32.mrf.mxu0
    %v1533 = vadd.f32 0.0, %v1532
    %1534 = vdwg.mxu0
    %1535 = vmatpush.bf16.msra.mxu0 0
    %1536 = vmatpush.bf16.msra.mxu0 0
    %1537 = vmatpush.bf16.msra.mxu0 0
    %1538 = vmatpush.bf16.msra.mxu0 0
    %1539 = vmatpush.bf16.msra.mxu0 0
    %1540 = vmatpush.bf16.msra.mxu0 0
    %1541 = vmatpush.bf16.msra.mxu0 %v1465
    %1542 = vmatpush.bf16.msra.mxu0 %v1463
    %1543 = vmatmul.bf16.gmra.mxu0 %v1495
    %v1544 = vpop.f32.mrf.mxu0
    %v1545 = vadd.f32 0.0, %v1544
    %v1546 = vpop.f32.mrf.mxu0
    %v1547 = vadd.f32 0.0, %v1546
    %1548 = vmatmul.bf16.gmra.mxu0 %v1498
    %v1549 = vpop.f32.mrf.mxu0
    %v1550 = vadd.f32 0.0, %v1549
    %v1551 = vpop.f32.mrf.mxu0
    %v1552 = vadd.f32 0.0, %v1551
    %1553 = vmatmul.bf16.gmra.mxu0 %v1501
    %v1554 = vpop.f32.mrf.mxu0
    %v1555 = vadd.f32 0.0, %v1554
    %v1556 = vpop.f32.mrf.mxu0
    %v1557 = vadd.f32 0.0, %v1556
    %1558 = vmatmul.bf16.gmra.mxu0 %v1504
    %v1559 = vpop.f32.mrf.mxu0
    %v1560 = vadd.f32 0.0, %v1559
    %v1561 = vpop.f32.mrf.mxu0
    %v1562 = vadd.f32 0.0, %v1561
    %1563 = vdwg.mxu0
    %s1564 = scalar_lea.vmem %s6, 128
    %1565 = vst [vmem:[%s1564] sm:$0xff] %v1516
    %1566 = vst [vmem:[%s1564 + $0x8] sm:$0xff] %v1545
    %1567 = vst [vmem:[%s1564 + $0x10] sm:$0xff] %v1518
    %1568 = vst [vmem:[%s1564 + $0x18] sm:$0xff] %v1547
    %1569 = vst [vmem:[%s1564 + $0x20] sm:$0xff] %v1521
    %1570 = vst [vmem:[%s1564 + $0x28] sm:$0xff] %v1550
    %1571 = vst [vmem:[%s1564 + $0x30] sm:$0xff] %v1523
    %1572 = vst [vmem:[%s1564 + $0x38] sm:$0xff] %v1552
    %1573 = vst [vmem:[%s1564 + $0x40] sm:$0xff] %v1526
    %1574 = vst [vmem:[%s1564 + $0x48] sm:$0xff] %v1555
    %1575 = vst [vmem:[%s1564 + $0x50] sm:$0xff] %v1528
    %1576 = vst [vmem:[%s1564 + $0x58] sm:$0xff] %v1557
    %1577 = vst [vmem:[%s1564 + $0x60] sm:$0xff] %v1531
    %1578 = vst [vmem:[%s1564 + $0x68] sm:$0xff] %v1560
    %1579 = vst [vmem:[%s1564 + $0x70] sm:$0xff] %v1533
    %1580 = vst [vmem:[%s1564 + $0x78] sm:$0xff] %v1562
    // Predicated region
    $region26: #{lss_bev_forward.1} parent=1 // pred_check
      _
    $region27: #{lss_bev_forward.1} parent=1 // pred_check_branch
      %1582 = sbr.rel (0) target = $region29
    $region28: #{lss_bev_forward.1} parent=1 // pred_region
      _
    $region29: #{lss_bev_forward.1} parent=1 // pred_fallthru
      _
    // Predicated region
    $region30: #{lss_bev_forward.1} parent=1 // pred_check
      _
    $region31: #{lss_bev_forward.1} parent=1 // pred_check_branch
      %1584 = sbr.rel (0) target = $region33
    $region32: #{lss_bev_forward.1} parent=1 // pred_region
      %1586 = vsyncadd [#allocation3], 0
      %s1587 = sshll.u32 [#allocation2], 4
      %s1588 = int_to_ptr.vmem [resolvable:$true] %s1587
      %s1589 = sshll.u32 %s7, 4
      %s1590 = int_to_ptr.hbm [resolvable:$true] %s1589
      %1595 = dma.vmem_to_hbm [thread:$0]  %s1588, 1024, %s1590, [#allocation3], 128, 128, 8
    $region33: #{lss_bev_forward.1} parent=1 // pred_fallthru
      _
    // Predicated region
    $region34: #{lss_bev_forward.1} parent=1 // pred_check
      _
    $region35: #{lss_bev_forward.1} parent=1 // pred_check_branch
      %1597 = sbr.rel (0) target = $region37
    $region36: #{lss_bev_forward.1} parent=1 // pred_region
      _
    $region37: #{lss_bev_forward.1} parent=1 // pred_fallthru
      _
    // Predicated region
    $region38: #{lss_bev_forward.1} parent=1 // pred_check
      _
    $region39: #{lss_bev_forward.1} parent=1 // pred_check_branch
      %1599 = sbr.rel (0) target = $region41
    $region40: #{lss_bev_forward.1} parent=1 // pred_region
      %1601 = dma.done [#allocation3], 1024
    $region41: #{lss_bev_forward.1} parent=1 // pred_fallthru
      _
    %1602 = vsyncpa [#allocation3], 1

</llo_original>
